<compile_context>
chip_gen: v7x
topology: tpu7x:2x2x1
jax: 0.10.0
libtpu: 0.0.40
codegen_flags: <defaults>
</compile_context>

<pallas_src>
import functools

import jax
import jax.numpy as jnp
from jax.experimental import pallas as pl
from jax.experimental.pallas import tpu as pltpu


def _round_up(x, m):
    return ((x + m - 1) // m) * m


def _lstm_fc_kernel(x_ref, wih_ref, whh_ref, b_ref, wfc_ref, bfc_ref, out_ref,
                    *, n_layers, hp, seq_len, batch_pad):
    """Whole-sequence stacked LSTM + last-step FC in one kernel invocation.

    x_ref   : (T*BP, HP)    bf16 time-major embedded tokens (row = t*BP + b)
    wih_ref : (L, HP, 4*HP) bf16 input->gate weights, gate-blocked [i,f,g,o],
                            sigmoid-gate columns pre-scaled by 0.5
    whh_ref : (L, HP, 4*HP) bf16 hidden->gate weights, same packing
    b_ref   : (L, 1, 4*HP)  f32 combined bias (b_ih + b_hh), same packing
    wfc_ref : (HP, OP)      f32 final linear weight (transposed), padded
    bfc_ref : (1, OP)       f32 final linear bias, padded
    out_ref : (BP, OP)      f32 lane-dense padded output
    """
    T, B, HP = seq_len, batch_pad, hp

    src = x_ref[...]                              # (T*B, HP) bf16
    h = jnp.zeros((B, HP), jnp.float32)

    # n_layers and seq_len are small & static -> fully unrolled Python loops,
    # every slice offset below is static and (8, 128)-tile aligned.
    for l in range(n_layers):
        # Batched input projection for the whole sequence: ONE MXU matmul with
        # M = T*B rows instead of T separate M = B matmuls. bf16 in, f32 acc.
        wih = wih_ref[l]                          # (HP, 4*HP) bf16
        gin = (jnp.dot(src, wih, preferred_element_type=jnp.float32)
               + b_ref[l])                        # (T*B, 4*HP) f32

        whh = whh_ref[l]                          # (HP, 4*HP) bf16, hoisted once
        last_layer = (l == n_layers - 1)

        h = jnp.zeros((B, HP), jnp.float32)
        c = jnp.zeros((B, HP), jnp.float32)
        hs = []
        for t in range(T):
            # B == 8, so this slice is exactly one (8, 128)-tile group per vreg
            # (equivalent to indexing [t] of the (T, 8, 4*HP) view).
            gates = gin[t * B:(t + 1) * B, :] + jnp.dot(
                h.astype(jnp.bfloat16), whh,
                preferred_element_type=jnp.float32)        # (B, 4*HP) f32
            # Single EUP pass over the gate vector; sigmoid gates were pre-scaled
            # by 0.5 in the weights: sigmoid(x) = 0.5*tanh(x/2) + 0.5.
            act = jnp.tanh(gates)
            # Gate-blocked layout -> each slice is a whole 128-lane block (free).
            i_g = act[:, 0 * HP:1 * HP] * 0.5 + 0.5
            f_g = act[:, 1 * HP:2 * HP] * 0.5 + 0.5
            g_g = act[:, 2 * HP:3 * HP]
            o_g = act[:, 3 * HP:4 * HP] * 0.5 + 0.5
            c = f_g * c + i_g * g_g
            h = o_g * jnp.tanh(c)
            if not last_layer:
                hs.append(h)                      # stays in vregs (small config)

        if not last_layer:
            # Next layer's input sequence, assembled in-register: no VMEM scratch
            # round-trip (T masked stores + full reload) on the serial path.
            src = jnp.concatenate(hs, axis=0).astype(jnp.bfloat16)   # (T*B, HP)

    # Final FC on the last timestep's hidden state of the top layer.
    out = jnp.dot(h, wfc_ref[...], preferred_element_type=jnp.float32) + bfc_ref[...]
    out_ref[...] = out.astype(out_ref.dtype)      # full (8, 128) unmasked store


# Gate order is PyTorch's [i, f, g, o]; sigmoid gates (i, f, o) get the 0.5
# pre-scale folded in (exact: power-of-two scaling), the g gate stays unscaled.
_GATE_SCALES = (0.5, 0.5, 1.0, 0.5)


def _pack_gate_blocked_weight(w_t, H, HP):
    """(L, H, 4H) torch-order -> (L, HP, 4*HP) gate-blocked bf16, zero padded."""
    L = w_t.shape[0]
    out = jnp.zeros((L, HP, 4 * HP), jnp.float32)
    for k, s in enumerate(_GATE_SCALES):
        out = out.at[:, :H, k * HP:k * HP + H].set(s * w_t[:, :, k * H:(k + 1) * H])
    return out.astype(jnp.bfloat16)


def _pack_gate_blocked_bias(b, H, HP):
    """(L, 1, 4H) torch-order -> (L, 1, 4*HP) gate-blocked f32, zero padded."""
    L = b.shape[0]
    out = jnp.zeros((L, 1, 4 * HP), jnp.float32)
    for k, s in enumerate(_GATE_SCALES):
        out = out.at[:, :, k * HP:k * HP + H].set(s * b[:, :, k * H:(k + 1) * H])
    return out


def lstm_model_forward(tokens, params, *, n_layers, hidden_dim, output_dim):
    """tokens: (B, T) int32 indices. Returns (B, output_dim) float32."""
    B, T = tokens.shape
    H = hidden_dim
    HP = _round_up(H, 128)            # lane-aligned gate block / hidden width
    BP = _round_up(B, 8)              # full sublane group
    OP = _round_up(output_dim, 128)   # lane-dense output store

    # ---- plain-JAX glue: embedding gather + one-time layout/packing prep -------
    embedded = jnp.take(params["embedding"], tokens, axis=0)         # (B, T, H) f32
    x_tm = jnp.zeros((T, BP, HP), jnp.float32)
    x_tm = x_tm.at[:, :B, :H].set(jnp.transpose(embedded, (1, 0, 2)))
    x_tm = x_tm.reshape(T * BP, HP).astype(jnp.bfloat16)             # time-major bf16

    w_ih = _pack_gate_blocked_weight(params["w_ih_t"], H, HP)        # (L, HP, 4HP) bf16
    w_hh = _pack_gate_blocked_weight(params["w_hh_t"], H, HP)        # (L, HP, 4HP) bf16
    b_g = _pack_gate_blocked_bias(params["b_gates"], H, HP)          # (L, 1, 4HP) f32

    # Lane/row-padded FC weight & bias (zero rows past H -> h padding is inert).
    w_fc = jnp.zeros((HP, OP), jnp.float32).at[:H, :output_dim].set(params["w_fc_t"])
    b_fc = jnp.zeros((1, OP), jnp.float32).at[:, :output_dim].set(params["b_fc"])

    kernel = functools.partial(_lstm_fc_kernel, n_layers=n_layers, hp=HP,
                               seq_len=T, batch_pad=BP)

    # Explicit scoped-VMEM budget (don't rely on the 16/32 MiB defaults).
    arg_bytes = sum(int(a.size) * a.dtype.itemsize
                    for a in (x_tm, w_ih, w_hh, b_g, w_fc, b_fc))
    vmem_limit = int(min(100 * 1024 * 1024, 4 * arg_bytes + 16 * 1024 * 1024))

    vmem = pl.BlockSpec(memory_space=pltpu.MemorySpace.VMEM)
    out_padded = pl.pallas_call(
        kernel,
        out_shape=jax.ShapeDtypeStruct((BP, OP), jnp.float32),
        in_specs=[vmem] * 6,
        out_specs=vmem,
        compiler_params=pltpu.CompilerParams(vmem_limit_bytes=vmem_limit),
        # No grid: the recurrence runs as an unrolled in-kernel loop.
    )(x_tm, w_ih, w_hh, b_g, w_fc, b_fc)

    # Padded batch rows / output lanes are garbage-but-isolated: slice them off.
    return out_padded[:B, :output_dim]


def init_params(key, input_dim, hidden_dim, output_dim, n_layers):
    """Deterministic synthetic parameters (shapes match the nn.Module)."""
    H = hidden_dim
    ks = jax.random.split(key, 6)
    scale = 0.1
    embedding = scale * jax.random.normal(ks[0], (input_dim, H), jnp.float32)
    # PyTorch stores W_ih (4H, in), W_hh (4H, H); we keep them transposed,
    # gate order [i, f, g, o] (PyTorch order) -- the wrapper repacks for the kernel.
    w_ih_t = scale * jax.random.normal(ks[1], (n_layers, H, 4 * H), jnp.float32)
    w_hh_t = scale * jax.random.normal(ks[2], (n_layers, H, 4 * H), jnp.float32)
    b_ih = scale * jax.random.normal(ks[3], (n_layers, 4 * H), jnp.float32)
    b_hh = scale * jax.random.normal(ks[4], (n_layers, 4 * H), jnp.float32)
    b_gates = (b_ih + b_hh).reshape(n_layers, 1, 4 * H)
    w_fc_t = scale * jax.random.normal(ks[5], (H, output_dim), jnp.float32)
    b_fc = jnp.zeros((1, output_dim), jnp.float32)
    return dict(embedding=embedding, w_ih_t=w_ih_t, w_hh_t=w_hh_t,
                b_gates=b_gates, w_fc_t=w_fc_t, b_fc=b_fc)


def reference_forward(tokens, params, *, n_layers, hidden_dim, output_dim,
                      matmul_dtype=jnp.float32):
    """Pure-JAX reference matching PyTorch LSTM semantics (for verification).

    matmul_dtype=jnp.bfloat16 reproduces the kernel's MXU-input rounding (f32
    accumulation) for a tight structural check; jnp.float32 is the exact
    PyTorch-semantics reference.
    """
    B, T = tokens.shape
    H = hidden_dim
    x_seq = jnp.take(params["embedding"], tokens, axis=0)  # (B, T, H)
    h = jnp.zeros((n_layers, B, H), jnp.float32)
    c = jnp.zeros((n_layers, B, H), jnp.float32)
    for t in range(T):
        x = x_seq[:, t, :]
        for l in range(n_layers):
            gates = (jnp.dot(x.astype(matmul_dtype),
                             params["w_ih_t"][l].astype(matmul_dtype),
                             preferred_element_type=jnp.float32)
                     + jnp.dot(h[l].astype(matmul_dtype),
                               params["w_hh_t"][l].astype(matmul_dtype),
                               preferred_element_type=jnp.float32)
                     + params["b_gates"][l])
            i = jax.nn.sigmoid(gates[:, 0 * H:1 * H])
            f = jax.nn.sigmoid(gates[:, 1 * H:2 * H])
            g = jnp.tanh(gates[:, 2 * H:3 * H])
            o = jax.nn.sigmoid(gates[:, 3 * H:4 * H])
            c_new = f * c[l] + i * g
            h_new = o * jnp.tanh(c_new)
            c = c.at[l].set(c_new)
            h = h.at[l].set(h_new)
            x = h_new
    return x @ params["w_fc_t"] + params["b_fc"]


if __name__ == "__main__":
    # input_dim (vocab) == hidden_dim so the original module's forward is well-defined.
    input_dim = 32
    hidden_dim = 32
    output_dim = 8
    n_layers = 2
    batch = 2
    seq_len = 8

    key = jax.random.PRNGKey(0)
    pkey, tkey = jax.random.split(key)
    params = init_params(pkey, input_dim, hidden_dim, output_dim, n_layers)
    tokens = jax.random.randint(tkey, (batch, seq_len), 0, input_dim, dtype=jnp.int32)

    out = lstm_model_forward(tokens, params, n_layers=n_layers,
                             hidden_dim=hidden_dim, output_dim=output_dim)
    out = jax.block_until_ready(out)
    assert out.shape == (batch, output_dim)

    # Tight check: reference with the same bf16 MXU-input rounding -> validates the
    # kernel structure (gate packing, single-tanh activation, recurrence, FC).
    ref_bf16 = reference_forward(tokens, params, n_layers=n_layers,
                                 hidden_dim=hidden_dim, output_dim=output_dim,
                                 matmul_dtype=jnp.bfloat16)
    assert jnp.allclose(out, ref_bf16, atol=1e-3, rtol=1e-3), \
        "mismatch vs bf16-matmul reference"

    # Loose check: pure-f32 PyTorch-semantics reference -> bf16 MXU inputs only
    # perturb the result at mixed-precision level.
    ref_f32 = reference_forward(tokens, params, n_layers=n_layers,
                                hidden_dim=hidden_dim, output_dim=output_dim,
                                matmul_dtype=jnp.float32)
    assert jnp.allclose(out, ref_f32, atol=1e-2, rtol=1e-2), \
        "mismatch vs f32 reference"

    print("KERNEL_OK")
</pallas_src>

<mosaic_0001>
module attributes {stable_mosaic.version = 11 : i64} {
  func.func @_lstm_fc_kernel(%arg0: memref<64x128xbf16, #tpu.memory_space<vmem>>, %arg1: memref<2x128x512xbf16, #tpu.memory_space<vmem>>, %arg2: memref<2x128x512xbf16, #tpu.memory_space<vmem>>, %arg3: memref<2x1x512xf32, #tpu.memory_space<vmem>>, %arg4: memref<128x128xf32, #tpu.memory_space<vmem>>, %arg5: memref<1x128xf32, #tpu.memory_space<vmem>>, %arg6: memref<8x128xf32, #tpu.memory_space<vmem>>) attributes {dimension_semantics = [], scalar_prefetch = 0 : i64, scratch_operands = 0 : i64, tpu.core_type = #tpu.core_type<tc>} {
    %c0 = arith.constant 0 : index
    %c0_0 = arith.constant 0 : index
    %0 = vector.load %arg0[%c0, %c0_0] : memref<64x128xbf16, #tpu.memory_space<vmem>>, vector<64x128xbf16>
    %c0_1 = arith.constant 0 : index
    %c0_2 = arith.constant 0 : index
    %c0_3 = arith.constant 0 : index
    %1 = vector.load %arg1[%c0_1, %c0_2, %c0_3] : memref<2x128x512xbf16, #tpu.memory_space<vmem>>, vector<1x128x512xbf16>
    %2 = vector.shape_cast %1 : vector<1x128x512xbf16> to vector<128x512xbf16>
    %cst = arith.constant dense<0.000000e+00> : vector<64x512xf32>
    %3 = tpu.matmul %0, %2, %cst {dimension_numbers = #tpu.dot_dimension_numbers<[1], [0], [0], [1], [0, 0, 1, 1], [], []>} : vector<64x128xbf16>, vector<128x512xbf16>, vector<64x512xf32> -> vector<64x512xf32>
    %c0_4 = arith.constant 0 : index
    %c0_5 = arith.constant 0 : index
    %c0_6 = arith.constant 0 : index
    %4 = vector.load %arg3[%c0_4, %c0_5, %c0_6] : memref<2x1x512xf32, #tpu.memory_space<vmem>>, vector<1x1x512xf32>
    %5 = vector.shape_cast %4 : vector<1x1x512xf32> to vector<1x512xf32>
    %6 = vector.broadcast %5 : vector<1x512xf32> to vector<64x512xf32>
    %7 = arith.addf %3, %6 : vector<64x512xf32>
    %c0_7 = arith.constant 0 : index
    %c0_8 = arith.constant 0 : index
    %c0_9 = arith.constant 0 : index
    %8 = vector.load %arg2[%c0_7, %c0_8, %c0_9] : memref<2x128x512xbf16, #tpu.memory_space<vmem>>, vector<1x128x512xbf16>
    %9 = vector.shape_cast %8 : vector<1x128x512xbf16> to vector<128x512xbf16>
    %cst_10 = arith.constant 0.000000e+00 : f32
    %10 = vector.broadcast %cst_10 : f32 to vector<8x128xf32>
    %cst_11 = arith.constant 0.000000e+00 : f32
    %11 = vector.broadcast %cst_11 : f32 to vector<8x128xf32>
    %12 = vector.extract_strided_slice %7 {offsets = [0, 0], sizes = [8, 512], strides = [1, 1]} : vector<64x512xf32> to vector<8x512xf32>
    %13 = arith.truncf %10 : vector<8x128xf32> to vector<8x128xbf16>
    %cst_12 = arith.constant dense<0.000000e+00> : vector<8x512xf32>
    %14 = tpu.matmul %13, %9, %cst_12 {dimension_numbers = #tpu.dot_dimension_numbers<[1], [0], [0], [1], [0, 0, 1, 1], [], []>} : vector<8x128xbf16>, vector<128x512xbf16>, vector<8x512xf32> -> vector<8x512xf32>
    %15 = arith.addf %12, %14 : vector<8x512xf32>
    %16 = math.tanh %15 : vector<8x512xf32>
    %17 = vector.extract_strided_slice %16 {offsets = [0, 0], sizes = [8, 128], strides = [1, 1]} : vector<8x512xf32> to vector<8x128xf32>
    %cst_13 = arith.constant 5.000000e-01 : f32
    %18 = vector.broadcast %cst_13 : f32 to vector<8x128xf32>
    %19 = arith.mulf %17, %18 : vector<8x128xf32>
    %cst_14 = arith.constant 5.000000e-01 : f32
    %20 = vector.broadcast %cst_14 : f32 to vector<8x128xf32>
    %21 = arith.addf %19, %20 : vector<8x128xf32>
    %22 = vector.extract_strided_slice %16 {offsets = [0, 128], sizes = [8, 128], strides = [1, 1]} : vector<8x512xf32> to vector<8x128xf32>
    %cst_15 = arith.constant 5.000000e-01 : f32
    %23 = vector.broadcast %cst_15 : f32 to vector<8x128xf32>
    %24 = arith.mulf %22, %23 : vector<8x128xf32>
    %cst_16 = arith.constant 5.000000e-01 : f32
    %25 = vector.broadcast %cst_16 : f32 to vector<8x128xf32>
    %26 = arith.addf %24, %25 : vector<8x128xf32>
    %27 = vector.extract_strided_slice %16 {offsets = [0, 256], sizes = [8, 128], strides = [1, 1]} : vector<8x512xf32> to vector<8x128xf32>
    %28 = vector.extract_strided_slice %16 {offsets = [0, 384], sizes = [8, 128], strides = [1, 1]} : vector<8x512xf32> to vector<8x128xf32>
    %cst_17 = arith.constant 5.000000e-01 : f32
    %29 = vector.broadcast %cst_17 : f32 to vector<8x128xf32>
    %30 = arith.mulf %28, %29 : vector<8x128xf32>
    %cst_18 = arith.constant 5.000000e-01 : f32
    %31 = vector.broadcast %cst_18 : f32 to vector<8x128xf32>
    %32 = arith.addf %30, %31 : vector<8x128xf32>
    %33 = arith.mulf %26, %11 : vector<8x128xf32>
    %34 = arith.mulf %21, %27 : vector<8x128xf32>
    %35 = arith.addf %33, %34 : vector<8x128xf32>
    %36 = math.tanh %35 : vector<8x128xf32>
    %37 = arith.mulf %32, %36 : vector<8x128xf32>
    %38 = vector.extract_strided_slice %7 {offsets = [8, 0], sizes = [8, 512], strides = [1, 1]} : vector<64x512xf32> to vector<8x512xf32>
    %39 = arith.truncf %37 : vector<8x128xf32> to vector<8x128xbf16>
    %cst_19 = arith.constant dense<0.000000e+00> : vector<8x512xf32>
    %40 = tpu.matmul %39, %9, %cst_19 {dimension_numbers = #tpu.dot_dimension_numbers<[1], [0], [0], [1], [0, 0, 1, 1], [], []>} : vector<8x128xbf16>, vector<128x512xbf16>, vector<8x512xf32> -> vector<8x512xf32>
    %41 = arith.addf %38, %40 : vector<8x512xf32>
    %42 = math.tanh %41 : vector<8x512xf32>
    %43 = vector.extract_strided_slice %42 {offsets = [0, 0], sizes = [8, 128], strides = [1, 1]} : vector<8x512xf32> to vector<8x128xf32>
    %cst_20 = arith.constant 5.000000e-01 : f32
    %44 = vector.broadcast %cst_20 : f32 to vector<8x128xf32>
    %45 = arith.mulf %43, %44 : vector<8x128xf32>
    %cst_21 = arith.constant 5.000000e-01 : f32
    %46 = vector.broadcast %cst_21 : f32 to vector<8x128xf32>
    %47 = arith.addf %45, %46 : vector<8x128xf32>
    %48 = vector.extract_strided_slice %42 {offsets = [0, 128], sizes = [8, 128], strides = [1, 1]} : vector<8x512xf32> to vector<8x128xf32>
    %cst_22 = arith.constant 5.000000e-01 : f32
    %49 = vector.broadcast %cst_22 : f32 to vector<8x128xf32>
    %50 = arith.mulf %48, %49 : vector<8x128xf32>
    %cst_23 = arith.constant 5.000000e-01 : f32
    %51 = vector.broadcast %cst_23 : f32 to vector<8x128xf32>
    %52 = arith.addf %50, %51 : vector<8x128xf32>
    %53 = vector.extract_strided_slice %42 {offsets = [0, 256], sizes = [8, 128], strides = [1, 1]} : vector<8x512xf32> to vector<8x128xf32>
    %54 = vector.extract_strided_slice %42 {offsets = [0, 384], sizes = [8, 128], strides = [1, 1]} : vector<8x512xf32> to vector<8x128xf32>
    %cst_24 = arith.constant 5.000000e-01 : f32
    %55 = vector.broadcast %cst_24 : f32 to vector<8x128xf32>
    %56 = arith.mulf %54, %55 : vector<8x128xf32>
    %cst_25 = arith.constant 5.000000e-01 : f32
    %57 = vector.broadcast %cst_25 : f32 to vector<8x128xf32>
    %58 = arith.addf %56, %57 : vector<8x128xf32>
    %59 = arith.mulf %52, %35 : vector<8x128xf32>
    %60 = arith.mulf %47, %53 : vector<8x128xf32>
    %61 = arith.addf %59, %60 : vector<8x128xf32>
    %62 = math.tanh %61 : vector<8x128xf32>
    %63 = arith.mulf %58, %62 : vector<8x128xf32>
    %64 = vector.extract_strided_slice %7 {offsets = [16, 0], sizes = [8, 512], strides = [1, 1]} : vector<64x512xf32> to vector<8x512xf32>
    %65 = arith.truncf %63 : vector<8x128xf32> to vector<8x128xbf16>
    %cst_26 = arith.constant dense<0.000000e+00> : vector<8x512xf32>
    %66 = tpu.matmul %65, %9, %cst_26 {dimension_numbers = #tpu.dot_dimension_numbers<[1], [0], [0], [1], [0, 0, 1, 1], [], []>} : vector<8x128xbf16>, vector<128x512xbf16>, vector<8x512xf32> -> vector<8x512xf32>
    %67 = arith.addf %64, %66 : vector<8x512xf32>
    %68 = math.tanh %67 : vector<8x512xf32>
    %69 = vector.extract_strided_slice %68 {offsets = [0, 0], sizes = [8, 128], strides = [1, 1]} : vector<8x512xf32> to vector<8x128xf32>
    %cst_27 = arith.constant 5.000000e-01 : f32
    %70 = vector.broadcast %cst_27 : f32 to vector<8x128xf32>
    %71 = arith.mulf %69, %70 : vector<8x128xf32>
    %cst_28 = arith.constant 5.000000e-01 : f32
    %72 = vector.broadcast %cst_28 : f32 to vector<8x128xf32>
    %73 = arith.addf %71, %72 : vector<8x128xf32>
    %74 = vector.extract_strided_slice %68 {offsets = [0, 128], sizes = [8, 128], strides = [1, 1]} : vector<8x512xf32> to vector<8x128xf32>
    %cst_29 = arith.constant 5.000000e-01 : f32
    %75 = vector.broadcast %cst_29 : f32 to vector<8x128xf32>
    %76 = arith.mulf %74, %75 : vector<8x128xf32>
    %cst_30 = arith.constant 5.000000e-01 : f32
    %77 = vector.broadcast %cst_30 : f32 to vector<8x128xf32>
    %78 = arith.addf %76, %77 : vector<8x128xf32>
    %79 = vector.extract_strided_slice %68 {offsets = [0, 256], sizes = [8, 128], strides = [1, 1]} : vector<8x512xf32> to vector<8x128xf32>
    %80 = vector.extract_strided_slice %68 {offsets = [0, 384], sizes = [8, 128], strides = [1, 1]} : vector<8x512xf32> to vector<8x128xf32>
    %cst_31 = arith.constant 5.000000e-01 : f32
    %81 = vector.broadcast %cst_31 : f32 to vector<8x128xf32>
    %82 = arith.mulf %80, %81 : vector<8x128xf32>
    %cst_32 = arith.constant 5.000000e-01 : f32
    %83 = vector.broadcast %cst_32 : f32 to vector<8x128xf32>
    %84 = arith.addf %82, %83 : vector<8x128xf32>
    %85 = arith.mulf %78, %61 : vector<8x128xf32>
    %86 = arith.mulf %73, %79 : vector<8x128xf32>
    %87 = arith.addf %85, %86 : vector<8x128xf32>
    %88 = math.tanh %87 : vector<8x128xf32>
    %89 = arith.mulf %84, %88 : vector<8x128xf32>
    %90 = vector.extract_strided_slice %7 {offsets = [24, 0], sizes = [8, 512], strides = [1, 1]} : vector<64x512xf32> to vector<8x512xf32>
    %91 = arith.truncf %89 : vector<8x128xf32> to vector<8x128xbf16>
    %cst_33 = arith.constant dense<0.000000e+00> : vector<8x512xf32>
    %92 = tpu.matmul %91, %9, %cst_33 {dimension_numbers = #tpu.dot_dimension_numbers<[1], [0], [0], [1], [0, 0, 1, 1], [], []>} : vector<8x128xbf16>, vector<128x512xbf16>, vector<8x512xf32> -> vector<8x512xf32>
    %93 = arith.addf %90, %92 : vector<8x512xf32>
    %94 = math.tanh %93 : vector<8x512xf32>
    %95 = vector.extract_strided_slice %94 {offsets = [0, 0], sizes = [8, 128], strides = [1, 1]} : vector<8x512xf32> to vector<8x128xf32>
    %cst_34 = arith.constant 5.000000e-01 : f32
    %96 = vector.broadcast %cst_34 : f32 to vector<8x128xf32>
    %97 = arith.mulf %95, %96 : vector<8x128xf32>
    %cst_35 = arith.constant 5.000000e-01 : f32
    %98 = vector.broadcast %cst_35 : f32 to vector<8x128xf32>
    %99 = arith.addf %97, %98 : vector<8x128xf32>
    %100 = vector.extract_strided_slice %94 {offsets = [0, 128], sizes = [8, 128], strides = [1, 1]} : vector<8x512xf32> to vector<8x128xf32>
    %cst_36 = arith.constant 5.000000e-01 : f32
    %101 = vector.broadcast %cst_36 : f32 to vector<8x128xf32>
    %102 = arith.mulf %100, %101 : vector<8x128xf32>
    %cst_37 = arith.constant 5.000000e-01 : f32
    %103 = vector.broadcast %cst_37 : f32 to vector<8x128xf32>
    %104 = arith.addf %102, %103 : vector<8x128xf32>
    %105 = vector.extract_strided_slice %94 {offsets = [0, 256], sizes = [8, 128], strides = [1, 1]} : vector<8x512xf32> to vector<8x128xf32>
    %106 = vector.extract_strided_slice %94 {offsets = [0, 384], sizes = [8, 128], strides = [1, 1]} : vector<8x512xf32> to vector<8x128xf32>
    %cst_38 = arith.constant 5.000000e-01 : f32
    %107 = vector.broadcast %cst_38 : f32 to vector<8x128xf32>
    %108 = arith.mulf %106, %107 : vector<8x128xf32>
    %cst_39 = arith.constant 5.000000e-01 : f32
    %109 = vector.broadcast %cst_39 : f32 to vector<8x128xf32>
    %110 = arith.addf %108, %109 : vector<8x128xf32>
    %111 = arith.mulf %104, %87 : vector<8x128xf32>
    %112 = arith.mulf %99, %105 : vector<8x128xf32>
    %113 = arith.addf %111, %112 : vector<8x128xf32>
    %114 = math.tanh %113 : vector<8x128xf32>
    %115 = arith.mulf %110, %114 : vector<8x128xf32>
    %116 = vector.extract_strided_slice %7 {offsets = [32, 0], sizes = [8, 512], strides = [1, 1]} : vector<64x512xf32> to vector<8x512xf32>
    %117 = arith.truncf %115 : vector<8x128xf32> to vector<8x128xbf16>
    %cst_40 = arith.constant dense<0.000000e+00> : vector<8x512xf32>
    %118 = tpu.matmul %117, %9, %cst_40 {dimension_numbers = #tpu.dot_dimension_numbers<[1], [0], [0], [1], [0, 0, 1, 1], [], []>} : vector<8x128xbf16>, vector<128x512xbf16>, vector<8x512xf32> -> vector<8x512xf32>
    %119 = arith.addf %116, %118 : vector<8x512xf32>
    %120 = math.tanh %119 : vector<8x512xf32>
    %121 = vector.extract_strided_slice %120 {offsets = [0, 0], sizes = [8, 128], strides = [1, 1]} : vector<8x512xf32> to vector<8x128xf32>
    %cst_41 = arith.constant 5.000000e-01 : f32
    %122 = vector.broadcast %cst_41 : f32 to vector<8x128xf32>
    %123 = arith.mulf %121, %122 : vector<8x128xf32>
    %cst_42 = arith.constant 5.000000e-01 : f32
    %124 = vector.broadcast %cst_42 : f32 to vector<8x128xf32>
    %125 = arith.addf %123, %124 : vector<8x128xf32>
    %126 = vector.extract_strided_slice %120 {offsets = [0, 128], sizes = [8, 128], strides = [1, 1]} : vector<8x512xf32> to vector<8x128xf32>
    %cst_43 = arith.constant 5.000000e-01 : f32
    %127 = vector.broadcast %cst_43 : f32 to vector<8x128xf32>
    %128 = arith.mulf %126, %127 : vector<8x128xf32>
    %cst_44 = arith.constant 5.000000e-01 : f32
    %129 = vector.broadcast %cst_44 : f32 to vector<8x128xf32>
    %130 = arith.addf %128, %129 : vector<8x128xf32>
    %131 = vector.extract_strided_slice %120 {offsets = [0, 256], sizes = [8, 128], strides = [1, 1]} : vector<8x512xf32> to vector<8x128xf32>
    %132 = vector.extract_strided_slice %120 {offsets = [0, 384], sizes = [8, 128], strides = [1, 1]} : vector<8x512xf32> to vector<8x128xf32>
    %cst_45 = arith.constant 5.000000e-01 : f32
    %133 = vector.broadcast %cst_45 : f32 to vector<8x128xf32>
    %134 = arith.mulf %132, %133 : vector<8x128xf32>
    %cst_46 = arith.constant 5.000000e-01 : f32
    %135 = vector.broadcast %cst_46 : f32 to vector<8x128xf32>
    %136 = arith.addf %134, %135 : vector<8x128xf32>
    %137 = arith.mulf %130, %113 : vector<8x128xf32>
    %138 = arith.mulf %125, %131 : vector<8x128xf32>
    %139 = arith.addf %137, %138 : vector<8x128xf32>
    %140 = math.tanh %139 : vector<8x128xf32>
    %141 = arith.mulf %136, %140 : vector<8x128xf32>
    %142 = vector.extract_strided_slice %7 {offsets = [40, 0], sizes = [8, 512], strides = [1, 1]} : vector<64x512xf32> to vector<8x512xf32>
    %143 = arith.truncf %141 : vector<8x128xf32> to vector<8x128xbf16>
    %cst_47 = arith.constant dense<0.000000e+00> : vector<8x512xf32>
    %144 = tpu.matmul %143, %9, %cst_47 {dimension_numbers = #tpu.dot_dimension_numbers<[1], [0], [0], [1], [0, 0, 1, 1], [], []>} : vector<8x128xbf16>, vector<128x512xbf16>, vector<8x512xf32> -> vector<8x512xf32>
    %145 = arith.addf %142, %144 : vector<8x512xf32>
    %146 = math.tanh %145 : vector<8x512xf32>
    %147 = vector.extract_strided_slice %146 {offsets = [0, 0], sizes = [8, 128], strides = [1, 1]} : vector<8x512xf32> to vector<8x128xf32>
    %cst_48 = arith.constant 5.000000e-01 : f32
    %148 = vector.broadcast %cst_48 : f32 to vector<8x128xf32>
    %149 = arith.mulf %147, %148 : vector<8x128xf32>
    %cst_49 = arith.constant 5.000000e-01 : f32
    %150 = vector.broadcast %cst_49 : f32 to vector<8x128xf32>
    %151 = arith.addf %149, %150 : vector<8x128xf32>
    %152 = vector.extract_strided_slice %146 {offsets = [0, 128], sizes = [8, 128], strides = [1, 1]} : vector<8x512xf32> to vector<8x128xf32>
    %cst_50 = arith.constant 5.000000e-01 : f32
    %153 = vector.broadcast %cst_50 : f32 to vector<8x128xf32>
    %154 = arith.mulf %152, %153 : vector<8x128xf32>
    %cst_51 = arith.constant 5.000000e-01 : f32
    %155 = vector.broadcast %cst_51 : f32 to vector<8x128xf32>
    %156 = arith.addf %154, %155 : vector<8x128xf32>
    %157 = vector.extract_strided_slice %146 {offsets = [0, 256], sizes = [8, 128], strides = [1, 1]} : vector<8x512xf32> to vector<8x128xf32>
    %158 = vector.extract_strided_slice %146 {offsets = [0, 384], sizes = [8, 128], strides = [1, 1]} : vector<8x512xf32> to vector<8x128xf32>
    %cst_52 = arith.constant 5.000000e-01 : f32
    %159 = vector.broadcast %cst_52 : f32 to vector<8x128xf32>
    %160 = arith.mulf %158, %159 : vector<8x128xf32>
    %cst_53 = arith.constant 5.000000e-01 : f32
    %161 = vector.broadcast %cst_53 : f32 to vector<8x128xf32>
    %162 = arith.addf %160, %161 : vector<8x128xf32>
    %163 = arith.mulf %156, %139 : vector<8x128xf32>
    %164 = arith.mulf %151, %157 : vector<8x128xf32>
    %165 = arith.addf %163, %164 : vector<8x128xf32>
    %166 = math.tanh %165 : vector<8x128xf32>
    %167 = arith.mulf %162, %166 : vector<8x128xf32>
    %168 = vector.extract_strided_slice %7 {offsets = [48, 0], sizes = [8, 512], strides = [1, 1]} : vector<64x512xf32> to vector<8x512xf32>
    %169 = arith.truncf %167 : vector<8x128xf32> to vector<8x128xbf16>
    %cst_54 = arith.constant dense<0.000000e+00> : vector<8x512xf32>
    %170 = tpu.matmul %169, %9, %cst_54 {dimension_numbers = #tpu.dot_dimension_numbers<[1], [0], [0], [1], [0, 0, 1, 1], [], []>} : vector<8x128xbf16>, vector<128x512xbf16>, vector<8x512xf32> -> vector<8x512xf32>
    %171 = arith.addf %168, %170 : vector<8x512xf32>
    %172 = math.tanh %171 : vector<8x512xf32>
    %173 = vector.extract_strided_slice %172 {offsets = [0, 0], sizes = [8, 128], strides = [1, 1]} : vector<8x512xf32> to vector<8x128xf32>
    %cst_55 = arith.constant 5.000000e-01 : f32
    %174 = vector.broadcast %cst_55 : f32 to vector<8x128xf32>
    %175 = arith.mulf %173, %174 : vector<8x128xf32>
    %cst_56 = arith.constant 5.000000e-01 : f32
    %176 = vector.broadcast %cst_56 : f32 to vector<8x128xf32>
    %177 = arith.addf %175, %176 : vector<8x128xf32>
    %178 = vector.extract_strided_slice %172 {offsets = [0, 128], sizes = [8, 128], strides = [1, 1]} : vector<8x512xf32> to vector<8x128xf32>
    %cst_57 = arith.constant 5.000000e-01 : f32
    %179 = vector.broadcast %cst_57 : f32 to vector<8x128xf32>
    %180 = arith.mulf %178, %179 : vector<8x128xf32>
    %cst_58 = arith.constant 5.000000e-01 : f32
    %181 = vector.broadcast %cst_58 : f32 to vector<8x128xf32>
    %182 = arith.addf %180, %181 : vector<8x128xf32>
    %183 = vector.extract_strided_slice %172 {offsets = [0, 256], sizes = [8, 128], strides = [1, 1]} : vector<8x512xf32> to vector<8x128xf32>
    %184 = vector.extract_strided_slice %172 {offsets = [0, 384], sizes = [8, 128], strides = [1, 1]} : vector<8x512xf32> to vector<8x128xf32>
    %cst_59 = arith.constant 5.000000e-01 : f32
    %185 = vector.broadcast %cst_59 : f32 to vector<8x128xf32>
    %186 = arith.mulf %184, %185 : vector<8x128xf32>
    %cst_60 = arith.constant 5.000000e-01 : f32
    %187 = vector.broadcast %cst_60 : f32 to vector<8x128xf32>
    %188 = arith.addf %186, %187 : vector<8x128xf32>
    %189 = arith.mulf %182, %165 : vector<8x128xf32>
    %190 = arith.mulf %177, %183 : vector<8x128xf32>
    %191 = arith.addf %189, %190 : vector<8x128xf32>
    %192 = math.tanh %191 : vector<8x128xf32>
    %193 = arith.mulf %188, %192 : vector<8x128xf32>
    %194 = vector.extract_strided_slice %7 {offsets = [56, 0], sizes = [8, 512], strides = [1, 1]} : vector<64x512xf32> to vector<8x512xf32>
    %195 = arith.truncf %193 : vector<8x128xf32> to vector<8x128xbf16>
    %cst_61 = arith.constant dense<0.000000e+00> : vector<8x512xf32>
    %196 = tpu.matmul %195, %9, %cst_61 {dimension_numbers = #tpu.dot_dimension_numbers<[1], [0], [0], [1], [0, 0, 1, 1], [], []>} : vector<8x128xbf16>, vector<128x512xbf16>, vector<8x512xf32> -> vector<8x512xf32>
    %197 = arith.addf %194, %196 : vector<8x512xf32>
    %198 = math.tanh %197 : vector<8x512xf32>
    %199 = vector.extract_strided_slice %198 {offsets = [0, 0], sizes = [8, 128], strides = [1, 1]} : vector<8x512xf32> to vector<8x128xf32>
    %cst_62 = arith.constant 5.000000e-01 : f32
    %200 = vector.broadcast %cst_62 : f32 to vector<8x128xf32>
    %201 = arith.mulf %199, %200 : vector<8x128xf32>
    %cst_63 = arith.constant 5.000000e-01 : f32
    %202 = vector.broadcast %cst_63 : f32 to vector<8x128xf32>
    %203 = arith.addf %201, %202 : vector<8x128xf32>
    %204 = vector.extract_strided_slice %198 {offsets = [0, 128], sizes = [8, 128], strides = [1, 1]} : vector<8x512xf32> to vector<8x128xf32>
    %cst_64 = arith.constant 5.000000e-01 : f32
    %205 = vector.broadcast %cst_64 : f32 to vector<8x128xf32>
    %206 = arith.mulf %204, %205 : vector<8x128xf32>
    %cst_65 = arith.constant 5.000000e-01 : f32
    %207 = vector.broadcast %cst_65 : f32 to vector<8x128xf32>
    %208 = arith.addf %206, %207 : vector<8x128xf32>
    %209 = vector.extract_strided_slice %198 {offsets = [0, 256], sizes = [8, 128], strides = [1, 1]} : vector<8x512xf32> to vector<8x128xf32>
    %210 = vector.extract_strided_slice %198 {offsets = [0, 384], sizes = [8, 128], strides = [1, 1]} : vector<8x512xf32> to vector<8x128xf32>
    %cst_66 = arith.constant 5.000000e-01 : f32
    %211 = vector.broadcast %cst_66 : f32 to vector<8x128xf32>
    %212 = arith.mulf %210, %211 : vector<8x128xf32>
    %cst_67 = arith.constant 5.000000e-01 : f32
    %213 = vector.broadcast %cst_67 : f32 to vector<8x128xf32>
    %214 = arith.addf %212, %213 : vector<8x128xf32>
    %215 = arith.mulf %208, %191 : vector<8x128xf32>
    %216 = arith.mulf %203, %209 : vector<8x128xf32>
    %217 = arith.addf %215, %216 : vector<8x128xf32>
    %218 = math.tanh %217 : vector<8x128xf32>
    %219 = arith.mulf %214, %218 : vector<8x128xf32>
    %220 = tpu.concatenate %37, %63, %89, %115, %141, %167, %193, %219 in 0 : vector<8x128xf32>, vector<8x128xf32>, vector<8x128xf32>, vector<8x128xf32>, vector<8x128xf32>, vector<8x128xf32>, vector<8x128xf32>, vector<8x128xf32> -> vector<64x128xf32>
    %221 = arith.truncf %220 : vector<64x128xf32> to vector<64x128xbf16>
    %c1 = arith.constant 1 : index
    %c0_68 = arith.constant 0 : index
    %c0_69 = arith.constant 0 : index
    %222 = vector.load %arg1[%c1, %c0_68, %c0_69] : memref<2x128x512xbf16, #tpu.memory_space<vmem>>, vector<1x128x512xbf16>
    %223 = vector.shape_cast %222 : vector<1x128x512xbf16> to vector<128x512xbf16>
    %cst_70 = arith.constant dense<0.000000e+00> : vector<64x512xf32>
    %224 = tpu.matmul %221, %223, %cst_70 {dimension_numbers = #tpu.dot_dimension_numbers<[1], [0], [0], [1], [0, 0, 1, 1], [], []>} : vector<64x128xbf16>, vector<128x512xbf16>, vector<64x512xf32> -> vector<64x512xf32>
    %c1_71 = arith.constant 1 : index
    %c0_72 = arith.constant 0 : index
    %c0_73 = arith.constant 0 : index
    %225 = vector.load %arg3[%c1_71, %c0_72, %c0_73] : memref<2x1x512xf32, #tpu.memory_space<vmem>>, vector<1x1x512xf32>
    %226 = vector.shape_cast %225 : vector<1x1x512xf32> to vector<1x512xf32>
    %227 = vector.broadcast %226 : vector<1x512xf32> to vector<64x512xf32>
    %228 = arith.addf %224, %227 : vector<64x512xf32>
    %c1_74 = arith.constant 1 : index
    %c0_75 = arith.constant 0 : index
    %c0_76 = arith.constant 0 : index
    %229 = vector.load %arg2[%c1_74, %c0_75, %c0_76] : memref<2x128x512xbf16, #tpu.memory_space<vmem>>, vector<1x128x512xbf16>
    %230 = vector.shape_cast %229 : vector<1x128x512xbf16> to vector<128x512xbf16>
    %cst_77 = arith.constant 0.000000e+00 : f32
    %231 = vector.broadcast %cst_77 : f32 to vector<8x128xf32>
    %cst_78 = arith.constant 0.000000e+00 : f32
    %232 = vector.broadcast %cst_78 : f32 to vector<8x128xf32>
    %233 = vector.extract_strided_slice %228 {offsets = [0, 0], sizes = [8, 512], strides = [1, 1]} : vector<64x512xf32> to vector<8x512xf32>
    %234 = arith.truncf %231 : vector<8x128xf32> to vector<8x128xbf16>
    %cst_79 = arith.constant dense<0.000000e+00> : vector<8x512xf32>
    %235 = tpu.matmul %234, %230, %cst_79 {dimension_numbers = #tpu.dot_dimension_numbers<[1], [0], [0], [1], [0, 0, 1, 1], [], []>} : vector<8x128xbf16>, vector<128x512xbf16>, vector<8x512xf32> -> vector<8x512xf32>
    %236 = arith.addf %233, %235 : vector<8x512xf32>
    %237 = math.tanh %236 : vector<8x512xf32>
    %238 = vector.extract_strided_slice %237 {offsets = [0, 0], sizes = [8, 128], strides = [1, 1]} : vector<8x512xf32> to vector<8x128xf32>
    %cst_80 = arith.constant 5.000000e-01 : f32
    %239 = vector.broadcast %cst_80 : f32 to vector<8x128xf32>
    %240 = arith.mulf %238, %239 : vector<8x128xf32>
    %cst_81 = arith.constant 5.000000e-01 : f32
    %241 = vector.broadcast %cst_81 : f32 to vector<8x128xf32>
    %242 = arith.addf %240, %241 : vector<8x128xf32>
    %243 = vector.extract_strided_slice %237 {offsets = [0, 128], sizes = [8, 128], strides = [1, 1]} : vector<8x512xf32> to vector<8x128xf32>
    %cst_82 = arith.constant 5.000000e-01 : f32
    %244 = vector.broadcast %cst_82 : f32 to vector<8x128xf32>
    %245 = arith.mulf %243, %244 : vector<8x128xf32>
    %cst_83 = arith.constant 5.000000e-01 : f32
    %246 = vector.broadcast %cst_83 : f32 to vector<8x128xf32>
    %247 = arith.addf %245, %246 : vector<8x128xf32>
    %248 = vector.extract_strided_slice %237 {offsets = [0, 256], sizes = [8, 128], strides = [1, 1]} : vector<8x512xf32> to vector<8x128xf32>
    %249 = vector.extract_strided_slice %237 {offsets = [0, 384], sizes = [8, 128], strides = [1, 1]} : vector<8x512xf32> to vector<8x128xf32>
    %cst_84 = arith.constant 5.000000e-01 : f32
    %250 = vector.broadcast %cst_84 : f32 to vector<8x128xf32>
    %251 = arith.mulf %249, %250 : vector<8x128xf32>
    %cst_85 = arith.constant 5.000000e-01 : f32
    %252 = vector.broadcast %cst_85 : f32 to vector<8x128xf32>
    %253 = arith.addf %251, %252 : vector<8x128xf32>
    %254 = arith.mulf %247, %232 : vector<8x128xf32>
    %255 = arith.mulf %242, %248 : vector<8x128xf32>
    %256 = arith.addf %254, %255 : vector<8x128xf32>
    %257 = math.tanh %256 : vector<8x128xf32>
    %258 = arith.mulf %253, %257 : vector<8x128xf32>
    %259 = vector.extract_strided_slice %228 {offsets = [8, 0], sizes = [8, 512], strides = [1, 1]} : vector<64x512xf32> to vector<8x512xf32>
    %260 = arith.truncf %258 : vector<8x128xf32> to vector<8x128xbf16>
    %cst_86 = arith.constant dense<0.000000e+00> : vector<8x512xf32>
    %261 = tpu.matmul %260, %230, %cst_86 {dimension_numbers = #tpu.dot_dimension_numbers<[1], [0], [0], [1], [0, 0, 1, 1], [], []>} : vector<8x128xbf16>, vector<128x512xbf16>, vector<8x512xf32> -> vector<8x512xf32>
    %262 = arith.addf %259, %261 : vector<8x512xf32>
    %263 = math.tanh %262 : vector<8x512xf32>
    %264 = vector.extract_strided_slice %263 {offsets = [0, 0], sizes = [8, 128], strides = [1, 1]} : vector<8x512xf32> to vector<8x128xf32>
    %cst_87 = arith.constant 5.000000e-01 : f32
    %265 = vector.broadcast %cst_87 : f32 to vector<8x128xf32>
    %266 = arith.mulf %264, %265 : vector<8x128xf32>
    %cst_88 = arith.constant 5.000000e-01 : f32
    %267 = vector.broadcast %cst_88 : f32 to vector<8x128xf32>
    %268 = arith.addf %266, %267 : vector<8x128xf32>
    %269 = vector.extract_strided_slice %263 {offsets = [0, 128], sizes = [8, 128], strides = [1, 1]} : vector<8x512xf32> to vector<8x128xf32>
    %cst_89 = arith.constant 5.000000e-01 : f32
    %270 = vector.broadcast %cst_89 : f32 to vector<8x128xf32>
    %271 = arith.mulf %269, %270 : vector<8x128xf32>
    %cst_90 = arith.constant 5.000000e-01 : f32
    %272 = vector.broadcast %cst_90 : f32 to vector<8x128xf32>
    %273 = arith.addf %271, %272 : vector<8x128xf32>
    %274 = vector.extract_strided_slice %263 {offsets = [0, 256], sizes = [8, 128], strides = [1, 1]} : vector<8x512xf32> to vector<8x128xf32>
    %275 = vector.extract_strided_slice %263 {offsets = [0, 384], sizes = [8, 128], strides = [1, 1]} : vector<8x512xf32> to vector<8x128xf32>
    %cst_91 = arith.constant 5.000000e-01 : f32
    %276 = vector.broadcast %cst_91 : f32 to vector<8x128xf32>
    %277 = arith.mulf %275, %276 : vector<8x128xf32>
    %cst_92 = arith.constant 5.000000e-01 : f32
    %278 = vector.broadcast %cst_92 : f32 to vector<8x128xf32>
    %279 = arith.addf %277, %278 : vector<8x128xf32>
    %280 = arith.mulf %273, %256 : vector<8x128xf32>
    %281 = arith.mulf %268, %274 : vector<8x128xf32>
    %282 = arith.addf %280, %281 : vector<8x128xf32>
    %283 = math.tanh %282 : vector<8x128xf32>
    %284 = arith.mulf %279, %283 : vector<8x128xf32>
    %285 = vector.extract_strided_slice %228 {offsets = [16, 0], sizes = [8, 512], strides = [1, 1]} : vector<64x512xf32> to vector<8x512xf32>
    %286 = arith.truncf %284 : vector<8x128xf32> to vector<8x128xbf16>
    %cst_93 = arith.constant dense<0.000000e+00> : vector<8x512xf32>
    %287 = tpu.matmul %286, %230, %cst_93 {dimension_numbers = #tpu.dot_dimension_numbers<[1], [0], [0], [1], [0, 0, 1, 1], [], []>} : vector<8x128xbf16>, vector<128x512xbf16>, vector<8x512xf32> -> vector<8x512xf32>
    %288 = arith.addf %285, %287 : vector<8x512xf32>
    %289 = math.tanh %288 : vector<8x512xf32>
    %290 = vector.extract_strided_slice %289 {offsets = [0, 0], sizes = [8, 128], strides = [1, 1]} : vector<8x512xf32> to vector<8x128xf32>
    %cst_94 = arith.constant 5.000000e-01 : f32
    %291 = vector.broadcast %cst_94 : f32 to vector<8x128xf32>
    %292 = arith.mulf %290, %291 : vector<8x128xf32>
    %cst_95 = arith.constant 5.000000e-01 : f32
    %293 = vector.broadcast %cst_95 : f32 to vector<8x128xf32>
    %294 = arith.addf %292, %293 : vector<8x128xf32>
    %295 = vector.extract_strided_slice %289 {offsets = [0, 128], sizes = [8, 128], strides = [1, 1]} : vector<8x512xf32> to vector<8x128xf32>
    %cst_96 = arith.constant 5.000000e-01 : f32
    %296 = vector.broadcast %cst_96 : f32 to vector<8x128xf32>
    %297 = arith.mulf %295, %296 : vector<8x128xf32>
    %cst_97 = arith.constant 5.000000e-01 : f32
    %298 = vector.broadcast %cst_97 : f32 to vector<8x128xf32>
    %299 = arith.addf %297, %298 : vector<8x128xf32>
    %300 = vector.extract_strided_slice %289 {offsets = [0, 256], sizes = [8, 128], strides = [1, 1]} : vector<8x512xf32> to vector<8x128xf32>
    %301 = vector.extract_strided_slice %289 {offsets = [0, 384], sizes = [8, 128], strides = [1, 1]} : vector<8x512xf32> to vector<8x128xf32>
    %cst_98 = arith.constant 5.000000e-01 : f32
    %302 = vector.broadcast %cst_98 : f32 to vector<8x128xf32>
    %303 = arith.mulf %301, %302 : vector<8x128xf32>
    %cst_99 = arith.constant 5.000000e-01 : f32
    %304 = vector.broadcast %cst_99 : f32 to vector<8x128xf32>
    %305 = arith.addf %303, %304 : vector<8x128xf32>
    %306 = arith.mulf %299, %282 : vector<8x128xf32>
    %307 = arith.mulf %294, %300 : vector<8x128xf32>
    %308 = arith.addf %306, %307 : vector<8x128xf32>
    %309 = math.tanh %308 : vector<8x128xf32>
    %310 = arith.mulf %305, %309 : vector<8x128xf32>
    %311 = vector.extract_strided_slice %228 {offsets = [24, 0], sizes = [8, 512], strides = [1, 1]} : vector<64x512xf32> to vector<8x512xf32>
    %312 = arith.truncf %310 : vector<8x128xf32> to vector<8x128xbf16>
    %cst_100 = arith.constant dense<0.000000e+00> : vector<8x512xf32>
    %313 = tpu.matmul %312, %230, %cst_100 {dimension_numbers = #tpu.dot_dimension_numbers<[1], [0], [0], [1], [0, 0, 1, 1], [], []>} : vector<8x128xbf16>, vector<128x512xbf16>, vector<8x512xf32> -> vector<8x512xf32>
    %314 = arith.addf %311, %313 : vector<8x512xf32>
    %315 = math.tanh %314 : vector<8x512xf32>
    %316 = vector.extract_strided_slice %315 {offsets = [0, 0], sizes = [8, 128], strides = [1, 1]} : vector<8x512xf32> to vector<8x128xf32>
    %cst_101 = arith.constant 5.000000e-01 : f32
    %317 = vector.broadcast %cst_101 : f32 to vector<8x128xf32>
    %318 = arith.mulf %316, %317 : vector<8x128xf32>
    %cst_102 = arith.constant 5.000000e-01 : f32
    %319 = vector.broadcast %cst_102 : f32 to vector<8x128xf32>
    %320 = arith.addf %318, %319 : vector<8x128xf32>
    %321 = vector.extract_strided_slice %315 {offsets = [0, 128], sizes = [8, 128], strides = [1, 1]} : vector<8x512xf32> to vector<8x128xf32>
    %cst_103 = arith.constant 5.000000e-01 : f32
    %322 = vector.broadcast %cst_103 : f32 to vector<8x128xf32>
    %323 = arith.mulf %321, %322 : vector<8x128xf32>
    %cst_104 = arith.constant 5.000000e-01 : f32
    %324 = vector.broadcast %cst_104 : f32 to vector<8x128xf32>
    %325 = arith.addf %323, %324 : vector<8x128xf32>
    %326 = vector.extract_strided_slice %315 {offsets = [0, 256], sizes = [8, 128], strides = [1, 1]} : vector<8x512xf32> to vector<8x128xf32>
    %327 = vector.extract_strided_slice %315 {offsets = [0, 384], sizes = [8, 128], strides = [1, 1]} : vector<8x512xf32> to vector<8x128xf32>
    %cst_105 = arith.constant 5.000000e-01 : f32
    %328 = vector.broadcast %cst_105 : f32 to vector<8x128xf32>
    %329 = arith.mulf %327, %328 : vector<8x128xf32>
    %cst_106 = arith.constant 5.000000e-01 : f32
    %330 = vector.broadcast %cst_106 : f32 to vector<8x128xf32>
    %331 = arith.addf %329, %330 : vector<8x128xf32>
    %332 = arith.mulf %325, %308 : vector<8x128xf32>
    %333 = arith.mulf %320, %326 : vector<8x128xf32>
    %334 = arith.addf %332, %333 : vector<8x128xf32>
    %335 = math.tanh %334 : vector<8x128xf32>
    %336 = arith.mulf %331, %335 : vector<8x128xf32>
    %337 = vector.extract_strided_slice %228 {offsets = [32, 0], sizes = [8, 512], strides = [1, 1]} : vector<64x512xf32> to vector<8x512xf32>
    %338 = arith.truncf %336 : vector<8x128xf32> to vector<8x128xbf16>
    %cst_107 = arith.constant dense<0.000000e+00> : vector<8x512xf32>
    %339 = tpu.matmul %338, %230, %cst_107 {dimension_numbers = #tpu.dot_dimension_numbers<[1], [0], [0], [1], [0, 0, 1, 1], [], []>} : vector<8x128xbf16>, vector<128x512xbf16>, vector<8x512xf32> -> vector<8x512xf32>
    %340 = arith.addf %337, %339 : vector<8x512xf32>
    %341 = math.tanh %340 : vector<8x512xf32>
    %342 = vector.extract_strided_slice %341 {offsets = [0, 0], sizes = [8, 128], strides = [1, 1]} : vector<8x512xf32> to vector<8x128xf32>
    %cst_108 = arith.constant 5.000000e-01 : f32
    %343 = vector.broadcast %cst_108 : f32 to vector<8x128xf32>
    %344 = arith.mulf %342, %343 : vector<8x128xf32>
    %cst_109 = arith.constant 5.000000e-01 : f32
    %345 = vector.broadcast %cst_109 : f32 to vector<8x128xf32>
    %346 = arith.addf %344, %345 : vector<8x128xf32>
    %347 = vector.extract_strided_slice %341 {offsets = [0, 128], sizes = [8, 128], strides = [1, 1]} : vector<8x512xf32> to vector<8x128xf32>
    %cst_110 = arith.constant 5.000000e-01 : f32
    %348 = vector.broadcast %cst_110 : f32 to vector<8x128xf32>
    %349 = arith.mulf %347, %348 : vector<8x128xf32>
    %cst_111 = arith.constant 5.000000e-01 : f32
    %350 = vector.broadcast %cst_111 : f32 to vector<8x128xf32>
    %351 = arith.addf %349, %350 : vector<8x128xf32>
    %352 = vector.extract_strided_slice %341 {offsets = [0, 256], sizes = [8, 128], strides = [1, 1]} : vector<8x512xf32> to vector<8x128xf32>
    %353 = vector.extract_strided_slice %341 {offsets = [0, 384], sizes = [8, 128], strides = [1, 1]} : vector<8x512xf32> to vector<8x128xf32>
    %cst_112 = arith.constant 5.000000e-01 : f32
    %354 = vector.broadcast %cst_112 : f32 to vector<8x128xf32>
    %355 = arith.mulf %353, %354 : vector<8x128xf32>
    %cst_113 = arith.constant 5.000000e-01 : f32
    %356 = vector.broadcast %cst_113 : f32 to vector<8x128xf32>
    %357 = arith.addf %355, %356 : vector<8x128xf32>
    %358 = arith.mulf %351, %334 : vector<8x128xf32>
    %359 = arith.mulf %346, %352 : vector<8x128xf32>
    %360 = arith.addf %358, %359 : vector<8x128xf32>
    %361 = math.tanh %360 : vector<8x128xf32>
    %362 = arith.mulf %357, %361 : vector<8x128xf32>
    %363 = vector.extract_strided_slice %228 {offsets = [40, 0], sizes = [8, 512], strides = [1, 1]} : vector<64x512xf32> to vector<8x512xf32>
    %364 = arith.truncf %362 : vector<8x128xf32> to vector<8x128xbf16>
    %cst_114 = arith.constant dense<0.000000e+00> : vector<8x512xf32>
    %365 = tpu.matmul %364, %230, %cst_114 {dimension_numbers = #tpu.dot_dimension_numbers<[1], [0], [0], [1], [0, 0, 1, 1], [], []>} : vector<8x128xbf16>, vector<128x512xbf16>, vector<8x512xf32> -> vector<8x512xf32>
    %366 = arith.addf %363, %365 : vector<8x512xf32>
    %367 = math.tanh %366 : vector<8x512xf32>
    %368 = vector.extract_strided_slice %367 {offsets = [0, 0], sizes = [8, 128], strides = [1, 1]} : vector<8x512xf32> to vector<8x128xf32>
    %cst_115 = arith.constant 5.000000e-01 : f32
    %369 = vector.broadcast %cst_115 : f32 to vector<8x128xf32>
    %370 = arith.mulf %368, %369 : vector<8x128xf32>
    %cst_116 = arith.constant 5.000000e-01 : f32
    %371 = vector.broadcast %cst_116 : f32 to vector<8x128xf32>
    %372 = arith.addf %370, %371 : vector<8x128xf32>
    %373 = vector.extract_strided_slice %367 {offsets = [0, 128], sizes = [8, 128], strides = [1, 1]} : vector<8x512xf32> to vector<8x128xf32>
    %cst_117 = arith.constant 5.000000e-01 : f32
    %374 = vector.broadcast %cst_117 : f32 to vector<8x128xf32>
    %375 = arith.mulf %373, %374 : vector<8x128xf32>
    %cst_118 = arith.constant 5.000000e-01 : f32
    %376 = vector.broadcast %cst_118 : f32 to vector<8x128xf32>
    %377 = arith.addf %375, %376 : vector<8x128xf32>
    %378 = vector.extract_strided_slice %367 {offsets = [0, 256], sizes = [8, 128], strides = [1, 1]} : vector<8x512xf32> to vector<8x128xf32>
    %379 = vector.extract_strided_slice %367 {offsets = [0, 384], sizes = [8, 128], strides = [1, 1]} : vector<8x512xf32> to vector<8x128xf32>
    %cst_119 = arith.constant 5.000000e-01 : f32
    %380 = vector.broadcast %cst_119 : f32 to vector<8x128xf32>
    %381 = arith.mulf %379, %380 : vector<8x128xf32>
    %cst_120 = arith.constant 5.000000e-01 : f32
    %382 = vector.broadcast %cst_120 : f32 to vector<8x128xf32>
    %383 = arith.addf %381, %382 : vector<8x128xf32>
    %384 = arith.mulf %377, %360 : vector<8x128xf32>
    %385 = arith.mulf %372, %378 : vector<8x128xf32>
    %386 = arith.addf %384, %385 : vector<8x128xf32>
    %387 = math.tanh %386 : vector<8x128xf32>
    %388 = arith.mulf %383, %387 : vector<8x128xf32>
    %389 = vector.extract_strided_slice %228 {offsets = [48, 0], sizes = [8, 512], strides = [1, 1]} : vector<64x512xf32> to vector<8x512xf32>
    %390 = arith.truncf %388 : vector<8x128xf32> to vector<8x128xbf16>
    %cst_121 = arith.constant dense<0.000000e+00> : vector<8x512xf32>
    %391 = tpu.matmul %390, %230, %cst_121 {dimension_numbers = #tpu.dot_dimension_numbers<[1], [0], [0], [1], [0, 0, 1, 1], [], []>} : vector<8x128xbf16>, vector<128x512xbf16>, vector<8x512xf32> -> vector<8x512xf32>
    %392 = arith.addf %389, %391 : vector<8x512xf32>
    %393 = math.tanh %392 : vector<8x512xf32>
    %394 = vector.extract_strided_slice %393 {offsets = [0, 0], sizes = [8, 128], strides = [1, 1]} : vector<8x512xf32> to vector<8x128xf32>
    %cst_122 = arith.constant 5.000000e-01 : f32
    %395 = vector.broadcast %cst_122 : f32 to vector<8x128xf32>
    %396 = arith.mulf %394, %395 : vector<8x128xf32>
    %cst_123 = arith.constant 5.000000e-01 : f32
    %397 = vector.broadcast %cst_123 : f32 to vector<8x128xf32>
    %398 = arith.addf %396, %397 : vector<8x128xf32>
    %399 = vector.extract_strided_slice %393 {offsets = [0, 128], sizes = [8, 128], strides = [1, 1]} : vector<8x512xf32> to vector<8x128xf32>
    %cst_124 = arith.constant 5.000000e-01 : f32
    %400 = vector.broadcast %cst_124 : f32 to vector<8x128xf32>
    %401 = arith.mulf %399, %400 : vector<8x128xf32>
    %cst_125 = arith.constant 5.000000e-01 : f32
    %402 = vector.broadcast %cst_125 : f32 to vector<8x128xf32>
    %403 = arith.addf %401, %402 : vector<8x128xf32>
    %404 = vector.extract_strided_slice %393 {offsets = [0, 256], sizes = [8, 128], strides = [1, 1]} : vector<8x512xf32> to vector<8x128xf32>
    %405 = vector.extract_strided_slice %393 {offsets = [0, 384], sizes = [8, 128], strides = [1, 1]} : vector<8x512xf32> to vector<8x128xf32>
    %cst_126 = arith.constant 5.000000e-01 : f32
    %406 = vector.broadcast %cst_126 : f32 to vector<8x128xf32>
    %407 = arith.mulf %405, %406 : vector<8x128xf32>
    %cst_127 = arith.constant 5.000000e-01 : f32
    %408 = vector.broadcast %cst_127 : f32 to vector<8x128xf32>
    %409 = arith.addf %407, %408 : vector<8x128xf32>
    %410 = arith.mulf %403, %386 : vector<8x128xf32>
    %411 = arith.mulf %398, %404 : vector<8x128xf32>
    %412 = arith.addf %410, %411 : vector<8x128xf32>
    %413 = math.tanh %412 : vector<8x128xf32>
    %414 = arith.mulf %409, %413 : vector<8x128xf32>
    %415 = vector.extract_strided_slice %228 {offsets = [56, 0], sizes = [8, 512], strides = [1, 1]} : vector<64x512xf32> to vector<8x512xf32>
    %416 = arith.truncf %414 : vector<8x128xf32> to vector<8x128xbf16>
    %cst_128 = arith.constant dense<0.000000e+00> : vector<8x512xf32>
    %417 = tpu.matmul %416, %230, %cst_128 {dimension_numbers = #tpu.dot_dimension_numbers<[1], [0], [0], [1], [0, 0, 1, 1], [], []>} : vector<8x128xbf16>, vector<128x512xbf16>, vector<8x512xf32> -> vector<8x512xf32>
    %418 = arith.addf %415, %417 : vector<8x512xf32>
    %419 = math.tanh %418 : vector<8x512xf32>
    %420 = vector.extract_strided_slice %419 {offsets = [0, 0], sizes = [8, 128], strides = [1, 1]} : vector<8x512xf32> to vector<8x128xf32>
    %cst_129 = arith.constant 5.000000e-01 : f32
    %421 = vector.broadcast %cst_129 : f32 to vector<8x128xf32>
    %422 = arith.mulf %420, %421 : vector<8x128xf32>
    %cst_130 = arith.constant 5.000000e-01 : f32
    %423 = vector.broadcast %cst_130 : f32 to vector<8x128xf32>
    %424 = arith.addf %422, %423 : vector<8x128xf32>
    %425 = vector.extract_strided_slice %419 {offsets = [0, 128], sizes = [8, 128], strides = [1, 1]} : vector<8x512xf32> to vector<8x128xf32>
    %cst_131 = arith.constant 5.000000e-01 : f32
    %426 = vector.broadcast %cst_131 : f32 to vector<8x128xf32>
    %427 = arith.mulf %425, %426 : vector<8x128xf32>
    %cst_132 = arith.constant 5.000000e-01 : f32
    %428 = vector.broadcast %cst_132 : f32 to vector<8x128xf32>
    %429 = arith.addf %427, %428 : vector<8x128xf32>
    %430 = vector.extract_strided_slice %419 {offsets = [0, 256], sizes = [8, 128], strides = [1, 1]} : vector<8x512xf32> to vector<8x128xf32>
    %431 = vector.extract_strided_slice %419 {offsets = [0, 384], sizes = [8, 128], strides = [1, 1]} : vector<8x512xf32> to vector<8x128xf32>
    %cst_133 = arith.constant 5.000000e-01 : f32
    %432 = vector.broadcast %cst_133 : f32 to vector<8x128xf32>
    %433 = arith.mulf %431, %432 : vector<8x128xf32>
    %cst_134 = arith.constant 5.000000e-01 : f32
    %434 = vector.broadcast %cst_134 : f32 to vector<8x128xf32>
    %435 = arith.addf %433, %434 : vector<8x128xf32>
    %436 = arith.mulf %429, %412 : vector<8x128xf32>
    %437 = arith.mulf %424, %430 : vector<8x128xf32>
    %438 = arith.addf %436, %437 : vector<8x128xf32>
    %439 = math.tanh %438 : vector<8x128xf32>
    %440 = arith.mulf %435, %439 : vector<8x128xf32>
    %c0_135 = arith.constant 0 : index
    %c0_136 = arith.constant 0 : index
    %441 = vector.load %arg4[%c0_135, %c0_136] : memref<128x128xf32, #tpu.memory_space<vmem>>, vector<128x128xf32>
    %cst_137 = arith.constant dense<0.000000e+00> : vector<8x128xf32>
    %442 = tpu.matmul %440, %441, %cst_137 {dimension_numbers = #tpu.dot_dimension_numbers<[1], [0], [0], [1], [0, 0, 1, 1], [], []>} : vector<8x128xf32>, vector<128x128xf32>, vector<8x128xf32> -> vector<8x128xf32>
    %c0_138 = arith.constant 0 : index
    %c0_139 = arith.constant 0 : index
    %443 = vector.load %arg5[%c0_138, %c0_139] : memref<1x128xf32, #tpu.memory_space<vmem>>, vector<1x128xf32>
    %444 = vector.broadcast %443 : vector<1x128xf32> to vector<8x128xf32>
    %445 = arith.addf %442, %444 : vector<8x128xf32>
    %c0_140 = arith.constant 0 : index
    %c0_141 = arith.constant 0 : index
    %446 = vector.load %arg6[%c0_140, %c0_141] : memref<8x128xf32, #tpu.memory_space<vmem>>, vector<8x128xf32>
    tpu.vector_store %arg6[%c0_140, %c0_141], %445 {strides = array<i32>} : memref<8x128xf32, #tpu.memory_space<vmem>>, vector<8x128xf32>,
    return
  }
}

</mosaic_0001>

<llo_original>
// kernel: tpu_custom_call.1
$region0: #{tpu_custom_call.1}
  #allocation0 [shape = 'u32[]', space=smem, size = 0x4, offset = 0x4, fixed_abs, tag = 'smem constant byte address 0x4 - core index']
  #allocation1 [shape = 'u32[144,128]{1,0:T(1,128)}', space=vmem, size = 0x12000, scoped, tag = 'internal scratch']
  %s0 = inlined_call_operand.hbm [shape: bf16[64,128], index: 0, kind: input, shape index: {}]
  %s1 = inlined_call_operand.hbm [shape: bf16[2,128,512], index: 1, kind: input, shape index: {}]
  %s2 = inlined_call_operand.hbm [shape: bf16[2,128,512], index: 2, kind: input, shape index: {}]
  %s3 = inlined_call_operand.vmem [shape: f32[2,1,512], index: 3, kind: input, shape index: {}]
  %s4 = inlined_call_operand.hbm [shape: f32[128,128], index: 4, kind: input, shape index: {}]
  %s5 = inlined_call_operand.vmem [shape: f32[1,128], index: 5, kind: input, shape index: {}]
  %s6 = inlined_call_operand.hbm [shape: f32[8,128], index: 6, kind: output, shape index: {}]
  %s7 = sld [smem:[#allocation0]]
  $region50: #{tpu_custom_call.1} parent=0
    _
  %s9 = ssub.s32 1, %s7
  %s10 = scalar_select 0, %s9, %s7
  $region1: #{tpu_custom_call.1} parent=0
    #allocation2 [shape = 'u8[16384]{0}', space=vmem, size = 0x4000, scoped, tag = 'input window, operand 0, single buffered']
    #allocation3 [shape = 's32[1]{0}', space=sflag, size = 0x4, scoped, tag = 'scoped memory for tpu_custom_call.1']
    #allocation4 [shape = 's32[1]{0}', space=sflag, size = 0x4, scoped, tag = 'scoped memory for tpu_custom_call.1']
    #allocation5 [shape = 'u8[262144]{0}', space=vmem, size = 0x40000, scoped, tag = 'input window, operand 1, single buffered']
    #allocation6 [shape = 's32[1]{0}', space=sflag, size = 0x4, scoped, tag = 'scoped memory for tpu_custom_call.1']
    #allocation7 [shape = 'u8[262144]{0}', space=vmem, size = 0x40000, scoped, tag = 'input window, operand 2, single buffered']
    #allocation8 [shape = 'u8[65536]{0}', space=vmem, size = 0x10000, scoped, tag = 'input window, operand 4, single buffered']
    #allocation9 [shape = 's32[1]{0}', space=sflag, size = 0x4, scoped, tag = 'scoped memory for tpu_custom_call.1']
    #allocation10 [shape = 'u8[4096]{0}', space=vmem, size = 0x1000, scoped, tag = 'output window, operand 0, single buffered']
    %11 = vsyncpa [#allocation3], 0
    %12 = vsyncpa [#allocation6], 0
    %13 = vsyncpa [#allocation9], 0
    %14 = vsyncpa [#allocation4], 0
    // Predicated region
    $region2: #{tpu_custom_call.1} parent=1 // pred_check
      _
    $region3: #{tpu_custom_call.1} parent=1 // pred_check_branch
      %16 = sbr.rel (0) target = $region5
    $region4: #{tpu_custom_call.1} parent=1 // pred_region
      %s18 = ssub.s32 512, 512
      %19 = vsyncadd [#allocation3], %s18
      %s20 = sshll.u32 [#allocation2], 4
      %s21 = int_to_ptr.vmem [resolvable:$true] %s20
      %26 = dma.hbm_to_vmem [thread:$0]  %s0, 512, %s21, [#allocation3], 64, 64, 4
    $region5: #{tpu_custom_call.1} parent=1 // pred_fallthru
      _
    // Predicated region
    $region6: #{tpu_custom_call.1} parent=1 // pred_check
      _
    $region7: #{tpu_custom_call.1} parent=1 // pred_check_branch
      %28 = sbr.rel (0) target = $region9
    $region8: #{tpu_custom_call.1} parent=1 // pred_region
      %s30 = ssub.s32 8192, 8192
      %31 = vsyncadd [#allocation6], %s30
      %s32 = sshll.u32 [#allocation5], 4
      %s33 = int_to_ptr.vmem [resolvable:$true] %s32
      %38 = dma.hbm_to_vmem [thread:$0]  %s1, 8192, %s33, [#allocation6], 256, 256, 16
    $region9: #{tpu_custom_call.1} parent=1 // pred_fallthru
      _
    // Predicated region
    $region10: #{tpu_custom_call.1} parent=1 // pred_check
      _
    $region11: #{tpu_custom_call.1} parent=1 // pred_check_branch
      %40 = sbr.rel (0) target = $region13
    $region12: #{tpu_custom_call.1} parent=1 // pred_region
      %s42 = ssub.s32 8192, 8192
      %43 = vsyncadd [#allocation6], %s42
      %s44 = sshll.u32 [#allocation7], 4
      %s45 = int_to_ptr.vmem [resolvable:$true] %s44
      %50 = dma.hbm_to_vmem [thread:$0]  %s2, 8192, %s45, [#allocation6], 256, 256, 16
    $region13: #{tpu_custom_call.1} parent=1 // pred_fallthru
      _
    // Predicated region
    $region14: #{tpu_custom_call.1} parent=1 // pred_check
      _
    $region15: #{tpu_custom_call.1} parent=1 // pred_check_branch
      %52 = sbr.rel (0) target = $region17
    $region16: #{tpu_custom_call.1} parent=1 // pred_region
      _
    $region17: #{tpu_custom_call.1} parent=1 // pred_fallthru
      _
    // Predicated region
    $region18: #{tpu_custom_call.1} parent=1 // pred_check
      _
    $region19: #{tpu_custom_call.1} parent=1 // pred_check_branch
      %54 = sbr.rel (0) target = $region21
    $region20: #{tpu_custom_call.1} parent=1 // pred_region
      %s56 = ssub.s32 2048, 2048
      %57 = vsyncadd [#allocation9], %s56
      %s58 = sshll.u32 [#allocation8], 4
      %s59 = int_to_ptr.vmem [resolvable:$true] %s58
      %64 = dma.hbm_to_vmem [thread:$0]  %s4, 2048, %s59, [#allocation9], 128, 128, 8
    $region21: #{tpu_custom_call.1} parent=1 // pred_fallthru
      _
    // Predicated region
    $region22: #{tpu_custom_call.1} parent=1 // pred_check
      _
    $region23: #{tpu_custom_call.1} parent=1 // pred_check_branch
      %66 = sbr.rel (0) target = $region25
    $region24: #{tpu_custom_call.1} parent=1 // pred_region
      _
    $region25: #{tpu_custom_call.1} parent=1 // pred_fallthru
      _
    // Predicated region
    $region26: #{tpu_custom_call.1} parent=1 // pred_check
      _
    $region27: #{tpu_custom_call.1} parent=1 // pred_check_branch
      %68 = sbr.rel (0) target = $region29
    $region28: #{tpu_custom_call.1} parent=1 // pred_region
      %69 = dma.done [#allocation3], 512
    $region29: #{tpu_custom_call.1} parent=1 // pred_fallthru
      _
    // Predicated region
    $region30: #{tpu_custom_call.1} parent=1 // pred_check
      _
    $region31: #{tpu_custom_call.1} parent=1 // pred_check_branch
      %71 = sbr.rel (0) target = $region33
    $region32: #{tpu_custom_call.1} parent=1 // pred_region
      %72 = dma.done [#allocation6], 8192
    $region33: #{tpu_custom_call.1} parent=1 // pred_fallthru
      _
    // Predicated region
    $region34: #{tpu_custom_call.1} parent=1 // pred_check
      _
    $region35: #{tpu_custom_call.1} parent=1 // pred_check_branch
      %74 = sbr.rel (0) target = $region37
    $region36: #{tpu_custom_call.1} parent=1 // pred_region
      %75 = dma.done [#allocation6], 8192
    $region37: #{tpu_custom_call.1} parent=1 // pred_fallthru
      _
    // Predicated region
    $region38: #{tpu_custom_call.1} parent=1 // pred_check
      _
    $region39: #{tpu_custom_call.1} parent=1 // pred_check_branch
      %77 = sbr.rel (0) target = $region41
    $region40: #{tpu_custom_call.1} parent=1 // pred_region
      %78 = dma.done [#allocation9], 2048
    $region41: #{tpu_custom_call.1} parent=1 // pred_fallthru
      _
    %v80 = vld [vmem:[#allocation2] sm:$0xf]
    %v81 = vld [vmem:[#allocation2 + $0x4] sm:$0xf]
    %v82 = vld [vmem:[#allocation2 + $0x8] sm:$0xf]
    %v83 = vld [vmem:[#allocation2 + $0xc] sm:$0xf]
    %v84 = vld [vmem:[#allocation2 + $0x10] sm:$0xf]
    %v85 = vld [vmem:[#allocation2 + $0x14] sm:$0xf]
    %v86 = vld [vmem:[#allocation2 + $0x18] sm:$0xf]
    %v87 = vld [vmem:[#allocation2 + $0x1c] sm:$0xf]
    %v88 = vld [vmem:[#allocation5] sm:$0xff]
    %v89 = vld [vmem:[#allocation5 + $0x8] sm:$0xff]
    %v90 = vld [vmem:[#allocation5 + $0x10] sm:$0xff]
    %v91 = vld [vmem:[#allocation5 + $0x18] sm:$0xff]
    %v92 = vld [vmem:[#allocation5 + $0x20] sm:$0xff]
    %v93 = vld [vmem:[#allocation5 + $0x28] sm:$0xff]
    %v94 = vld [vmem:[#allocation5 + $0x30] sm:$0xff]
    %v95 = vld [vmem:[#allocation5 + $0x38] sm:$0xff]
    %v96 = vld [vmem:[#allocation5 + $0x40] sm:$0xff]
    %v97 = vld [vmem:[#allocation5 + $0x48] sm:$0xff]
    %v98 = vld [vmem:[#allocation5 + $0x50] sm:$0xff]
    %v99 = vld [vmem:[#allocation5 + $0x58] sm:$0xff]
    %v100 = vld [vmem:[#allocation5 + $0x60] sm:$0xff]
    %v101 = vld [vmem:[#allocation5 + $0x68] sm:$0xff]
    %v102 = vld [vmem:[#allocation5 + $0x70] sm:$0xff]
    %v103 = vld [vmem:[#allocation5 + $0x78] sm:$0xff]
    %v104 = vld [vmem:[#allocation5 + $0x80] sm:$0xff]
    %v105 = vld [vmem:[#allocation5 + $0x88] sm:$0xff]
    %v106 = vld [vmem:[#allocation5 + $0x90] sm:$0xff]
    %v107 = vld [vmem:[#allocation5 + $0x98] sm:$0xff]
    %v108 = vld [vmem:[#allocation5 + $0xa0] sm:$0xff]
    %v109 = vld [vmem:[#allocation5 + $0xa8] sm:$0xff]
    %v110 = vld [vmem:[#allocation5 + $0xb0] sm:$0xff]
    %v111 = vld [vmem:[#allocation5 + $0xb8] sm:$0xff]
    %v112 = vld [vmem:[#allocation5 + $0xc0] sm:$0xff]
    %v113 = vld [vmem:[#allocation5 + $0xc8] sm:$0xff]
    %v114 = vld [vmem:[#allocation5 + $0xd0] sm:$0xff]
    %v115 = vld [vmem:[#allocation5 + $0xd8] sm:$0xff]
    %v116 = vld [vmem:[#allocation5 + $0xe0] sm:$0xff]
    %v117 = vld [vmem:[#allocation5 + $0xe8] sm:$0xff]
    %v118 = vld [vmem:[#allocation5 + $0xf0] sm:$0xff]
    %v119 = vld [vmem:[#allocation5 + $0xf8] sm:$0xff]
    %v120 = vld [vmem:[%s3] sm:$0xf]
    %v122 = vlaneseq
    %v123 = vshrl.u32 %v122, 7
    %v124 = vsub.s32 0, %v123
    %v125 = vrot.slane %v120, %v124
    %v126 = vlaneseq
    %v127 = vshrl.u32 %v126, 7
    %v128 = vsub.s32 1, %v127
    %v129 = vrot.slane %v120, %v128
    %v130 = vlaneseq
    %v131 = vshrl.u32 %v130, 7
    %v132 = vsub.s32 2, %v131
    %v133 = vrot.slane %v120, %v132
    %v134 = vlaneseq
    %v135 = vshrl.u32 %v134, 7
    %v136 = vsub.s32 3, %v135
    %v137 = vrot.slane %v120, %v136
    %v150 = vunpack.c.l.b16 %v80
    %v151 = vunpack.c.l.b16 %v81
    %v152 = vunpack.c.l.b16 %v82
    %v153 = vunpack.c.l.b16 %v83
    %v154 = vunpack.c.l.b16 %v84
    %v155 = vunpack.c.l.b16 %v85
    %v156 = vunpack.c.l.b16 %v86
    %v157 = vunpack.c.l.b16 %v87
    %v158 = vpack.c.b16 %v151, %v150
    %v159 = vpack.c.b16 %v153, %v152
    %v160 = vpack.c.b16 %v155, %v154
    %v161 = vpack.c.b16 %v157, %v156
    %v198 = vunpack.c.l.b16 %v88
    %v199 = vunpack.c.h.b16 %v88
    %v200 = vunpack.c.l.b16 %v89
    %v201 = vunpack.c.h.b16 %v89
    %v202 = vunpack.c.l.b16 %v90
    %v203 = vunpack.c.h.b16 %v90
    %v204 = vunpack.c.l.b16 %v91
    %v205 = vunpack.c.h.b16 %v91
    %v206 = vunpack.c.l.b16 %v92
    %v207 = vunpack.c.h.b16 %v92
    %v208 = vunpack.c.l.b16 %v93
    %v209 = vunpack.c.h.b16 %v93
    %v210 = vunpack.c.l.b16 %v94
    %v211 = vunpack.c.h.b16 %v94
    %v212 = vunpack.c.l.b16 %v95
    %v213 = vunpack.c.h.b16 %v95
    %v214 = vunpack.c.l.b16 %v96
    %v215 = vunpack.c.h.b16 %v96
    %v216 = vunpack.c.l.b16 %v97
    %v217 = vunpack.c.h.b16 %v97
    %v218 = vunpack.c.l.b16 %v98
    %v219 = vunpack.c.h.b16 %v98
    %v220 = vunpack.c.l.b16 %v99
    %v221 = vunpack.c.h.b16 %v99
    %v222 = vunpack.c.l.b16 %v100
    %v223 = vunpack.c.h.b16 %v100
    %v224 = vunpack.c.l.b16 %v101
    %v225 = vunpack.c.h.b16 %v101
    %v226 = vunpack.c.l.b16 %v102
    %v227 = vunpack.c.h.b16 %v102
    %v228 = vunpack.c.l.b16 %v103
    %v229 = vunpack.c.h.b16 %v103
    %v230 = vunpack.c.l.b16 %v104
    %v231 = vunpack.c.h.b16 %v104
    %v232 = vunpack.c.l.b16 %v105
    %v233 = vunpack.c.h.b16 %v105
    %v234 = vunpack.c.l.b16 %v106
    %v235 = vunpack.c.h.b16 %v106
    %v236 = vunpack.c.l.b16 %v107
    %v237 = vunpack.c.h.b16 %v107
    %v238 = vunpack.c.l.b16 %v108
    %v239 = vunpack.c.h.b16 %v108
    %v240 = vunpack.c.l.b16 %v109
    %v241 = vunpack.c.h.b16 %v109
    %v242 = vunpack.c.l.b16 %v110
    %v243 = vunpack.c.h.b16 %v110
    %v244 = vunpack.c.l.b16 %v111
    %v245 = vunpack.c.h.b16 %v111
    %v246 = vunpack.c.l.b16 %v112
    %v247 = vunpack.c.h.b16 %v112
    %v248 = vunpack.c.l.b16 %v113
    %v249 = vunpack.c.h.b16 %v113
    %v250 = vunpack.c.l.b16 %v114
    %v251 = vunpack.c.h.b16 %v114
    %v252 = vunpack.c.l.b16 %v115
    %v253 = vunpack.c.h.b16 %v115
    %v254 = vunpack.c.l.b16 %v116
    %v255 = vunpack.c.h.b16 %v116
    %v256 = vunpack.c.l.b16 %v117
    %v257 = vunpack.c.h.b16 %v117
    %v258 = vunpack.c.l.b16 %v118
    %v259 = vunpack.c.h.b16 %v118
    %v260 = vunpack.c.l.b16 %v119
    %v261 = vunpack.c.h.b16 %v119
    %v262 = vpack.c.b16 %v202, %v198
    %v263 = vpack.c.b16 %v203, %v199
    %v264 = vpack.c.b16 %v204, %v200
    %v265 = vpack.c.b16 %v205, %v201
    %v266 = vpack.c.b16 %v210, %v206
    %v267 = vpack.c.b16 %v211, %v207
    %v268 = vpack.c.b16 %v212, %v208
    %v269 = vpack.c.b16 %v213, %v209
    %v270 = vpack.c.b16 %v218, %v214
    %v271 = vpack.c.b16 %v219, %v215
    %v272 = vpack.c.b16 %v220, %v216
    %v273 = vpack.c.b16 %v221, %v217
    %v274 = vpack.c.b16 %v226, %v222
    %v275 = vpack.c.b16 %v227, %v223
    %v276 = vpack.c.b16 %v228, %v224
    %v277 = vpack.c.b16 %v229, %v225
    %v278 = vpack.c.b16 %v234, %v230
    %v279 = vpack.c.b16 %v235, %v231
    %v280 = vpack.c.b16 %v236, %v232
    %v281 = vpack.c.b16 %v237, %v233
    %v282 = vpack.c.b16 %v242, %v238
    %v283 = vpack.c.b16 %v243, %v239
    %v284 = vpack.c.b16 %v244, %v240
    %v285 = vpack.c.b16 %v245, %v241
    %v286 = vpack.c.b16 %v250, %v246
    %v287 = vpack.c.b16 %v251, %v247
    %v288 = vpack.c.b16 %v252, %v248
    %v289 = vpack.c.b16 %v253, %v249
    %v290 = vpack.c.b16 %v258, %v254
    %v291 = vpack.c.b16 %v259, %v255
    %v292 = vpack.c.b16 %v260, %v256
    %v293 = vpack.c.b16 %v261, %v257
    %326 = vmatprep.subr.bf16.mxu0 %v263
    %327 = vmatpush1.bf16.msra.mxu0 %v262
    %328 = vmatprep.subr.bf16.mxu0 %v267
    %329 = vmatpush1.bf16.msra.mxu0 %v266
    %330 = vmatprep.subr.bf16.mxu0 %v271
    %331 = vmatpush1.bf16.msra.mxu0 %v270
    %332 = vmatprep.subr.bf16.mxu0 %v275
    %333 = vmatpush1.bf16.msra.mxu0 %v274
    %334 = vmatprep.subr.bf16.mxu0 %v279
    %335 = vmatpush1.bf16.msra.mxu0 %v278
    %336 = vmatprep.subr.bf16.mxu0 %v283
    %337 = vmatpush1.bf16.msra.mxu0 %v282
    %338 = vmatprep.subr.bf16.mxu0 %v287
    %339 = vmatpush1.bf16.msra.mxu0 %v286
    %340 = vmatprep.subr.bf16.mxu0 %v291
    %341 = vmatpush1.bf16.msra.mxu0 %v290
    %342 = vmatprep.subr.bf16.mxu0 0
    %343 = vmatpush1.bf16.msra.mxu0 0
    %344 = vmatprep.subr.bf16.mxu0 0
    %345 = vmatpush1.bf16.msra.mxu0 0
    %346 = vmatprep.subr.bf16.mxu0 0
    %347 = vmatpush1.bf16.msra.mxu0 0
    %348 = vmatprep.subr.bf16.mxu0 0
    %349 = vmatpush1.bf16.msra.mxu0 0
    %350 = vmatprep.subr.bf16.mxu0 0
    %351 = vmatpush1.bf16.msra.mxu0 0
    %352 = vmatprep.subr.bf16.mxu0 0
    %353 = vmatpush1.bf16.msra.mxu0 0
    %354 = vmatprep.subr.bf16.mxu0 0
    %355 = vmatpush1.bf16.msra.mxu0 0
    %356 = vmatprep.subr.bf16.mxu0 0
    %357 = vmatpush1.bf16.msra.mxu0 0
    %358 = vmatprep.mubr.bf16.mxu0 0
    %359 = vmatmul.mubr.bf16.gmra.mrb[0].mxu0 %v158
    %v360 = vpop.f32.mrb[0].mxu0
    %v361 = vadd.f32 %v125, %v360
    %v362 = vpop.f32.mrb[0].mxu0
    %v363 = vadd.f32 %v129, %v362
    %v364 = vpop.f32.mrb[0].mxu0
    %v365 = vadd.f32 %v125, %v364
    %v366 = vpop.f32.mrb[0].mxu0
    %v367 = vadd.f32 %v129, %v366
    %368 = vmatprep.mubr.bf16.mxu0 0
    %369 = vmatmul.mubr.bf16.gmra.mrb[0].mxu0 %v159
    %v370 = vpop.f32.mrb[0].mxu0
    %v371 = vadd.f32 %v125, %v370
    %v372 = vpop.f32.mrb[0].mxu0
    %v373 = vadd.f32 %v129, %v372
    %v374 = vpop.f32.mrb[0].mxu0
    %v375 = vadd.f32 %v125, %v374
    %v376 = vpop.f32.mrb[0].mxu0
    %v377 = vadd.f32 %v129, %v376
    %378 = vmatprep.mubr.bf16.mxu0 0
    %379 = vmatmul.mubr.bf16.gmra.mrb[0].mxu0 %v160
    %v380 = vpop.f32.mrb[0].mxu0
    %v381 = vadd.f32 %v125, %v380
    %v382 = vpop.f32.mrb[0].mxu0
    %v383 = vadd.f32 %v129, %v382
    %v384 = vpop.f32.mrb[0].mxu0
    %v385 = vadd.f32 %v125, %v384
    %v386 = vpop.f32.mrb[0].mxu0
    %v387 = vadd.f32 %v129, %v386
    %388 = vmatprep.mubr.bf16.mxu0 0
    %389 = vmatmul.mubr.bf16.gmra.mrb[0].mxu0 %v161
    %v390 = vpop.f32.mrb[0].mxu0
    %v391 = vadd.f32 %v125, %v390
    %v392 = vpop.f32.mrb[0].mxu0
    %v393 = vadd.f32 %v129, %v392
    %v394 = vpop.f32.mrb[0].mxu0
    %v395 = vadd.f32 %v125, %v394
    %v396 = vpop.f32.mrb[0].mxu0
    %v397 = vadd.f32 %v129, %v396
    %398 = vdwg.mxu0
    %399 = vmatprep.subr.bf16.mxu0 %v265
    %400 = vmatpush1.bf16.msra.mxu0 %v264
    %401 = vmatprep.subr.bf16.mxu0 %v269
    %402 = vmatpush1.bf16.msra.mxu0 %v268
    %403 = vmatprep.subr.bf16.mxu0 %v273
    %404 = vmatpush1.bf16.msra.mxu0 %v272
    %405 = vmatprep.subr.bf16.mxu0 %v277
    %406 = vmatpush1.bf16.msra.mxu0 %v276
    %407 = vmatprep.subr.bf16.mxu0 %v281
    %408 = vmatpush1.bf16.msra.mxu0 %v280
    %409 = vmatprep.subr.bf16.mxu0 %v285
    %410 = vmatpush1.bf16.msra.mxu0 %v284
    %411 = vmatprep.subr.bf16.mxu0 %v289
    %412 = vmatpush1.bf16.msra.mxu0 %v288
    %413 = vmatprep.subr.bf16.mxu0 %v293
    %414 = vmatpush1.bf16.msra.mxu0 %v292
    %415 = vmatprep.subr.bf16.mxu0 0
    %416 = vmatpush1.bf16.msra.mxu0 0
    %417 = vmatprep.subr.bf16.mxu0 0
    %418 = vmatpush1.bf16.msra.mxu0 0
    %419 = vmatprep.subr.bf16.mxu0 0
    %420 = vmatpush1.bf16.msra.mxu0 0
    %421 = vmatprep.subr.bf16.mxu0 0
    %422 = vmatpush1.bf16.msra.mxu0 0
    %423 = vmatprep.subr.bf16.mxu0 0
    %424 = vmatpush1.bf16.msra.mxu0 0
    %425 = vmatprep.subr.bf16.mxu0 0
    %426 = vmatpush1.bf16.msra.mxu0 0
    %427 = vmatprep.subr.bf16.mxu0 0
    %428 = vmatpush1.bf16.msra.mxu0 0
    %429 = vmatprep.subr.bf16.mxu0 0
    %430 = vmatpush1.bf16.msra.mxu0 0
    %431 = vmatprep.mubr.bf16.mxu0 0
    %432 = vmatmul.mubr.bf16.gmra.mrb[0].mxu0 %v158
    %v433 = vpop.f32.mrb[0].mxu0
    %v434 = vadd.f32 %v133, %v433
    %v435 = vpop.f32.mrb[0].mxu0
    %v436 = vadd.f32 %v137, %v435
    %v437 = vpop.f32.mrb[0].mxu0
    %v438 = vadd.f32 %v133, %v437
    %v439 = vpop.f32.mrb[0].mxu0
    %v440 = vadd.f32 %v137, %v439
    %441 = vmatprep.mubr.bf16.mxu0 0
    %442 = vmatmul.mubr.bf16.gmra.mrb[0].mxu0 %v159
    %v443 = vpop.f32.mrb[0].mxu0
    %v444 = vadd.f32 %v133, %v443
    %v445 = vpop.f32.mrb[0].mxu0
    %v446 = vadd.f32 %v137, %v445
    %v447 = vpop.f32.mrb[0].mxu0
    %v448 = vadd.f32 %v133, %v447
    %v449 = vpop.f32.mrb[0].mxu0
    %v450 = vadd.f32 %v137, %v449
    %451 = vmatprep.mubr.bf16.mxu0 0
    %452 = vmatmul.mubr.bf16.gmra.mrb[0].mxu0 %v160
    %v453 = vpop.f32.mrb[0].mxu0
    %v454 = vadd.f32 %v133, %v453
    %v455 = vpop.f32.mrb[0].mxu0
    %v456 = vadd.f32 %v137, %v455
    %v457 = vpop.f32.mrb[0].mxu0
    %v458 = vadd.f32 %v133, %v457
    %v459 = vpop.f32.mrb[0].mxu0
    %v460 = vadd.f32 %v137, %v459
    %461 = vmatprep.mubr.bf16.mxu0 0
    %462 = vmatmul.mubr.bf16.gmra.mrb[0].mxu0 %v161
    %v463 = vpop.f32.mrb[0].mxu0
    %v464 = vadd.f32 %v133, %v463
    %v465 = vpop.f32.mrb[0].mxu0
    %v466 = vadd.f32 %v137, %v465
    %v467 = vpop.f32.mrb[0].mxu0
    %v468 = vadd.f32 %v133, %v467
    %v469 = vpop.f32.mrb[0].mxu0
    %v470 = vadd.f32 %v137, %v469
    %471 = vdwg.mxu0
    %v472 = vld [vmem:[#allocation7] sm:$0xff]
    %v473 = vld [vmem:[#allocation7 + $0x8] sm:$0xff]
    %v474 = vld [vmem:[#allocation7 + $0x10] sm:$0xff]
    %v475 = vld [vmem:[#allocation7 + $0x18] sm:$0xff]
    %v476 = vld [vmem:[#allocation7 + $0x20] sm:$0xff]
    %v477 = vld [vmem:[#allocation7 + $0x28] sm:$0xff]
    %v478 = vld [vmem:[#allocation7 + $0x30] sm:$0xff]
    %v479 = vld [vmem:[#allocation7 + $0x38] sm:$0xff]
    %v480 = vld [vmem:[#allocation7 + $0x40] sm:$0xff]
    %v481 = vld [vmem:[#allocation7 + $0x48] sm:$0xff]
    %v482 = vld [vmem:[#allocation7 + $0x50] sm:$0xff]
    %v483 = vld [vmem:[#allocation7 + $0x58] sm:$0xff]
    %v484 = vld [vmem:[#allocation7 + $0x60] sm:$0xff]
    %v485 = vld [vmem:[#allocation7 + $0x68] sm:$0xff]
    %v486 = vld [vmem:[#allocation7 + $0x70] sm:$0xff]
    %v487 = vld [vmem:[#allocation7 + $0x78] sm:$0xff]
    %v488 = vld [vmem:[#allocation7 + $0x80] sm:$0xff]
    %v489 = vld [vmem:[#allocation7 + $0x88] sm:$0xff]
    %v490 = vld [vmem:[#allocation7 + $0x90] sm:$0xff]
    %v491 = vld [vmem:[#allocation7 + $0x98] sm:$0xff]
    %v492 = vld [vmem:[#allocation7 + $0xa0] sm:$0xff]
    %v493 = vld [vmem:[#allocation7 + $0xa8] sm:$0xff]
    %v494 = vld [vmem:[#allocation7 + $0xb0] sm:$0xff]
    %v495 = vld [vmem:[#allocation7 + $0xb8] sm:$0xff]
    %v496 = vld [vmem:[#allocation7 + $0xc0] sm:$0xff]
    %v497 = vld [vmem:[#allocation7 + $0xc8] sm:$0xff]
    %v498 = vld [vmem:[#allocation7 + $0xd0] sm:$0xff]
    %v499 = vld [vmem:[#allocation7 + $0xd8] sm:$0xff]
    %v500 = vld [vmem:[#allocation7 + $0xe0] sm:$0xff]
    %v501 = vld [vmem:[#allocation7 + $0xe8] sm:$0xff]
    %v502 = vld [vmem:[#allocation7 + $0xf0] sm:$0xff]
    %v503 = vld [vmem:[#allocation7 + $0xf8] sm:$0xff]
    %v536 = vunpack.c.l.b16 %v472
    %v537 = vunpack.c.h.b16 %v472
    %v538 = vunpack.c.l.b16 %v473
    %v539 = vunpack.c.h.b16 %v473
    %v540 = vunpack.c.l.b16 %v474
    %v541 = vunpack.c.h.b16 %v474
    %v542 = vunpack.c.l.b16 %v475
    %v543 = vunpack.c.h.b16 %v475
    %v544 = vunpack.c.l.b16 %v476
    %v545 = vunpack.c.h.b16 %v476
    %v546 = vunpack.c.l.b16 %v477
    %v547 = vunpack.c.h.b16 %v477
    %v548 = vunpack.c.l.b16 %v478
    %v549 = vunpack.c.h.b16 %v478
    %v550 = vunpack.c.l.b16 %v479
    %v551 = vunpack.c.h.b16 %v479
    %v552 = vunpack.c.l.b16 %v480
    %v553 = vunpack.c.h.b16 %v480
    %v554 = vunpack.c.l.b16 %v481
    %v555 = vunpack.c.h.b16 %v481
    %v556 = vunpack.c.l.b16 %v482
    %v557 = vunpack.c.h.b16 %v482
    %v558 = vunpack.c.l.b16 %v483
    %v559 = vunpack.c.h.b16 %v483
    %v560 = vunpack.c.l.b16 %v484
    %v561 = vunpack.c.h.b16 %v484
    %v562 = vunpack.c.l.b16 %v485
    %v563 = vunpack.c.h.b16 %v485
    %v564 = vunpack.c.l.b16 %v486
    %v565 = vunpack.c.h.b16 %v486
    %v566 = vunpack.c.l.b16 %v487
    %v567 = vunpack.c.h.b16 %v487
    %v568 = vunpack.c.l.b16 %v488
    %v569 = vunpack.c.h.b16 %v488
    %v570 = vunpack.c.l.b16 %v489
    %v571 = vunpack.c.h.b16 %v489
    %v572 = vunpack.c.l.b16 %v490
    %v573 = vunpack.c.h.b16 %v490
    %v574 = vunpack.c.l.b16 %v491
    %v575 = vunpack.c.h.b16 %v491
    %v576 = vunpack.c.l.b16 %v492
    %v577 = vunpack.c.h.b16 %v492
    %v578 = vunpack.c.l.b16 %v493
    %v579 = vunpack.c.h.b16 %v493
    %v580 = vunpack.c.l.b16 %v494
    %v581 = vunpack.c.h.b16 %v494
    %v582 = vunpack.c.l.b16 %v495
    %v583 = vunpack.c.h.b16 %v495
    %v584 = vunpack.c.l.b16 %v496
    %v585 = vunpack.c.h.b16 %v496
    %v586 = vunpack.c.l.b16 %v497
    %v587 = vunpack.c.h.b16 %v497
    %v588 = vunpack.c.l.b16 %v498
    %v589 = vunpack.c.h.b16 %v498
    %v590 = vunpack.c.l.b16 %v499
    %v591 = vunpack.c.h.b16 %v499
    %v592 = vunpack.c.l.b16 %v500
    %v593 = vunpack.c.h.b16 %v500
    %v594 = vunpack.c.l.b16 %v501
    %v595 = vunpack.c.h.b16 %v501
    %v596 = vunpack.c.l.b16 %v502
    %v597 = vunpack.c.h.b16 %v502
    %v598 = vunpack.c.l.b16 %v503
    %v599 = vunpack.c.h.b16 %v503
    %v600 = vpack.c.b16 %v540, %v536
    %v601 = vpack.c.b16 %v541, %v537
    %v602 = vpack.c.b16 %v542, %v538
    %v603 = vpack.c.b16 %v543, %v539
    %v604 = vpack.c.b16 %v548, %v544
    %v605 = vpack.c.b16 %v549, %v545
    %v606 = vpack.c.b16 %v550, %v546
    %v607 = vpack.c.b16 %v551, %v547
    %v608 = vpack.c.b16 %v556, %v552
    %v609 = vpack.c.b16 %v557, %v553
    %v610 = vpack.c.b16 %v558, %v554
    %v611 = vpack.c.b16 %v559, %v555
    %v612 = vpack.c.b16 %v564, %v560
    %v613 = vpack.c.b16 %v565, %v561
    %v614 = vpack.c.b16 %v566, %v562
    %v615 = vpack.c.b16 %v567, %v563
    %v616 = vpack.c.b16 %v572, %v568
    %v617 = vpack.c.b16 %v573, %v569
    %v618 = vpack.c.b16 %v574, %v570
    %v619 = vpack.c.b16 %v575, %v571
    %v620 = vpack.c.b16 %v580, %v576
    %v621 = vpack.c.b16 %v581, %v577
    %v622 = vpack.c.b16 %v582, %v578
    %v623 = vpack.c.b16 %v583, %v579
    %v624 = vpack.c.b16 %v588, %v584
    %v625 = vpack.c.b16 %v589, %v585
    %v626 = vpack.c.b16 %v590, %v586
    %v627 = vpack.c.b16 %v591, %v587
    %v628 = vpack.c.b16 %v596, %v592
    %v629 = vpack.c.b16 %v597, %v593
    %v630 = vpack.c.b16 %v598, %v594
    %v631 = vpack.c.b16 %v599, %v595
    %664 = vmatprep.subr.bf16.mxu0 %v601
    %665 = vmatpush1.bf16.msra.mxu0 %v600
    %666 = vmatprep.subr.bf16.mxu0 %v605
    %667 = vmatpush1.bf16.msra.mxu0 %v604
    %668 = vmatprep.subr.bf16.mxu0 %v609
    %669 = vmatpush1.bf16.msra.mxu0 %v608
    %670 = vmatprep.subr.bf16.mxu0 %v613
    %671 = vmatpush1.bf16.msra.mxu0 %v612
    %672 = vmatprep.subr.bf16.mxu0 %v617
    %673 = vmatpush1.bf16.msra.mxu0 %v616
    %674 = vmatprep.subr.bf16.mxu0 %v621
    %675 = vmatpush1.bf16.msra.mxu0 %v620
    %676 = vmatprep.subr.bf16.mxu0 %v625
    %677 = vmatpush1.bf16.msra.mxu0 %v624
    %678 = vmatprep.subr.bf16.mxu0 %v629
    %679 = vmatpush1.bf16.msra.mxu0 %v628
    %680 = vmatprep.subr.bf16.mxu0 0
    %681 = vmatpush1.bf16.msra.mxu0 0
    %682 = vmatprep.subr.bf16.mxu0 0
    %683 = vmatpush1.bf16.msra.mxu0 0
    %684 = vmatprep.subr.bf16.mxu0 0
    %685 = vmatpush1.bf16.msra.mxu0 0
    %686 = vmatprep.subr.bf16.mxu0 0
    %687 = vmatpush1.bf16.msra.mxu0 0
    %688 = vmatprep.subr.bf16.mxu0 0
    %689 = vmatpush1.bf16.msra.mxu0 0
    %690 = vmatprep.subr.bf16.mxu0 0
    %691 = vmatpush1.bf16.msra.mxu0 0
    %692 = vmatprep.subr.bf16.mxu0 0
    %693 = vmatpush1.bf16.msra.mxu0 0
    %694 = vmatprep.subr.bf16.mxu0 0
    %695 = vmatpush1.bf16.msra.mxu0 0
    %696 = vmatprep.mubr.bf16.mxu0 0
    %697 = vmatmul.mubr.bf16.gmra.mrb[0].mxu0 0
    %v698 = vpop.f32.mrb[0].mxu0
    %v699 = vadd.f32 0.0, %v698
    %v700 = vpop.f32.mrb[0].mxu0
    %v701 = vadd.f32 0.0, %v700
    %v702 = vpop.f32.mrb[0].mxu0
    %v703 = vpop.f32.mrb[0].mxu0
    %704 = vdwg.mxu0
    %705 = vmatprep.subr.bf16.mxu0 %v603
    %706 = vmatpush1.bf16.msra.mxu0 %v602
    %707 = vmatprep.subr.bf16.mxu0 %v607
    %708 = vmatpush1.bf16.msra.mxu0 %v606
    %709 = vmatprep.subr.bf16.mxu0 %v611
    %710 = vmatpush1.bf16.msra.mxu0 %v610
    %711 = vmatprep.subr.bf16.mxu0 %v615
    %712 = vmatpush1.bf16.msra.mxu0 %v614
    %713 = vmatprep.subr.bf16.mxu0 %v619
    %714 = vmatpush1.bf16.msra.mxu0 %v618
    %715 = vmatprep.subr.bf16.mxu0 %v623
    %716 = vmatpush1.bf16.msra.mxu0 %v622
    %717 = vmatprep.subr.bf16.mxu0 %v627
    %718 = vmatpush1.bf16.msra.mxu0 %v626
    %719 = vmatprep.subr.bf16.mxu0 %v631
    %720 = vmatpush1.bf16.msra.mxu0 %v630
    %721 = vmatprep.subr.bf16.mxu0 0
    %722 = vmatpush1.bf16.msra.mxu0 0
    %723 = vmatprep.subr.bf16.mxu0 0
    %724 = vmatpush1.bf16.msra.mxu0 0
    %725 = vmatprep.subr.bf16.mxu0 0
    %726 = vmatpush1.bf16.msra.mxu0 0
    %727 = vmatprep.subr.bf16.mxu0 0
    %728 = vmatpush1.bf16.msra.mxu0 0
    %729 = vmatprep.subr.bf16.mxu0 0
    %730 = vmatpush1.bf16.msra.mxu0 0
    %731 = vmatprep.subr.bf16.mxu0 0
    %732 = vmatpush1.bf16.msra.mxu0 0
    %733 = vmatprep.subr.bf16.mxu0 0
    %734 = vmatpush1.bf16.msra.mxu0 0
    %735 = vmatprep.subr.bf16.mxu0 0
    %736 = vmatpush1.bf16.msra.mxu0 0
    %737 = vmatprep.mubr.bf16.mxu0 0
    %738 = vmatmul.mubr.bf16.gmra.mrb[0].mxu0 0
    %v739 = vpop.f32.mrb[0].mxu0
    %v740 = vadd.f32 0.0, %v739
    %v741 = vpop.f32.mrb[0].mxu0
    %v742 = vadd.f32 0.0, %v741
    %v743 = vpop.f32.mrb[0].mxu0
    %v744 = vpop.f32.mrb[0].mxu0
    %745 = vdwg.mxu0
    %v746 = vadd.f32 %v361, %v699
    %v747 = vadd.f32 %v363, %v701
    %v748 = vadd.f32 %v434, %v740
    %v749 = vadd.f32 %v436, %v742
    %v750 = vtanh.pop %v746
    %v751 = vtanh.pop %v747
    %v752 = vtanh.pop %v748
    %v753 = vtanh.pop %v749
    %v754 = vmul.f32 %v750, 0.5
    %v755 = vadd.f32 %v754, 0.5
    %v756 = vmul.f32 %v751, 0.5
    %v757 = vadd.f32 %v756, 0.5
    %v758 = vmul.f32 %v753, 0.5
    %v759 = vadd.f32 %v758, 0.5
    %v760 = vmul.f32 %v757, 0.0
    %v761 = vmul.f32 %v755, %v752
    %v762 = vadd.f32 %v760, %v761
    %v763 = vtanh.pop %v762
    %v764 = vmul.f32 %v759, %v763
    %v765 = vpack.c.bf16 %v764, %v764
    %766 = vmatprep.subr.bf16.mxu0 %v601
    %767 = vmatpush1.bf16.msra.mxu0 %v600
    %768 = vmatprep.subr.bf16.mxu0 %v605
    %769 = vmatpush1.bf16.msra.mxu0 %v604
    %770 = vmatprep.subr.bf16.mxu0 %v609
    %771 = vmatpush1.bf16.msra.mxu0 %v608
    %772 = vmatprep.subr.bf16.mxu0 %v613
    %773 = vmatpush1.bf16.msra.mxu0 %v612
    %774 = vmatprep.subr.bf16.mxu0 %v617
    %775 = vmatpush1.bf16.msra.mxu0 %v616
    %776 = vmatprep.subr.bf16.mxu0 %v621
    %777 = vmatpush1.bf16.msra.mxu0 %v620
    %778 = vmatprep.subr.bf16.mxu0 %v625
    %779 = vmatpush1.bf16.msra.mxu0 %v624
    %780 = vmatprep.subr.bf16.mxu0 %v629
    %781 = vmatpush1.bf16.msra.mxu0 %v628
    %782 = vmatprep.subr.bf16.mxu0 0
    %783 = vmatpush1.bf16.msra.mxu0 0
    %784 = vmatprep.subr.bf16.mxu0 0
    %785 = vmatpush1.bf16.msra.mxu0 0
    %786 = vmatprep.subr.bf16.mxu0 0
    %787 = vmatpush1.bf16.msra.mxu0 0
    %788 = vmatprep.subr.bf16.mxu0 0
    %789 = vmatpush1.bf16.msra.mxu0 0
    %790 = vmatprep.subr.bf16.mxu0 0
    %791 = vmatpush1.bf16.msra.mxu0 0
    %792 = vmatprep.subr.bf16.mxu0 0
    %793 = vmatpush1.bf16.msra.mxu0 0
    %794 = vmatprep.subr.bf16.mxu0 0
    %795 = vmatpush1.bf16.msra.mxu0 0
    %796 = vmatprep.subr.bf16.mxu0 0
    %797 = vmatpush1.bf16.msra.mxu0 0
    %798 = vmatprep.mubr.bf16.mxu0 0
    %799 = vmatmul.mubr.bf16.gmra.mrb[0].mxu0 %v765
    %v800 = vpop.f32.mrb[0].mxu0
    %v801 = vadd.f32 0.0, %v800
    %v802 = vpop.f32.mrb[0].mxu0
    %v803 = vadd.f32 0.0, %v802
    %v804 = vpop.f32.mrb[0].mxu0
    %v805 = vpop.f32.mrb[0].mxu0
    %806 = vdwg.mxu0
    %807 = vmatprep.subr.bf16.mxu0 %v603
    %808 = vmatpush1.bf16.msra.mxu0 %v602
    %809 = vmatprep.subr.bf16.mxu0 %v607
    %810 = vmatpush1.bf16.msra.mxu0 %v606
    %811 = vmatprep.subr.bf16.mxu0 %v611
    %812 = vmatpush1.bf16.msra.mxu0 %v610
    %813 = vmatprep.subr.bf16.mxu0 %v615
    %814 = vmatpush1.bf16.msra.mxu0 %v614
    %815 = vmatprep.subr.bf16.mxu0 %v619
    %816 = vmatpush1.bf16.msra.mxu0 %v618
    %817 = vmatprep.subr.bf16.mxu0 %v623
    %818 = vmatpush1.bf16.msra.mxu0 %v622
    %819 = vmatprep.subr.bf16.mxu0 %v627
    %820 = vmatpush1.bf16.msra.mxu0 %v626
    %821 = vmatprep.subr.bf16.mxu0 %v631
    %822 = vmatpush1.bf16.msra.mxu0 %v630
    %823 = vmatprep.subr.bf16.mxu0 0
    %824 = vmatpush1.bf16.msra.mxu0 0
    %825 = vmatprep.subr.bf16.mxu0 0
    %826 = vmatpush1.bf16.msra.mxu0 0
    %827 = vmatprep.subr.bf16.mxu0 0
    %828 = vmatpush1.bf16.msra.mxu0 0
    %829 = vmatprep.subr.bf16.mxu0 0
    %830 = vmatpush1.bf16.msra.mxu0 0
    %831 = vmatprep.subr.bf16.mxu0 0
    %832 = vmatpush1.bf16.msra.mxu0 0
    %833 = vmatprep.subr.bf16.mxu0 0
    %834 = vmatpush1.bf16.msra.mxu0 0
    %835 = vmatprep.subr.bf16.mxu0 0
    %836 = vmatpush1.bf16.msra.mxu0 0
    %837 = vmatprep.subr.bf16.mxu0 0
    %838 = vmatpush1.bf16.msra.mxu0 0
    %839 = vmatprep.mubr.bf16.mxu0 0
    %840 = vmatmul.mubr.bf16.gmra.mrb[0].mxu0 %v765
    %v841 = vpop.f32.mrb[0].mxu0
    %v842 = vadd.f32 0.0, %v841
    %v843 = vpop.f32.mrb[0].mxu0
    %v844 = vadd.f32 0.0, %v843
    %v845 = vpop.f32.mrb[0].mxu0
    %v846 = vpop.f32.mrb[0].mxu0
    %847 = vdwg.mxu0
    %v848 = vadd.f32 %v365, %v801
    %v849 = vadd.f32 %v367, %v803
    %v850 = vadd.f32 %v438, %v842
    %v851 = vadd.f32 %v440, %v844
    %v852 = vtanh.pop %v848
    %v853 = vtanh.pop %v849
    %v854 = vtanh.pop %v850
    %v855 = vtanh.pop %v851
    %v856 = vmul.f32 %v852, 0.5
    %v857 = vadd.f32 %v856, 0.5
    %v858 = vmul.f32 %v853, 0.5
    %v859 = vadd.f32 %v858, 0.5
    %v860 = vmul.f32 %v855, 0.5
    %v861 = vadd.f32 %v860, 0.5
    %v862 = vmul.f32 %v859, %v762
    %v863 = vmul.f32 %v857, %v854
    %v864 = vadd.f32 %v862, %v863
    %v865 = vtanh.pop %v864
    %v866 = vmul.f32 %v861, %v865
    %v867 = vpack.c.bf16 %v866, %v866
    %868 = vmatprep.subr.bf16.mxu0 %v601
    %869 = vmatpush1.bf16.msra.mxu0 %v600
    %870 = vmatprep.subr.bf16.mxu0 %v605
    %871 = vmatpush1.bf16.msra.mxu0 %v604
    %872 = vmatprep.subr.bf16.mxu0 %v609
    %873 = vmatpush1.bf16.msra.mxu0 %v608
    %874 = vmatprep.subr.bf16.mxu0 %v613
    %875 = vmatpush1.bf16.msra.mxu0 %v612
    %876 = vmatprep.subr.bf16.mxu0 %v617
    %877 = vmatpush1.bf16.msra.mxu0 %v616
    %878 = vmatprep.subr.bf16.mxu0 %v621
    %879 = vmatpush1.bf16.msra.mxu0 %v620
    %880 = vmatprep.subr.bf16.mxu0 %v625
    %881 = vmatpush1.bf16.msra.mxu0 %v624
    %882 = vmatprep.subr.bf16.mxu0 %v629
    %883 = vmatpush1.bf16.msra.mxu0 %v628
    %884 = vmatprep.subr.bf16.mxu0 0
    %885 = vmatpush1.bf16.msra.mxu0 0
    %886 = vmatprep.subr.bf16.mxu0 0
    %887 = vmatpush1.bf16.msra.mxu0 0
    %888 = vmatprep.subr.bf16.mxu0 0
    %889 = vmatpush1.bf16.msra.mxu0 0
    %890 = vmatprep.subr.bf16.mxu0 0
    %891 = vmatpush1.bf16.msra.mxu0 0
    %892 = vmatprep.subr.bf16.mxu0 0
    %893 = vmatpush1.bf16.msra.mxu0 0
    %894 = vmatprep.subr.bf16.mxu0 0
    %895 = vmatpush1.bf16.msra.mxu0 0
    %896 = vmatprep.subr.bf16.mxu0 0
    %897 = vmatpush1.bf16.msra.mxu0 0
    %898 = vmatprep.subr.bf16.mxu0 0
    %899 = vmatpush1.bf16.msra.mxu0 0
    %900 = vmatprep.mubr.bf16.mxu0 0
    %901 = vmatmul.mubr.bf16.gmra.mrb[0].mxu0 %v867
    %v902 = vpop.f32.mrb[0].mxu0
    %v903 = vadd.f32 0.0, %v902
    %v904 = vpop.f32.mrb[0].mxu0
    %v905 = vadd.f32 0.0, %v904
    %v906 = vpop.f32.mrb[0].mxu0
    %v907 = vpop.f32.mrb[0].mxu0
    %908 = vdwg.mxu0
    %909 = vmatprep.subr.bf16.mxu0 %v603
    %910 = vmatpush1.bf16.msra.mxu0 %v602
    %911 = vmatprep.subr.bf16.mxu0 %v607
    %912 = vmatpush1.bf16.msra.mxu0 %v606
    %913 = vmatprep.subr.bf16.mxu0 %v611
    %914 = vmatpush1.bf16.msra.mxu0 %v610
    %915 = vmatprep.subr.bf16.mxu0 %v615
    %916 = vmatpush1.bf16.msra.mxu0 %v614
    %917 = vmatprep.subr.bf16.mxu0 %v619
    %918 = vmatpush1.bf16.msra.mxu0 %v618
    %919 = vmatprep.subr.bf16.mxu0 %v623
    %920 = vmatpush1.bf16.msra.mxu0 %v622
    %921 = vmatprep.subr.bf16.mxu0 %v627
    %922 = vmatpush1.bf16.msra.mxu0 %v626
    %923 = vmatprep.subr.bf16.mxu0 %v631
    %924 = vmatpush1.bf16.msra.mxu0 %v630
    %925 = vmatprep.subr.bf16.mxu0 0
    %926 = vmatpush1.bf16.msra.mxu0 0
    %927 = vmatprep.subr.bf16.mxu0 0
    %928 = vmatpush1.bf16.msra.mxu0 0
    %929 = vmatprep.subr.bf16.mxu0 0
    %930 = vmatpush1.bf16.msra.mxu0 0
    %931 = vmatprep.subr.bf16.mxu0 0
    %932 = vmatpush1.bf16.msra.mxu0 0
    %933 = vmatprep.subr.bf16.mxu0 0
    %934 = vmatpush1.bf16.msra.mxu0 0
    %935 = vmatprep.subr.bf16.mxu0 0
    %936 = vmatpush1.bf16.msra.mxu0 0
    %937 = vmatprep.subr.bf16.mxu0 0
    %938 = vmatpush1.bf16.msra.mxu0 0
    %939 = vmatprep.subr.bf16.mxu0 0
    %940 = vmatpush1.bf16.msra.mxu0 0
    %941 = vmatprep.mubr.bf16.mxu0 0
    %942 = vmatmul.mubr.bf16.gmra.mrb[0].mxu0 %v867
    %v943 = vpop.f32.mrb[0].mxu0
    %v944 = vadd.f32 0.0, %v943
    %v945 = vpop.f32.mrb[0].mxu0
    %v946 = vadd.f32 0.0, %v945
    %v947 = vpop.f32.mrb[0].mxu0
    %v948 = vpop.f32.mrb[0].mxu0
    %949 = vdwg.mxu0
    %v950 = vadd.f32 %v371, %v903
    %v951 = vadd.f32 %v373, %v905
    %v952 = vadd.f32 %v444, %v944
    %v953 = vadd.f32 %v446, %v946
    %v954 = vtanh.pop %v950
    %v955 = vtanh.pop %v951
    %v956 = vtanh.pop %v952
    %v957 = vtanh.pop %v953
    %v958 = vmul.f32 %v954, 0.5
    %v959 = vadd.f32 %v958, 0.5
    %v960 = vmul.f32 %v955, 0.5
    %v961 = vadd.f32 %v960, 0.5
    %v962 = vmul.f32 %v957, 0.5
    %v963 = vadd.f32 %v962, 0.5
    %v964 = vmul.f32 %v961, %v864
    %v965 = vmul.f32 %v959, %v956
    %v966 = vadd.f32 %v964, %v965
    %v967 = vtanh.pop %v966
    %v968 = vmul.f32 %v963, %v967
    %v969 = vpack.c.bf16 %v968, %v968
    %970 = vmatprep.subr.bf16.mxu0 %v601
    %971 = vmatpush1.bf16.msra.mxu0 %v600
    %972 = vmatprep.subr.bf16.mxu0 %v605
    %973 = vmatpush1.bf16.msra.mxu0 %v604
    %974 = vmatprep.subr.bf16.mxu0 %v609
    %975 = vmatpush1.bf16.msra.mxu0 %v608
    %976 = vmatprep.subr.bf16.mxu0 %v613
    %977 = vmatpush1.bf16.msra.mxu0 %v612
    %978 = vmatprep.subr.bf16.mxu0 %v617
    %979 = vmatpush1.bf16.msra.mxu0 %v616
    %980 = vmatprep.subr.bf16.mxu0 %v621
    %981 = vmatpush1.bf16.msra.mxu0 %v620
    %982 = vmatprep.subr.bf16.mxu0 %v625
    %983 = vmatpush1.bf16.msra.mxu0 %v624
    %984 = vmatprep.subr.bf16.mxu0 %v629
    %985 = vmatpush1.bf16.msra.mxu0 %v628
    %986 = vmatprep.subr.bf16.mxu0 0
    %987 = vmatpush1.bf16.msra.mxu0 0
    %988 = vmatprep.subr.bf16.mxu0 0
    %989 = vmatpush1.bf16.msra.mxu0 0
    %990 = vmatprep.subr.bf16.mxu0 0
    %991 = vmatpush1.bf16.msra.mxu0 0
    %992 = vmatprep.subr.bf16.mxu0 0
    %993 = vmatpush1.bf16.msra.mxu0 0
    %994 = vmatprep.subr.bf16.mxu0 0
    %995 = vmatpush1.bf16.msra.mxu0 0
    %996 = vmatprep.subr.bf16.mxu0 0
    %997 = vmatpush1.bf16.msra.mxu0 0
    %998 = vmatprep.subr.bf16.mxu0 0
    %999 = vmatpush1.bf16.msra.mxu0 0
    %1000 = vmatprep.subr.bf16.mxu0 0
    %1001 = vmatpush1.bf16.msra.mxu0 0
    %1002 = vmatprep.mubr.bf16.mxu0 0
    %1003 = vmatmul.mubr.bf16.gmra.mrb[0].mxu0 %v969
    %v1004 = vpop.f32.mrb[0].mxu0
    %v1005 = vadd.f32 0.0, %v1004
    %v1006 = vpop.f32.mrb[0].mxu0
    %v1007 = vadd.f32 0.0, %v1006
    %v1008 = vpop.f32.mrb[0].mxu0
    %v1009 = vpop.f32.mrb[0].mxu0
    %1010 = vdwg.mxu0
    %1011 = vmatprep.subr.bf16.mxu0 %v603
    %1012 = vmatpush1.bf16.msra.mxu0 %v602
    %1013 = vmatprep.subr.bf16.mxu0 %v607
    %1014 = vmatpush1.bf16.msra.mxu0 %v606
    %1015 = vmatprep.subr.bf16.mxu0 %v611
    %1016 = vmatpush1.bf16.msra.mxu0 %v610
    %1017 = vmatprep.subr.bf16.mxu0 %v615
    %1018 = vmatpush1.bf16.msra.mxu0 %v614
    %1019 = vmatprep.subr.bf16.mxu0 %v619
    %1020 = vmatpush1.bf16.msra.mxu0 %v618
    %1021 = vmatprep.subr.bf16.mxu0 %v623
    %1022 = vmatpush1.bf16.msra.mxu0 %v622
    %1023 = vmatprep.subr.bf16.mxu0 %v627
    %1024 = vmatpush1.bf16.msra.mxu0 %v626
    %1025 = vmatprep.subr.bf16.mxu0 %v631
    %1026 = vmatpush1.bf16.msra.mxu0 %v630
    %1027 = vmatprep.subr.bf16.mxu0 0
    %1028 = vmatpush1.bf16.msra.mxu0 0
    %1029 = vmatprep.subr.bf16.mxu0 0
    %1030 = vmatpush1.bf16.msra.mxu0 0
    %1031 = vmatprep.subr.bf16.mxu0 0
    %1032 = vmatpush1.bf16.msra.mxu0 0
    %1033 = vmatprep.subr.bf16.mxu0 0
    %1034 = vmatpush1.bf16.msra.mxu0 0
    %1035 = vmatprep.subr.bf16.mxu0 0
    %1036 = vmatpush1.bf16.msra.mxu0 0
    %1037 = vmatprep.subr.bf16.mxu0 0
    %1038 = vmatpush1.bf16.msra.mxu0 0
    %1039 = vmatprep.subr.bf16.mxu0 0
    %1040 = vmatpush1.bf16.msra.mxu0 0
    %1041 = vmatprep.subr.bf16.mxu0 0
    %1042 = vmatpush1.bf16.msra.mxu0 0
    %1043 = vmatprep.mubr.bf16.mxu0 0
    %1044 = vmatmul.mubr.bf16.gmra.mrb[0].mxu0 %v969
    %v1045 = vpop.f32.mrb[0].mxu0
    %v1046 = vadd.f32 0.0, %v1045
    %v1047 = vpop.f32.mrb[0].mxu0
    %v1048 = vadd.f32 0.0, %v1047
    %v1049 = vpop.f32.mrb[0].mxu0
    %v1050 = vpop.f32.mrb[0].mxu0
    %1051 = vdwg.mxu0
    %v1052 = vadd.f32 %v375, %v1005
    %v1053 = vadd.f32 %v377, %v1007
    %v1054 = vadd.f32 %v448, %v1046
    %v1055 = vadd.f32 %v450, %v1048
    %v1056 = vtanh.pop %v1052
    %v1057 = vtanh.pop %v1053
    %v1058 = vtanh.pop %v1054
    %v1059 = vtanh.pop %v1055
    %v1060 = vmul.f32 %v1056, 0.5
    %v1061 = vadd.f32 %v1060, 0.5
    %v1062 = vmul.f32 %v1057, 0.5
    %v1063 = vadd.f32 %v1062, 0.5
    %v1064 = vmul.f32 %v1059, 0.5
    %v1065 = vadd.f32 %v1064, 0.5
    %v1066 = vmul.f32 %v1063, %v966
    %v1067 = vmul.f32 %v1061, %v1058
    %v1068 = vadd.f32 %v1066, %v1067
    %v1069 = vtanh.pop %v1068
    %v1070 = vmul.f32 %v1065, %v1069
    %v1071 = vpack.c.bf16 %v1070, %v1070
    %1072 = vmatprep.subr.bf16.mxu0 %v601
    %1073 = vmatpush1.bf16.msra.mxu0 %v600
    %1074 = vmatprep.subr.bf16.mxu0 %v605
    %1075 = vmatpush1.bf16.msra.mxu0 %v604
    %1076 = vmatprep.subr.bf16.mxu0 %v609
    %1077 = vmatpush1.bf16.msra.mxu0 %v608
    %1078 = vmatprep.subr.bf16.mxu0 %v613
    %1079 = vmatpush1.bf16.msra.mxu0 %v612
    %1080 = vmatprep.subr.bf16.mxu0 %v617
    %1081 = vmatpush1.bf16.msra.mxu0 %v616
    %1082 = vmatprep.subr.bf16.mxu0 %v621
    %1083 = vmatpush1.bf16.msra.mxu0 %v620
    %1084 = vmatprep.subr.bf16.mxu0 %v625
    %1085 = vmatpush1.bf16.msra.mxu0 %v624
    %1086 = vmatprep.subr.bf16.mxu0 %v629
    %1087 = vmatpush1.bf16.msra.mxu0 %v628
    %1088 = vmatprep.subr.bf16.mxu0 0
    %1089 = vmatpush1.bf16.msra.mxu0 0
    %1090 = vmatprep.subr.bf16.mxu0 0
    %1091 = vmatpush1.bf16.msra.mxu0 0
    %1092 = vmatprep.subr.bf16.mxu0 0
    %1093 = vmatpush1.bf16.msra.mxu0 0
    %1094 = vmatprep.subr.bf16.mxu0 0
    %1095 = vmatpush1.bf16.msra.mxu0 0
    %1096 = vmatprep.subr.bf16.mxu0 0
    %1097 = vmatpush1.bf16.msra.mxu0 0
    %1098 = vmatprep.subr.bf16.mxu0 0
    %1099 = vmatpush1.bf16.msra.mxu0 0
    %1100 = vmatprep.subr.bf16.mxu0 0
    %1101 = vmatpush1.bf16.msra.mxu0 0
    %1102 = vmatprep.subr.bf16.mxu0 0
    %1103 = vmatpush1.bf16.msra.mxu0 0
    %1104 = vmatprep.mubr.bf16.mxu0 0
    %1105 = vmatmul.mubr.bf16.gmra.mrb[0].mxu0 %v1071
    %v1106 = vpop.f32.mrb[0].mxu0
    %v1107 = vadd.f32 0.0, %v1106
    %v1108 = vpop.f32.mrb[0].mxu0
    %v1109 = vadd.f32 0.0, %v1108
    %v1110 = vpop.f32.mrb[0].mxu0
    %v1111 = vpop.f32.mrb[0].mxu0
    %1112 = vdwg.mxu0
    %1113 = vmatprep.subr.bf16.mxu0 %v603
    %1114 = vmatpush1.bf16.msra.mxu0 %v602
    %1115 = vmatprep.subr.bf16.mxu0 %v607
    %1116 = vmatpush1.bf16.msra.mxu0 %v606
    %1117 = vmatprep.subr.bf16.mxu0 %v611
    %1118 = vmatpush1.bf16.msra.mxu0 %v610
    %1119 = vmatprep.subr.bf16.mxu0 %v615
    %1120 = vmatpush1.bf16.msra.mxu0 %v614
    %1121 = vmatprep.subr.bf16.mxu0 %v619
    %1122 = vmatpush1.bf16.msra.mxu0 %v618
    %1123 = vmatprep.subr.bf16.mxu0 %v623
    %1124 = vmatpush1.bf16.msra.mxu0 %v622
    %1125 = vmatprep.subr.bf16.mxu0 %v627
    %1126 = vmatpush1.bf16.msra.mxu0 %v626
    %1127 = vmatprep.subr.bf16.mxu0 %v631
    %1128 = vmatpush1.bf16.msra.mxu0 %v630
    %1129 = vmatprep.subr.bf16.mxu0 0
    %1130 = vmatpush1.bf16.msra.mxu0 0
    %1131 = vmatprep.subr.bf16.mxu0 0
    %1132 = vmatpush1.bf16.msra.mxu0 0
    %1133 = vmatprep.subr.bf16.mxu0 0
    %1134 = vmatpush1.bf16.msra.mxu0 0
    %1135 = vmatprep.subr.bf16.mxu0 0
    %1136 = vmatpush1.bf16.msra.mxu0 0
    %1137 = vmatprep.subr.bf16.mxu0 0
    %1138 = vmatpush1.bf16.msra.mxu0 0
    %1139 = vmatprep.subr.bf16.mxu0 0
    %1140 = vmatpush1.bf16.msra.mxu0 0
    %1141 = vmatprep.subr.bf16.mxu0 0
    %1142 = vmatpush1.bf16.msra.mxu0 0
    %1143 = vmatprep.subr.bf16.mxu0 0
    %1144 = vmatpush1.bf16.msra.mxu0 0
    %1145 = vmatprep.mubr.bf16.mxu0 0
    %1146 = vmatmul.mubr.bf16.gmra.mrb[0].mxu0 %v1071
    %v1147 = vpop.f32.mrb[0].mxu0
    %v1148 = vadd.f32 0.0, %v1147
    %v1149 = vpop.f32.mrb[0].mxu0
    %v1150 = vadd.f32 0.0, %v1149
    %v1151 = vpop.f32.mrb[0].mxu0
    %v1152 = vpop.f32.mrb[0].mxu0
    %1153 = vdwg.mxu0
    %v1154 = vadd.f32 %v381, %v1107
    %v1155 = vadd.f32 %v383, %v1109
    %v1156 = vadd.f32 %v454, %v1148
    %v1157 = vadd.f32 %v456, %v1150
    %v1158 = vtanh.pop %v1154
    %v1159 = vtanh.pop %v1155
    %v1160 = vtanh.pop %v1156
    %v1161 = vtanh.pop %v1157
    %v1162 = vmul.f32 %v1158, 0.5
    %v1163 = vadd.f32 %v1162, 0.5
    %v1164 = vmul.f32 %v1159, 0.5
    %v1165 = vadd.f32 %v1164, 0.5
    %v1166 = vmul.f32 %v1161, 0.5
    %v1167 = vadd.f32 %v1166, 0.5
    %v1168 = vmul.f32 %v1165, %v1068
    %v1169 = vmul.f32 %v1163, %v1160
    %v1170 = vadd.f32 %v1168, %v1169
    %v1171 = vtanh.pop %v1170
    %v1172 = vmul.f32 %v1167, %v1171
    %v1173 = vpack.c.bf16 %v1172, %v1172
    %1174 = vmatprep.subr.bf16.mxu0 %v601
    %1175 = vmatpush1.bf16.msra.mxu0 %v600
    %1176 = vmatprep.subr.bf16.mxu0 %v605
    %1177 = vmatpush1.bf16.msra.mxu0 %v604
    %1178 = vmatprep.subr.bf16.mxu0 %v609
    %1179 = vmatpush1.bf16.msra.mxu0 %v608
    %1180 = vmatprep.subr.bf16.mxu0 %v613
    %1181 = vmatpush1.bf16.msra.mxu0 %v612
    %1182 = vmatprep.subr.bf16.mxu0 %v617
    %1183 = vmatpush1.bf16.msra.mxu0 %v616
    %1184 = vmatprep.subr.bf16.mxu0 %v621
    %1185 = vmatpush1.bf16.msra.mxu0 %v620
    %1186 = vmatprep.subr.bf16.mxu0 %v625
    %1187 = vmatpush1.bf16.msra.mxu0 %v624
    %1188 = vmatprep.subr.bf16.mxu0 %v629
    %1189 = vmatpush1.bf16.msra.mxu0 %v628
    %1190 = vmatprep.subr.bf16.mxu0 0
    %1191 = vmatpush1.bf16.msra.mxu0 0
    %1192 = vmatprep.subr.bf16.mxu0 0
    %1193 = vmatpush1.bf16.msra.mxu0 0
    %1194 = vmatprep.subr.bf16.mxu0 0
    %1195 = vmatpush1.bf16.msra.mxu0 0
    %1196 = vmatprep.subr.bf16.mxu0 0
    %1197 = vmatpush1.bf16.msra.mxu0 0
    %1198 = vmatprep.subr.bf16.mxu0 0
    %1199 = vmatpush1.bf16.msra.mxu0 0
    %1200 = vmatprep.subr.bf16.mxu0 0
    %1201 = vmatpush1.bf16.msra.mxu0 0
    %1202 = vmatprep.subr.bf16.mxu0 0
    %1203 = vmatpush1.bf16.msra.mxu0 0
    %1204 = vmatprep.subr.bf16.mxu0 0
    %1205 = vmatpush1.bf16.msra.mxu0 0
    %1206 = vmatprep.mubr.bf16.mxu0 0
    %1207 = vmatmul.mubr.bf16.gmra.mrb[0].mxu0 %v1173
    %v1208 = vpop.f32.mrb[0].mxu0
    %v1209 = vadd.f32 0.0, %v1208
    %v1210 = vpop.f32.mrb[0].mxu0
    %v1211 = vadd.f32 0.0, %v1210
    %v1212 = vpop.f32.mrb[0].mxu0
    %v1213 = vpop.f32.mrb[0].mxu0
    %1214 = vdwg.mxu0
    %1215 = vmatprep.subr.bf16.mxu0 %v603
    %1216 = vmatpush1.bf16.msra.mxu0 %v602
    %1217 = vmatprep.subr.bf16.mxu0 %v607
    %1218 = vmatpush1.bf16.msra.mxu0 %v606
    %1219 = vmatprep.subr.bf16.mxu0 %v611
    %1220 = vmatpush1.bf16.msra.mxu0 %v610
    %1221 = vmatprep.subr.bf16.mxu0 %v615
    %1222 = vmatpush1.bf16.msra.mxu0 %v614
    %1223 = vmatprep.subr.bf16.mxu0 %v619
    %1224 = vmatpush1.bf16.msra.mxu0 %v618
    %1225 = vmatprep.subr.bf16.mxu0 %v623
    %1226 = vmatpush1.bf16.msra.mxu0 %v622
    %1227 = vmatprep.subr.bf16.mxu0 %v627
    %1228 = vmatpush1.bf16.msra.mxu0 %v626
    %1229 = vmatprep.subr.bf16.mxu0 %v631
    %1230 = vmatpush1.bf16.msra.mxu0 %v630
    %1231 = vmatprep.subr.bf16.mxu0 0
    %1232 = vmatpush1.bf16.msra.mxu0 0
    %1233 = vmatprep.subr.bf16.mxu0 0
    %1234 = vmatpush1.bf16.msra.mxu0 0
    %1235 = vmatprep.subr.bf16.mxu0 0
    %1236 = vmatpush1.bf16.msra.mxu0 0
    %1237 = vmatprep.subr.bf16.mxu0 0
    %1238 = vmatpush1.bf16.msra.mxu0 0
    %1239 = vmatprep.subr.bf16.mxu0 0
    %1240 = vmatpush1.bf16.msra.mxu0 0
    %1241 = vmatprep.subr.bf16.mxu0 0
    %1242 = vmatpush1.bf16.msra.mxu0 0
    %1243 = vmatprep.subr.bf16.mxu0 0
    %1244 = vmatpush1.bf16.msra.mxu0 0
    %1245 = vmatprep.subr.bf16.mxu0 0
    %1246 = vmatpush1.bf16.msra.mxu0 0
    %1247 = vmatprep.mubr.bf16.mxu0 0
    %1248 = vmatmul.mubr.bf16.gmra.mrb[0].mxu0 %v1173
    %v1249 = vpop.f32.mrb[0].mxu0
    %v1250 = vadd.f32 0.0, %v1249
    %v1251 = vpop.f32.mrb[0].mxu0
    %v1252 = vadd.f32 0.0, %v1251
    %v1253 = vpop.f32.mrb[0].mxu0
    %v1254 = vpop.f32.mrb[0].mxu0
    %1255 = vdwg.mxu0
    %v1256 = vadd.f32 %v385, %v1209
    %v1257 = vadd.f32 %v387, %v1211
    %v1258 = vadd.f32 %v458, %v1250
    %v1259 = vadd.f32 %v460, %v1252
    %v1260 = vtanh.pop %v1256
    %v1261 = vtanh.pop %v1257
    %v1262 = vtanh.pop %v1258
    %v1263 = vtanh.pop %v1259
    %v1264 = vmul.f32 %v1260, 0.5
    %v1265 = vadd.f32 %v1264, 0.5
    %v1266 = vmul.f32 %v1261, 0.5
    %v1267 = vadd.f32 %v1266, 0.5
    %v1268 = vmul.f32 %v1263, 0.5
    %v1269 = vadd.f32 %v1268, 0.5
    %v1270 = vmul.f32 %v1267, %v1170
    %v1271 = vmul.f32 %v1265, %v1262
    %v1272 = vadd.f32 %v1270, %v1271
    %v1273 = vtanh.pop %v1272
    %v1274 = vmul.f32 %v1269, %v1273
    %v1275 = vpack.c.bf16 %v1274, %v1274
    %1276 = vmatprep.subr.bf16.mxu0 %v601
    %1277 = vmatpush1.bf16.msra.mxu0 %v600
    %1278 = vmatprep.subr.bf16.mxu0 %v605
    %1279 = vmatpush1.bf16.msra.mxu0 %v604
    %1280 = vmatprep.subr.bf16.mxu0 %v609
    %1281 = vmatpush1.bf16.msra.mxu0 %v608
    %1282 = vmatprep.subr.bf16.mxu0 %v613
    %1283 = vmatpush1.bf16.msra.mxu0 %v612
    %1284 = vmatprep.subr.bf16.mxu0 %v617
    %1285 = vmatpush1.bf16.msra.mxu0 %v616
    %1286 = vmatprep.subr.bf16.mxu0 %v621
    %1287 = vmatpush1.bf16.msra.mxu0 %v620
    %1288 = vmatprep.subr.bf16.mxu0 %v625
    %1289 = vmatpush1.bf16.msra.mxu0 %v624
    %1290 = vmatprep.subr.bf16.mxu0 %v629
    %1291 = vmatpush1.bf16.msra.mxu0 %v628
    %1292 = vmatprep.subr.bf16.mxu0 0
    %1293 = vmatpush1.bf16.msra.mxu0 0
    %1294 = vmatprep.subr.bf16.mxu0 0
    %1295 = vmatpush1.bf16.msra.mxu0 0
    %1296 = vmatprep.subr.bf16.mxu0 0
    %1297 = vmatpush1.bf16.msra.mxu0 0
    %1298 = vmatprep.subr.bf16.mxu0 0
    %1299 = vmatpush1.bf16.msra.mxu0 0
    %1300 = vmatprep.subr.bf16.mxu0 0
    %1301 = vmatpush1.bf16.msra.mxu0 0
    %1302 = vmatprep.subr.bf16.mxu0 0
    %1303 = vmatpush1.bf16.msra.mxu0 0
    %1304 = vmatprep.subr.bf16.mxu0 0
    %1305 = vmatpush1.bf16.msra.mxu0 0
    %1306 = vmatprep.subr.bf16.mxu0 0
    %1307 = vmatpush1.bf16.msra.mxu0 0
    %1308 = vmatprep.mubr.bf16.mxu0 0
    %1309 = vmatmul.mubr.bf16.gmra.mrb[0].mxu0 %v1275
    %v1310 = vpop.f32.mrb[0].mxu0
    %v1311 = vadd.f32 0.0, %v1310
    %v1312 = vpop.f32.mrb[0].mxu0
    %v1313 = vadd.f32 0.0, %v1312
    %v1314 = vpop.f32.mrb[0].mxu0
    %v1315 = vpop.f32.mrb[0].mxu0
    %1316 = vdwg.mxu0
    %1317 = vmatprep.subr.bf16.mxu0 %v603
    %1318 = vmatpush1.bf16.msra.mxu0 %v602
    %1319 = vmatprep.subr.bf16.mxu0 %v607
    %1320 = vmatpush1.bf16.msra.mxu0 %v606
    %1321 = vmatprep.subr.bf16.mxu0 %v611
    %1322 = vmatpush1.bf16.msra.mxu0 %v610
    %1323 = vmatprep.subr.bf16.mxu0 %v615
    %1324 = vmatpush1.bf16.msra.mxu0 %v614
    %1325 = vmatprep.subr.bf16.mxu0 %v619
    %1326 = vmatpush1.bf16.msra.mxu0 %v618
    %1327 = vmatprep.subr.bf16.mxu0 %v623
    %1328 = vmatpush1.bf16.msra.mxu0 %v622
    %1329 = vmatprep.subr.bf16.mxu0 %v627
    %1330 = vmatpush1.bf16.msra.mxu0 %v626
    %1331 = vmatprep.subr.bf16.mxu0 %v631
    %1332 = vmatpush1.bf16.msra.mxu0 %v630
    %1333 = vmatprep.subr.bf16.mxu0 0
    %1334 = vmatpush1.bf16.msra.mxu0 0
    %1335 = vmatprep.subr.bf16.mxu0 0
    %1336 = vmatpush1.bf16.msra.mxu0 0
    %1337 = vmatprep.subr.bf16.mxu0 0
    %1338 = vmatpush1.bf16.msra.mxu0 0
    %1339 = vmatprep.subr.bf16.mxu0 0
    %1340 = vmatpush1.bf16.msra.mxu0 0
    %1341 = vmatprep.subr.bf16.mxu0 0
    %1342 = vmatpush1.bf16.msra.mxu0 0
    %1343 = vmatprep.subr.bf16.mxu0 0
    %1344 = vmatpush1.bf16.msra.mxu0 0
    %1345 = vmatprep.subr.bf16.mxu0 0
    %1346 = vmatpush1.bf16.msra.mxu0 0
    %1347 = vmatprep.subr.bf16.mxu0 0
    %1348 = vmatpush1.bf16.msra.mxu0 0
    %1349 = vmatprep.mubr.bf16.mxu0 0
    %1350 = vmatmul.mubr.bf16.gmra.mrb[0].mxu0 %v1275
    %v1351 = vpop.f32.mrb[0].mxu0
    %v1352 = vadd.f32 0.0, %v1351
    %v1353 = vpop.f32.mrb[0].mxu0
    %v1354 = vadd.f32 0.0, %v1353
    %v1355 = vpop.f32.mrb[0].mxu0
    %v1356 = vpop.f32.mrb[0].mxu0
    %1357 = vdwg.mxu0
    %v1358 = vadd.f32 %v391, %v1311
    %v1359 = vadd.f32 %v393, %v1313
    %v1360 = vadd.f32 %v464, %v1352
    %v1361 = vadd.f32 %v466, %v1354
    %v1362 = vtanh.pop %v1358
    %v1363 = vtanh.pop %v1359
    %v1364 = vtanh.pop %v1360
    %v1365 = vtanh.pop %v1361
    %v1366 = vmul.f32 %v1362, 0.5
    %v1367 = vadd.f32 %v1366, 0.5
    %v1368 = vmul.f32 %v1363, 0.5
    %v1369 = vadd.f32 %v1368, 0.5
    %v1370 = vmul.f32 %v1365, 0.5
    %v1371 = vadd.f32 %v1370, 0.5
    %v1372 = vmul.f32 %v1369, %v1272
    %v1373 = vmul.f32 %v1367, %v1364
    %v1374 = vadd.f32 %v1372, %v1373
    %v1375 = vtanh.pop %v1374
    %v1376 = vmul.f32 %v1371, %v1375
    %v1377 = vpack.c.bf16 %v1376, %v1376
    %1378 = vmatprep.subr.bf16.mxu0 %v601
    %1379 = vmatpush1.bf16.msra.mxu0 %v600
    %1380 = vmatprep.subr.bf16.mxu0 %v605
    %1381 = vmatpush1.bf16.msra.mxu0 %v604
    %1382 = vmatprep.subr.bf16.mxu0 %v609
    %1383 = vmatpush1.bf16.msra.mxu0 %v608
    %1384 = vmatprep.subr.bf16.mxu0 %v613
    %1385 = vmatpush1.bf16.msra.mxu0 %v612
    %1386 = vmatprep.subr.bf16.mxu0 %v617
    %1387 = vmatpush1.bf16.msra.mxu0 %v616
    %1388 = vmatprep.subr.bf16.mxu0 %v621
    %1389 = vmatpush1.bf16.msra.mxu0 %v620
    %1390 = vmatprep.subr.bf16.mxu0 %v625
    %1391 = vmatpush1.bf16.msra.mxu0 %v624
    %1392 = vmatprep.subr.bf16.mxu0 %v629
    %1393 = vmatpush1.bf16.msra.mxu0 %v628
    %1394 = vmatprep.subr.bf16.mxu0 0
    %1395 = vmatpush1.bf16.msra.mxu0 0
    %1396 = vmatprep.subr.bf16.mxu0 0
    %1397 = vmatpush1.bf16.msra.mxu0 0
    %1398 = vmatprep.subr.bf16.mxu0 0
    %1399 = vmatpush1.bf16.msra.mxu0 0
    %1400 = vmatprep.subr.bf16.mxu0 0
    %1401 = vmatpush1.bf16.msra.mxu0 0
    %1402 = vmatprep.subr.bf16.mxu0 0
    %1403 = vmatpush1.bf16.msra.mxu0 0
    %1404 = vmatprep.subr.bf16.mxu0 0
    %1405 = vmatpush1.bf16.msra.mxu0 0
    %1406 = vmatprep.subr.bf16.mxu0 0
    %1407 = vmatpush1.bf16.msra.mxu0 0
    %1408 = vmatprep.subr.bf16.mxu0 0
    %1409 = vmatpush1.bf16.msra.mxu0 0
    %1410 = vmatprep.mubr.bf16.mxu0 0
    %1411 = vmatmul.mubr.bf16.gmra.mrb[0].mxu0 %v1377
    %v1412 = vpop.f32.mrb[0].mxu0
    %v1413 = vadd.f32 0.0, %v1412
    %v1414 = vpop.f32.mrb[0].mxu0
    %v1415 = vadd.f32 0.0, %v1414
    %v1416 = vpop.f32.mrb[0].mxu0
    %v1417 = vpop.f32.mrb[0].mxu0
    %1418 = vdwg.mxu0
    %1419 = vmatprep.subr.bf16.mxu0 %v603
    %1420 = vmatpush1.bf16.msra.mxu0 %v602
    %1421 = vmatprep.subr.bf16.mxu0 %v607
    %1422 = vmatpush1.bf16.msra.mxu0 %v606
    %1423 = vmatprep.subr.bf16.mxu0 %v611
    %1424 = vmatpush1.bf16.msra.mxu0 %v610
    %1425 = vmatprep.subr.bf16.mxu0 %v615
    %1426 = vmatpush1.bf16.msra.mxu0 %v614
    %1427 = vmatprep.subr.bf16.mxu0 %v619
    %1428 = vmatpush1.bf16.msra.mxu0 %v618
    %1429 = vmatprep.subr.bf16.mxu0 %v623
    %1430 = vmatpush1.bf16.msra.mxu0 %v622
    %1431 = vmatprep.subr.bf16.mxu0 %v627
    %1432 = vmatpush1.bf16.msra.mxu0 %v626
    %1433 = vmatprep.subr.bf16.mxu0 %v631
    %1434 = vmatpush1.bf16.msra.mxu0 %v630
    %1435 = vmatprep.subr.bf16.mxu0 0
    %1436 = vmatpush1.bf16.msra.mxu0 0
    %1437 = vmatprep.subr.bf16.mxu0 0
    %1438 = vmatpush1.bf16.msra.mxu0 0
    %1439 = vmatprep.subr.bf16.mxu0 0
    %1440 = vmatpush1.bf16.msra.mxu0 0
    %1441 = vmatprep.subr.bf16.mxu0 0
    %1442 = vmatpush1.bf16.msra.mxu0 0
    %1443 = vmatprep.subr.bf16.mxu0 0
    %1444 = vmatpush1.bf16.msra.mxu0 0
    %1445 = vmatprep.subr.bf16.mxu0 0
    %1446 = vmatpush1.bf16.msra.mxu0 0
    %1447 = vmatprep.subr.bf16.mxu0 0
    %1448 = vmatpush1.bf16.msra.mxu0 0
    %1449 = vmatprep.subr.bf16.mxu0 0
    %1450 = vmatpush1.bf16.msra.mxu0 0
    %1451 = vmatprep.mubr.bf16.mxu0 0
    %1452 = vmatmul.mubr.bf16.gmra.mrb[0].mxu0 %v1377
    %v1453 = vpop.f32.mrb[0].mxu0
    %v1454 = vadd.f32 0.0, %v1453
    %v1455 = vpop.f32.mrb[0].mxu0
    %v1456 = vadd.f32 0.0, %v1455
    %v1457 = vpop.f32.mrb[0].mxu0
    %v1458 = vpop.f32.mrb[0].mxu0
    %1459 = vdwg.mxu0
    %v1460 = vadd.f32 %v395, %v1413
    %v1461 = vadd.f32 %v397, %v1415
    %v1462 = vadd.f32 %v468, %v1454
    %v1463 = vadd.f32 %v470, %v1456
    %v1464 = vtanh.pop %v1460
    %v1465 = vtanh.pop %v1461
    %v1466 = vtanh.pop %v1462
    %v1467 = vtanh.pop %v1463
    %v1468 = vmul.f32 %v1464, 0.5
    %v1469 = vadd.f32 %v1468, 0.5
    %v1470 = vmul.f32 %v1465, 0.5
    %v1471 = vadd.f32 %v1470, 0.5
    %v1472 = vmul.f32 %v1467, 0.5
    %v1473 = vadd.f32 %v1472, 0.5
    %v1474 = vmul.f32 %v1471, %v1374
    %v1475 = vmul.f32 %v1469, %v1466
    %v1476 = vadd.f32 %v1474, %v1475
    %v1477 = vtanh.pop %v1476
    %v1478 = vmul.f32 %v1473, %v1477
    %v1479 = vpack.c.bf16 %v866, %v764
    %v1480 = vpack.c.bf16 %v1070, %v968
    %v1481 = vpack.c.bf16 %v1274, %v1172
    %v1482 = vpack.c.bf16 %v1478, %v1376
    %s1483 = scalar_lea.vmem [#allocation5], 256
    %v1484 = vld [vmem:[%s1483] sm:$0xff]
    %v1485 = vld [vmem:[%s1483 + $0x8] sm:$0xff]
    %v1486 = vld [vmem:[%s1483 + $0x10] sm:$0xff]
    %v1487 = vld [vmem:[%s1483 + $0x18] sm:$0xff]
    %v1488 = vld [vmem:[%s1483 + $0x20] sm:$0xff]
    %v1489 = vld [vmem:[%s1483 + $0x28] sm:$0xff]
    %v1490 = vld [vmem:[%s1483 + $0x30] sm:$0xff]
    %v1491 = vld [vmem:[%s1483 + $0x38] sm:$0xff]
    %v1492 = vld [vmem:[%s1483 + $0x40] sm:$0xff]
    %v1493 = vld [vmem:[%s1483 + $0x48] sm:$0xff]
    %v1494 = vld [vmem:[%s1483 + $0x50] sm:$0xff]
    %v1495 = vld [vmem:[%s1483 + $0x58] sm:$0xff]
    %v1496 = vld [vmem:[%s1483 + $0x60] sm:$0xff]
    %v1497 = vld [vmem:[%s1483 + $0x68] sm:$0xff]
    %v1498 = vld [vmem:[%s1483 + $0x70] sm:$0xff]
    %v1499 = vld [vmem:[%s1483 + $0x78] sm:$0xff]
    %v1500 = vld [vmem:[%s1483 + $0x80] sm:$0xff]
    %v1501 = vld [vmem:[%s1483 + $0x88] sm:$0xff]
    %v1502 = vld [vmem:[%s1483 + $0x90] sm:$0xff]
    %v1503 = vld [vmem:[%s1483 + $0x98] sm:$0xff]
    %v1504 = vld [vmem:[%s1483 + $0xa0] sm:$0xff]
    %v1505 = vld [vmem:[%s1483 + $0xa8] sm:$0xff]
    %v1506 = vld [vmem:[%s1483 + $0xb0] sm:$0xff]
    %v1507 = vld [vmem:[%s1483 + $0xb8] sm:$0xff]
    %v1508 = vld [vmem:[%s1483 + $0xc0] sm:$0xff]
    %v1509 = vld [vmem:[%s1483 + $0xc8] sm:$0xff]
    %v1510 = vld [vmem:[%s1483 + $0xd0] sm:$0xff]
    %v1511 = vld [vmem:[%s1483 + $0xd8] sm:$0xff]
    %v1512 = vld [vmem:[%s1483 + $0xe0] sm:$0xff]
    %v1513 = vld [vmem:[%s1483 + $0xe8] sm:$0xff]
    %v1514 = vld [vmem:[%s1483 + $0xf0] sm:$0xff]
    %v1515 = vld [vmem:[%s1483 + $0xf8] sm:$0xff]
    %s1516 = scalar_lea.vmem %s3, 4
    %v1517 = vld [vmem:[%s1516] sm:$0xf]
    %v1519 = vlaneseq
    %v1520 = vshrl.u32 %v1519, 7
    %v1521 = vsub.s32 0, %v1520
    %v1522 = vrot.slane %v1517, %v1521
    %v1523 = vlaneseq
    %v1524 = vshrl.u32 %v1523, 7
    %v1525 = vsub.s32 1, %v1524
    %v1526 = vrot.slane %v1517, %v1525
    %v1527 = vlaneseq
    %v1528 = vshrl.u32 %v1527, 7
    %v1529 = vsub.s32 2, %v1528
    %v1530 = vrot.slane %v1517, %v1529
    %v1531 = vlaneseq
    %v1532 = vshrl.u32 %v1531, 7
    %v1533 = vsub.s32 3, %v1532
    %v1534 = vrot.slane %v1517, %v1533
    %v1571 = vunpack.c.l.b16 %v1484
    %v1572 = vunpack.c.h.b16 %v1484
    %v1573 = vunpack.c.l.b16 %v1485
    %v1574 = vunpack.c.h.b16 %v1485
    %v1575 = vunpack.c.l.b16 %v1486
    %v1576 = vunpack.c.h.b16 %v1486
    %v1577 = vunpack.c.l.b16 %v1487
    %v1578 = vunpack.c.h.b16 %v1487
    %v1579 = vunpack.c.l.b16 %v1488
    %v1580 = vunpack.c.h.b16 %v1488
    %v1581 = vunpack.c.l.b16 %v1489
    %v1582 = vunpack.c.h.b16 %v1489
    %v1583 = vunpack.c.l.b16 %v1490
    %v1584 = vunpack.c.h.b16 %v1490
    %v1585 = vunpack.c.l.b16 %v1491
    %v1586 = vunpack.c.h.b16 %v1491
    %v1587 = vunpack.c.l.b16 %v1492
    %v1588 = vunpack.c.h.b16 %v1492
    %v1589 = vunpack.c.l.b16 %v1493
    %v1590 = vunpack.c.h.b16 %v1493
    %v1591 = vunpack.c.l.b16 %v1494
    %v1592 = vunpack.c.h.b16 %v1494
    %v1593 = vunpack.c.l.b16 %v1495
    %v1594 = vunpack.c.h.b16 %v1495
    %v1595 = vunpack.c.l.b16 %v1496
    %v1596 = vunpack.c.h.b16 %v1496
    %v1597 = vunpack.c.l.b16 %v1497
    %v1598 = vunpack.c.h.b16 %v1497
    %v1599 = vunpack.c.l.b16 %v1498
    %v1600 = vunpack.c.h.b16 %v1498
    %v1601 = vunpack.c.l.b16 %v1499
    %v1602 = vunpack.c.h.b16 %v1499
    %v1603 = vunpack.c.l.b16 %v1500
    %v1604 = vunpack.c.h.b16 %v1500
    %v1605 = vunpack.c.l.b16 %v1501
    %v1606 = vunpack.c.h.b16 %v1501
    %v1607 = vunpack.c.l.b16 %v1502
    %v1608 = vunpack.c.h.b16 %v1502
    %v1609 = vunpack.c.l.b16 %v1503
    %v1610 = vunpack.c.h.b16 %v1503
    %v1611 = vunpack.c.l.b16 %v1504
    %v1612 = vunpack.c.h.b16 %v1504
    %v1613 = vunpack.c.l.b16 %v1505
    %v1614 = vunpack.c.h.b16 %v1505
    %v1615 = vunpack.c.l.b16 %v1506
    %v1616 = vunpack.c.h.b16 %v1506
    %v1617 = vunpack.c.l.b16 %v1507
    %v1618 = vunpack.c.h.b16 %v1507
    %v1619 = vunpack.c.l.b16 %v1508
    %v1620 = vunpack.c.h.b16 %v1508
    %v1621 = vunpack.c.l.b16 %v1509
    %v1622 = vunpack.c.h.b16 %v1509
    %v1623 = vunpack.c.l.b16 %v1510
    %v1624 = vunpack.c.h.b16 %v1510
    %v1625 = vunpack.c.l.b16 %v1511
    %v1626 = vunpack.c.h.b16 %v1511
    %v1627 = vunpack.c.l.b16 %v1512
    %v1628 = vunpack.c.h.b16 %v1512
    %v1629 = vunpack.c.l.b16 %v1513
    %v1630 = vunpack.c.h.b16 %v1513
    %v1631 = vunpack.c.l.b16 %v1514
    %v1632 = vunpack.c.h.b16 %v1514
    %v1633 = vunpack.c.l.b16 %v1515
    %v1634 = vunpack.c.h.b16 %v1515
    %v1635 = vpack.c.b16 %v1575, %v1571
    %v1636 = vpack.c.b16 %v1576, %v1572
    %v1637 = vpack.c.b16 %v1577, %v1573
    %v1638 = vpack.c.b16 %v1578, %v1574
    %v1639 = vpack.c.b16 %v1583, %v1579
    %v1640 = vpack.c.b16 %v1584, %v1580
    %v1641 = vpack.c.b16 %v1585, %v1581
    %v1642 = vpack.c.b16 %v1586, %v1582
    %v1643 = vpack.c.b16 %v1591, %v1587
    %v1644 = vpack.c.b16 %v1592, %v1588
    %v1645 = vpack.c.b16 %v1593, %v1589
    %v1646 = vpack.c.b16 %v1594, %v1590
    %v1647 = vpack.c.b16 %v1599, %v1595
    %v1648 = vpack.c.b16 %v1600, %v1596
    %v1649 = vpack.c.b16 %v1601, %v1597
    %v1650 = vpack.c.b16 %v1602, %v1598
    %v1651 = vpack.c.b16 %v1607, %v1603
    %v1652 = vpack.c.b16 %v1608, %v1604
    %v1653 = vpack.c.b16 %v1609, %v1605
    %v1654 = vpack.c.b16 %v1610, %v1606
    %v1655 = vpack.c.b16 %v1615, %v1611
    %v1656 = vpack.c.b16 %v1616, %v1612
    %v1657 = vpack.c.b16 %v1617, %v1613
    %v1658 = vpack.c.b16 %v1618, %v1614
    %v1659 = vpack.c.b16 %v1623, %v1619
    %v1660 = vpack.c.b16 %v1624, %v1620
    %v1661 = vpack.c.b16 %v1625, %v1621
    %v1662 = vpack.c.b16 %v1626, %v1622
    %v1663 = vpack.c.b16 %v1631, %v1627
    %v1664 = vpack.c.b16 %v1632, %v1628
    %v1665 = vpack.c.b16 %v1633, %v1629
    %v1666 = vpack.c.b16 %v1634, %v1630
    %1699 = vmatprep.subr.bf16.mxu0 %v1636
    %1700 = vmatpush1.bf16.msra.mxu0 %v1635
    %1701 = vmatprep.subr.bf16.mxu0 %v1640
    %1702 = vmatpush1.bf16.msra.mxu0 %v1639
    %1703 = vmatprep.subr.bf16.mxu0 %v1644
    %1704 = vmatpush1.bf16.msra.mxu0 %v1643
    %1705 = vmatprep.subr.bf16.mxu0 %v1648
    %1706 = vmatpush1.bf16.msra.mxu0 %v1647
    %1707 = vmatprep.subr.bf16.mxu0 %v1652
    %1708 = vmatpush1.bf16.msra.mxu0 %v1651
    %1709 = vmatprep.subr.bf16.mxu0 %v1656
    %1710 = vmatpush1.bf16.msra.mxu0 %v1655
    %1711 = vmatprep.subr.bf16.mxu0 %v1660
    %1712 = vmatpush1.bf16.msra.mxu0 %v1659
    %1713 = vmatprep.subr.bf16.mxu0 %v1664
    %1714 = vmatpush1.bf16.msra.mxu0 %v1663
    %1715 = vmatprep.subr.bf16.mxu0 0
    %1716 = vmatpush1.bf16.msra.mxu0 0
    %1717 = vmatprep.subr.bf16.mxu0 0
    %1718 = vmatpush1.bf16.msra.mxu0 0
    %1719 = vmatprep.subr.bf16.mxu0 0
    %1720 = vmatpush1.bf16.msra.mxu0 0
    %1721 = vmatprep.subr.bf16.mxu0 0
    %1722 = vmatpush1.bf16.msra.mxu0 0
    %1723 = vmatprep.subr.bf16.mxu0 0
    %1724 = vmatpush1.bf16.msra.mxu0 0
    %1725 = vmatprep.subr.bf16.mxu0 0
    %1726 = vmatpush1.bf16.msra.mxu0 0
    %1727 = vmatprep.subr.bf16.mxu0 0
    %1728 = vmatpush1.bf16.msra.mxu0 0
    %1729 = vmatprep.subr.bf16.mxu0 0
    %1730 = vmatpush1.bf16.msra.mxu0 0
    %1731 = vmatprep.mubr.bf16.mxu0 0
    %1732 = vmatmul.mubr.bf16.gmra.mrb[0].mxu0 %v1479
    %v1733 = vpop.f32.mrb[0].mxu0
    %v1734 = vadd.f32 %v1522, %v1733
    %v1735 = vpop.f32.mrb[0].mxu0
    %v1736 = vadd.f32 %v1526, %v1735
    %v1737 = vpop.f32.mrb[0].mxu0
    %v1738 = vadd.f32 %v1522, %v1737
    %v1739 = vpop.f32.mrb[0].mxu0
    %v1740 = vadd.f32 %v1526, %v1739
    %1741 = vmatprep.mubr.bf16.mxu0 0
    %1742 = vmatmul.mubr.bf16.gmra.mrb[0].mxu0 %v1480
    %v1743 = vpop.f32.mrb[0].mxu0
    %v1744 = vadd.f32 %v1522, %v1743
    %v1745 = vpop.f32.mrb[0].mxu0
    %v1746 = vadd.f32 %v1526, %v1745
    %v1747 = vpop.f32.mrb[0].mxu0
    %v1748 = vadd.f32 %v1522, %v1747
    %v1749 = vpop.f32.mrb[0].mxu0
    %v1750 = vadd.f32 %v1526, %v1749
    %1751 = vmatprep.mubr.bf16.mxu0 0
    %1752 = vmatmul.mubr.bf16.gmra.mrb[0].mxu0 %v1481
    %v1753 = vpop.f32.mrb[0].mxu0
    %v1754 = vadd.f32 %v1522, %v1753
    %v1755 = vpop.f32.mrb[0].mxu0
    %v1756 = vadd.f32 %v1526, %v1755
    %v1757 = vpop.f32.mrb[0].mxu0
    %v1758 = vadd.f32 %v1522, %v1757
    %v1759 = vpop.f32.mrb[0].mxu0
    %v1760 = vadd.f32 %v1526, %v1759
    %1761 = vmatprep.mubr.bf16.mxu0 0
    %1762 = vmatmul.mubr.bf16.gmra.mrb[0].mxu0 %v1482
    %v1763 = vpop.f32.mrb[0].mxu0
    %v1764 = vadd.f32 %v1522, %v1763
    %v1765 = vpop.f32.mrb[0].mxu0
    %v1766 = vadd.f32 %v1526, %v1765
    %v1767 = vpop.f32.mrb[0].mxu0
    %v1768 = vadd.f32 %v1522, %v1767
    %v1769 = vpop.f32.mrb[0].mxu0
    %v1770 = vadd.f32 %v1526, %v1769
    %1771 = vdwg.mxu0
    %1772 = vmatprep.subr.bf16.mxu0 %v1638
    %1773 = vmatpush1.bf16.msra.mxu0 %v1637
    %1774 = vmatprep.subr.bf16.mxu0 %v1642
    %1775 = vmatpush1.bf16.msra.mxu0 %v1641
    %1776 = vmatprep.subr.bf16.mxu0 %v1646
    %1777 = vmatpush1.bf16.msra.mxu0 %v1645
    %1778 = vmatprep.subr.bf16.mxu0 %v1650
    %1779 = vmatpush1.bf16.msra.mxu0 %v1649
    %1780 = vmatprep.subr.bf16.mxu0 %v1654
    %1781 = vmatpush1.bf16.msra.mxu0 %v1653
    %1782 = vmatprep.subr.bf16.mxu0 %v1658
    %1783 = vmatpush1.bf16.msra.mxu0 %v1657
    %1784 = vmatprep.subr.bf16.mxu0 %v1662
    %1785 = vmatpush1.bf16.msra.mxu0 %v1661
    %1786 = vmatprep.subr.bf16.mxu0 %v1666
    %1787 = vmatpush1.bf16.msra.mxu0 %v1665
    %1788 = vmatprep.subr.bf16.mxu0 0
    %1789 = vmatpush1.bf16.msra.mxu0 0
    %1790 = vmatprep.subr.bf16.mxu0 0
    %1791 = vmatpush1.bf16.msra.mxu0 0
    %1792 = vmatprep.subr.bf16.mxu0 0
    %1793 = vmatpush1.bf16.msra.mxu0 0
    %1794 = vmatprep.subr.bf16.mxu0 0
    %1795 = vmatpush1.bf16.msra.mxu0 0
    %1796 = vmatprep.subr.bf16.mxu0 0
    %1797 = vmatpush1.bf16.msra.mxu0 0
    %1798 = vmatprep.subr.bf16.mxu0 0
    %1799 = vmatpush1.bf16.msra.mxu0 0
    %1800 = vmatprep.subr.bf16.mxu0 0
    %1801 = vmatpush1.bf16.msra.mxu0 0
    %1802 = vmatprep.subr.bf16.mxu0 0
    %1803 = vmatpush1.bf16.msra.mxu0 0
    %1804 = vmatprep.mubr.bf16.mxu0 0
    %1805 = vmatmul.mubr.bf16.gmra.mrb[0].mxu0 %v1479
    %v1806 = vpop.f32.mrb[0].mxu0
    %v1807 = vadd.f32 %v1530, %v1806
    %v1808 = vpop.f32.mrb[0].mxu0
    %v1809 = vadd.f32 %v1534, %v1808
    %v1810 = vpop.f32.mrb[0].mxu0
    %v1811 = vadd.f32 %v1530, %v1810
    %v1812 = vpop.f32.mrb[0].mxu0
    %v1813 = vadd.f32 %v1534, %v1812
    %1814 = vmatprep.mubr.bf16.mxu0 0
    %1815 = vmatmul.mubr.bf16.gmra.mrb[0].mxu0 %v1480
    %v1816 = vpop.f32.mrb[0].mxu0
    %v1817 = vadd.f32 %v1530, %v1816
    %v1818 = vpop.f32.mrb[0].mxu0
    %v1819 = vadd.f32 %v1534, %v1818
    %v1820 = vpop.f32.mrb[0].mxu0
    %v1821 = vadd.f32 %v1530, %v1820
    %v1822 = vpop.f32.mrb[0].mxu0
    %v1823 = vadd.f32 %v1534, %v1822
    %1824 = vmatprep.mubr.bf16.mxu0 0
    %1825 = vmatmul.mubr.bf16.gmra.mrb[0].mxu0 %v1481
    %v1826 = vpop.f32.mrb[0].mxu0
    %v1827 = vadd.f32 %v1530, %v1826
    %v1828 = vpop.f32.mrb[0].mxu0
    %v1829 = vadd.f32 %v1534, %v1828
    %v1830 = vpop.f32.mrb[0].mxu0
    %v1831 = vadd.f32 %v1530, %v1830
    %v1832 = vpop.f32.mrb[0].mxu0
    %v1833 = vadd.f32 %v1534, %v1832
    %1834 = vmatprep.mubr.bf16.mxu0 0
    %1835 = vmatmul.mubr.bf16.gmra.mrb[0].mxu0 %v1482
    %v1836 = vpop.f32.mrb[0].mxu0
    %v1837 = vadd.f32 %v1530, %v1836
    %v1838 = vpop.f32.mrb[0].mxu0
    %v1839 = vadd.f32 %v1534, %v1838
    %v1840 = vpop.f32.mrb[0].mxu0
    %v1841 = vadd.f32 %v1530, %v1840
    %v1842 = vpop.f32.mrb[0].mxu0
    %v1843 = vadd.f32 %v1534, %v1842
    %1844 = vdwg.mxu0
    %s1845 = scalar_lea.vmem [#allocation7], 256
    %v1846 = vld [vmem:[%s1845] sm:$0xff]
    %v1847 = vld [vmem:[%s1845 + $0x8] sm:$0xff]
    %v1848 = vld [vmem:[%s1845 + $0x10] sm:$0xff]
    %v1849 = vld [vmem:[%s1845 + $0x18] sm:$0xff]
    %v1850 = vld [vmem:[%s1845 + $0x20] sm:$0xff]
    %v1851 = vld [vmem:[%s1845 + $0x28] sm:$0xff]
    %v1852 = vld [vmem:[%s1845 + $0x30] sm:$0xff]
    %v1853 = vld [vmem:[%s1845 + $0x38] sm:$0xff]
    %v1854 = vld [vmem:[%s1845 + $0x40] sm:$0xff]
    %v1855 = vld [vmem:[%s1845 + $0x48] sm:$0xff]
    %v1856 = vld [vmem:[%s1845 + $0x50] sm:$0xff]
    %v1857 = vld [vmem:[%s1845 + $0x58] sm:$0xff]
    %v1858 = vld [vmem:[%s1845 + $0x60] sm:$0xff]
    %v1859 = vld [vmem:[%s1845 + $0x68] sm:$0xff]
    %v1860 = vld [vmem:[%s1845 + $0x70] sm:$0xff]
    %v1861 = vld [vmem:[%s1845 + $0x78] sm:$0xff]
    %v1862 = vld [vmem:[%s1845 + $0x80] sm:$0xff]
    %v1863 = vld [vmem:[%s1845 + $0x88] sm:$0xff]
    %v1864 = vld [vmem:[%s1845 + $0x90] sm:$0xff]
    %v1865 = vld [vmem:[%s1845 + $0x98] sm:$0xff]
    %v1866 = vld [vmem:[%s1845 + $0xa0] sm:$0xff]
    %v1867 = vld [vmem:[%s1845 + $0xa8] sm:$0xff]
    %v1868 = vld [vmem:[%s1845 + $0xb0] sm:$0xff]
    %v1869 = vld [vmem:[%s1845 + $0xb8] sm:$0xff]
    %v1870 = vld [vmem:[%s1845 + $0xc0] sm:$0xff]
    %v1871 = vld [vmem:[%s1845 + $0xc8] sm:$0xff]
    %v1872 = vld [vmem:[%s1845 + $0xd0] sm:$0xff]
    %v1873 = vld [vmem:[%s1845 + $0xd8] sm:$0xff]
    %v1874 = vld [vmem:[%s1845 + $0xe0] sm:$0xff]
    %v1875 = vld [vmem:[%s1845 + $0xe8] sm:$0xff]
    %v1876 = vld [vmem:[%s1845 + $0xf0] sm:$0xff]
    %v1877 = vld [vmem:[%s1845 + $0xf8] sm:$0xff]
    %v1910 = vunpack.c.l.b16 %v1846
    %v1911 = vunpack.c.h.b16 %v1846
    %v1912 = vunpack.c.l.b16 %v1847
    %v1913 = vunpack.c.h.b16 %v1847
    %v1914 = vunpack.c.l.b16 %v1848
    %v1915 = vunpack.c.h.b16 %v1848
    %v1916 = vunpack.c.l.b16 %v1849
    %v1917 = vunpack.c.h.b16 %v1849
    %v1918 = vunpack.c.l.b16 %v1850
    %v1919 = vunpack.c.h.b16 %v1850
    %v1920 = vunpack.c.l.b16 %v1851
    %v1921 = vunpack.c.h.b16 %v1851
    %v1922 = vunpack.c.l.b16 %v1852
    %v1923 = vunpack.c.h.b16 %v1852
    %v1924 = vunpack.c.l.b16 %v1853
    %v1925 = vunpack.c.h.b16 %v1853
    %v1926 = vunpack.c.l.b16 %v1854
    %v1927 = vunpack.c.h.b16 %v1854
    %v1928 = vunpack.c.l.b16 %v1855
    %v1929 = vunpack.c.h.b16 %v1855
    %v1930 = vunpack.c.l.b16 %v1856
    %v1931 = vunpack.c.h.b16 %v1856
    %v1932 = vunpack.c.l.b16 %v1857
    %v1933 = vunpack.c.h.b16 %v1857
    %v1934 = vunpack.c.l.b16 %v1858
    %v1935 = vunpack.c.h.b16 %v1858
    %v1936 = vunpack.c.l.b16 %v1859
    %v1937 = vunpack.c.h.b16 %v1859
    %v1938 = vunpack.c.l.b16 %v1860
    %v1939 = vunpack.c.h.b16 %v1860
    %v1940 = vunpack.c.l.b16 %v1861
    %v1941 = vunpack.c.h.b16 %v1861
    %v1942 = vunpack.c.l.b16 %v1862
    %v1943 = vunpack.c.h.b16 %v1862
    %v1944 = vunpack.c.l.b16 %v1863
    %v1945 = vunpack.c.h.b16 %v1863
    %v1946 = vunpack.c.l.b16 %v1864
    %v1947 = vunpack.c.h.b16 %v1864
    %v1948 = vunpack.c.l.b16 %v1865
    %v1949 = vunpack.c.h.b16 %v1865
    %v1950 = vunpack.c.l.b16 %v1866
    %v1951 = vunpack.c.h.b16 %v1866
    %v1952 = vunpack.c.l.b16 %v1867
    %v1953 = vunpack.c.h.b16 %v1867
    %v1954 = vunpack.c.l.b16 %v1868
    %v1955 = vunpack.c.h.b16 %v1868
    %v1956 = vunpack.c.l.b16 %v1869
    %v1957 = vunpack.c.h.b16 %v1869
    %v1958 = vunpack.c.l.b16 %v1870
    %v1959 = vunpack.c.h.b16 %v1870
    %v1960 = vunpack.c.l.b16 %v1871
    %v1961 = vunpack.c.h.b16 %v1871
    %v1962 = vunpack.c.l.b16 %v1872
    %v1963 = vunpack.c.h.b16 %v1872
    %v1964 = vunpack.c.l.b16 %v1873
    %v1965 = vunpack.c.h.b16 %v1873
    %v1966 = vunpack.c.l.b16 %v1874
    %v1967 = vunpack.c.h.b16 %v1874
    %v1968 = vunpack.c.l.b16 %v1875
    %v1969 = vunpack.c.h.b16 %v1875
    %v1970 = vunpack.c.l.b16 %v1876
    %v1971 = vunpack.c.h.b16 %v1876
    %v1972 = vunpack.c.l.b16 %v1877
    %v1973 = vunpack.c.h.b16 %v1877
    %v1974 = vpack.c.b16 %v1914, %v1910
    %v1975 = vpack.c.b16 %v1915, %v1911
    %v1976 = vpack.c.b16 %v1916, %v1912
    %v1977 = vpack.c.b16 %v1917, %v1913
    %v1978 = vpack.c.b16 %v1922, %v1918
    %v1979 = vpack.c.b16 %v1923, %v1919
    %v1980 = vpack.c.b16 %v1924, %v1920
    %v1981 = vpack.c.b16 %v1925, %v1921
    %v1982 = vpack.c.b16 %v1930, %v1926
    %v1983 = vpack.c.b16 %v1931, %v1927
    %v1984 = vpack.c.b16 %v1932, %v1928
    %v1985 = vpack.c.b16 %v1933, %v1929
    %v1986 = vpack.c.b16 %v1938, %v1934
    %v1987 = vpack.c.b16 %v1939, %v1935
    %v1988 = vpack.c.b16 %v1940, %v1936
    %v1989 = vpack.c.b16 %v1941, %v1937
    %v1990 = vpack.c.b16 %v1946, %v1942
    %v1991 = vpack.c.b16 %v1947, %v1943
    %v1992 = vpack.c.b16 %v1948, %v1944
    %v1993 = vpack.c.b16 %v1949, %v1945
    %v1994 = vpack.c.b16 %v1954, %v1950
    %v1995 = vpack.c.b16 %v1955, %v1951
    %v1996 = vpack.c.b16 %v1956, %v1952
    %v1997 = vpack.c.b16 %v1957, %v1953
    %v1998 = vpack.c.b16 %v1962, %v1958
    %v1999 = vpack.c.b16 %v1963, %v1959
    %v2000 = vpack.c.b16 %v1964, %v1960
    %v2001 = vpack.c.b16 %v1965, %v1961
    %v2002 = vpack.c.b16 %v1970, %v1966
    %v2003 = vpack.c.b16 %v1971, %v1967
    %v2004 = vpack.c.b16 %v1972, %v1968
    %v2005 = vpack.c.b16 %v1973, %v1969
    %2038 = vmatprep.subr.bf16.mxu0 %v1975
    %2039 = vmatpush1.bf16.msra.mxu0 %v1974
    %2040 = vmatprep.subr.bf16.mxu0 %v1979
    %2041 = vmatpush1.bf16.msra.mxu0 %v1978
    %2042 = vmatprep.subr.bf16.mxu0 %v1983
    %2043 = vmatpush1.bf16.msra.mxu0 %v1982
    %2044 = vmatprep.subr.bf16.mxu0 %v1987
    %2045 = vmatpush1.bf16.msra.mxu0 %v1986
    %2046 = vmatprep.subr.bf16.mxu0 %v1991
    %2047 = vmatpush1.bf16.msra.mxu0 %v1990
    %2048 = vmatprep.subr.bf16.mxu0 %v1995
    %2049 = vmatpush1.bf16.msra.mxu0 %v1994
    %2050 = vmatprep.subr.bf16.mxu0 %v1999
    %2051 = vmatpush1.bf16.msra.mxu0 %v1998
    %2052 = vmatprep.subr.bf16.mxu0 %v2003
    %2053 = vmatpush1.bf16.msra.mxu0 %v2002
    %2054 = vmatprep.subr.bf16.mxu0 0
    %2055 = vmatpush1.bf16.msra.mxu0 0
    %2056 = vmatprep.subr.bf16.mxu0 0
    %2057 = vmatpush1.bf16.msra.mxu0 0
    %2058 = vmatprep.subr.bf16.mxu0 0
    %2059 = vmatpush1.bf16.msra.mxu0 0
    %2060 = vmatprep.subr.bf16.mxu0 0
    %2061 = vmatpush1.bf16.msra.mxu0 0
    %2062 = vmatprep.subr.bf16.mxu0 0
    %2063 = vmatpush1.bf16.msra.mxu0 0
    %2064 = vmatprep.subr.bf16.mxu0 0
    %2065 = vmatpush1.bf16.msra.mxu0 0
    %2066 = vmatprep.subr.bf16.mxu0 0
    %2067 = vmatpush1.bf16.msra.mxu0 0
    %2068 = vmatprep.subr.bf16.mxu0 0
    %2069 = vmatpush1.bf16.msra.mxu0 0
    %2070 = vmatprep.mubr.bf16.mxu0 0
    %2071 = vmatmul.mubr.bf16.gmra.mrb[0].mxu0 0
    %v2072 = vpop.f32.mrb[0].mxu0
    %v2073 = vadd.f32 0.0, %v2072
    %v2074 = vpop.f32.mrb[0].mxu0
    %v2075 = vadd.f32 0.0, %v2074
    %v2076 = vpop.f32.mrb[0].mxu0
    %v2077 = vpop.f32.mrb[0].mxu0
    %2078 = vdwg.mxu0
    %2079 = vmatprep.subr.bf16.mxu0 %v1977
    %2080 = vmatpush1.bf16.msra.mxu0 %v1976
    %2081 = vmatprep.subr.bf16.mxu0 %v1981
    %2082 = vmatpush1.bf16.msra.mxu0 %v1980
    %2083 = vmatprep.subr.bf16.mxu0 %v1985
    %2084 = vmatpush1.bf16.msra.mxu0 %v1984
    %2085 = vmatprep.subr.bf16.mxu0 %v1989
    %2086 = vmatpush1.bf16.msra.mxu0 %v1988
    %2087 = vmatprep.subr.bf16.mxu0 %v1993
    %2088 = vmatpush1.bf16.msra.mxu0 %v1992
    %2089 = vmatprep.subr.bf16.mxu0 %v1997
    %2090 = vmatpush1.bf16.msra.mxu0 %v1996
    %2091 = vmatprep.subr.bf16.mxu0 %v2001
    %2092 = vmatpush1.bf16.msra.mxu0 %v2000
    %2093 = vmatprep.subr.bf16.mxu0 %v2005
    %2094 = vmatpush1.bf16.msra.mxu0 %v2004
    %2095 = vmatprep.subr.bf16.mxu0 0
    %2096 = vmatpush1.bf16.msra.mxu0 0
    %2097 = vmatprep.subr.bf16.mxu0 0
    %2098 = vmatpush1.bf16.msra.mxu0 0
    %2099 = vmatprep.subr.bf16.mxu0 0
    %2100 = vmatpush1.bf16.msra.mxu0 0
    %2101 = vmatprep.subr.bf16.mxu0 0
    %2102 = vmatpush1.bf16.msra.mxu0 0
    %2103 = vmatprep.subr.bf16.mxu0 0
    %2104 = vmatpush1.bf16.msra.mxu0 0
    %2105 = vmatprep.subr.bf16.mxu0 0
    %2106 = vmatpush1.bf16.msra.mxu0 0
    %2107 = vmatprep.subr.bf16.mxu0 0
    %2108 = vmatpush1.bf16.msra.mxu0 0
    %2109 = vmatprep.subr.bf16.mxu0 0
    %2110 = vmatpush1.bf16.msra.mxu0 0
    %2111 = vmatprep.mubr.bf16.mxu0 0
    %2112 = vmatmul.mubr.bf16.gmra.mrb[0].mxu0 0
    %v2113 = vpop.f32.mrb[0].mxu0
    %v2114 = vadd.f32 0.0, %v2113
    %v2115 = vpop.f32.mrb[0].mxu0
    %v2116 = vadd.f32 0.0, %v2115
    %v2117 = vpop.f32.mrb[0].mxu0
    %v2118 = vpop.f32.mrb[0].mxu0
    %2119 = vdwg.mxu0
    %v2120 = vadd.f32 %v1734, %v2073
    %v2121 = vadd.f32 %v1736, %v2075
    %v2122 = vadd.f32 %v1807, %v2114
    %v2123 = vadd.f32 %v1809, %v2116
    %v2124 = vtanh.pop %v2120
    %v2125 = vtanh.pop %v2121
    %v2126 = vtanh.pop %v2122
    %v2127 = vtanh.pop %v2123
    %v2128 = vmul.f32 %v2124, 0.5
    %v2129 = vadd.f32 %v2128, 0.5
    %v2130 = vmul.f32 %v2125, 0.5
    %v2131 = vadd.f32 %v2130, 0.5
    %v2132 = vmul.f32 %v2127, 0.5
    %v2133 = vadd.f32 %v2132, 0.5
    %v2134 = vmul.f32 %v2131, 0.0
    %v2135 = vmul.f32 %v2129, %v2126
    %v2136 = vadd.f32 %v2134, %v2135
    %v2137 = vtanh.pop %v2136
    %v2138 = vmul.f32 %v2133, %v2137
    %v2139 = vpack.c.bf16 %v2138, %v2138
    %2140 = vmatprep.subr.bf16.mxu0 %v1975
    %2141 = vmatpush1.bf16.msra.mxu0 %v1974
    %2142 = vmatprep.subr.bf16.mxu0 %v1979
    %2143 = vmatpush1.bf16.msra.mxu0 %v1978
    %2144 = vmatprep.subr.bf16.mxu0 %v1983
    %2145 = vmatpush1.bf16.msra.mxu0 %v1982
    %2146 = vmatprep.subr.bf16.mxu0 %v1987
    %2147 = vmatpush1.bf16.msra.mxu0 %v1986
    %2148 = vmatprep.subr.bf16.mxu0 %v1991
    %2149 = vmatpush1.bf16.msra.mxu0 %v1990
    %2150 = vmatprep.subr.bf16.mxu0 %v1995
    %2151 = vmatpush1.bf16.msra.mxu0 %v1994
    %2152 = vmatprep.subr.bf16.mxu0 %v1999
    %2153 = vmatpush1.bf16.msra.mxu0 %v1998
    %2154 = vmatprep.subr.bf16.mxu0 %v2003
    %2155 = vmatpush1.bf16.msra.mxu0 %v2002
    %2156 = vmatprep.subr.bf16.mxu0 0
    %2157 = vmatpush1.bf16.msra.mxu0 0
    %2158 = vmatprep.subr.bf16.mxu0 0
    %2159 = vmatpush1.bf16.msra.mxu0 0
    %2160 = vmatprep.subr.bf16.mxu0 0
    %2161 = vmatpush1.bf16.msra.mxu0 0
    %2162 = vmatprep.subr.bf16.mxu0 0
    %2163 = vmatpush1.bf16.msra.mxu0 0
    %2164 = vmatprep.subr.bf16.mxu0 0
    %2165 = vmatpush1.bf16.msra.mxu0 0
    %2166 = vmatprep.subr.bf16.mxu0 0
    %2167 = vmatpush1.bf16.msra.mxu0 0
    %2168 = vmatprep.subr.bf16.mxu0 0
    %2169 = vmatpush1.bf16.msra.mxu0 0
    %2170 = vmatprep.subr.bf16.mxu0 0
    %2171 = vmatpush1.bf16.msra.mxu0 0
    %2172 = vmatprep.mubr.bf16.mxu0 0
    %2173 = vmatmul.mubr.bf16.gmra.mrb[0].mxu0 %v2139
    %v2174 = vpop.f32.mrb[0].mxu0
    %v2175 = vadd.f32 0.0, %v2174
    %v2176 = vpop.f32.mrb[0].mxu0
    %v2177 = vadd.f32 0.0, %v2176
    %v2178 = vpop.f32.mrb[0].mxu0
    %v2179 = vpop.f32.mrb[0].mxu0
    %2180 = vdwg.mxu0
    %2181 = vmatprep.subr.bf16.mxu0 %v1977
    %2182 = vmatpush1.bf16.msra.mxu0 %v1976
    %2183 = vmatprep.subr.bf16.mxu0 %v1981
    %2184 = vmatpush1.bf16.msra.mxu0 %v1980
    %2185 = vmatprep.subr.bf16.mxu0 %v1985
    %2186 = vmatpush1.bf16.msra.mxu0 %v1984
    %2187 = vmatprep.subr.bf16.mxu0 %v1989
    %2188 = vmatpush1.bf16.msra.mxu0 %v1988
    %2189 = vmatprep.subr.bf16.mxu0 %v1993
    %2190 = vmatpush1.bf16.msra.mxu0 %v1992
    %2191 = vmatprep.subr.bf16.mxu0 %v1997
    %2192 = vmatpush1.bf16.msra.mxu0 %v1996
    %2193 = vmatprep.subr.bf16.mxu0 %v2001
    %2194 = vmatpush1.bf16.msra.mxu0 %v2000
    %2195 = vmatprep.subr.bf16.mxu0 %v2005
    %2196 = vmatpush1.bf16.msra.mxu0 %v2004
    %2197 = vmatprep.subr.bf16.mxu0 0
    %2198 = vmatpush1.bf16.msra.mxu0 0
    %2199 = vmatprep.subr.bf16.mxu0 0
    %2200 = vmatpush1.bf16.msra.mxu0 0
    %2201 = vmatprep.subr.bf16.mxu0 0
    %2202 = vmatpush1.bf16.msra.mxu0 0
    %2203 = vmatprep.subr.bf16.mxu0 0
    %2204 = vmatpush1.bf16.msra.mxu0 0
    %2205 = vmatprep.subr.bf16.mxu0 0
    %2206 = vmatpush1.bf16.msra.mxu0 0
    %2207 = vmatprep.subr.bf16.mxu0 0
    %2208 = vmatpush1.bf16.msra.mxu0 0
    %2209 = vmatprep.subr.bf16.mxu0 0
    %2210 = vmatpush1.bf16.msra.mxu0 0
    %2211 = vmatprep.subr.bf16.mxu0 0
    %2212 = vmatpush1.bf16.msra.mxu0 0
    %2213 = vmatprep.mubr.bf16.mxu0 0
    %2214 = vmatmul.mubr.bf16.gmra.mrb[0].mxu0 %v2139
    %v2215 = vpop.f32.mrb[0].mxu0
    %v2216 = vadd.f32 0.0, %v2215
    %v2217 = vpop.f32.mrb[0].mxu0
    %v2218 = vadd.f32 0.0, %v2217
    %v2219 = vpop.f32.mrb[0].mxu0
    %v2220 = vpop.f32.mrb[0].mxu0
    %2221 = vdwg.mxu0
    %v2222 = vadd.f32 %v1738, %v2175
    %v2223 = vadd.f32 %v1740, %v2177
    %v2224 = vadd.f32 %v1811, %v2216
    %v2225 = vadd.f32 %v1813, %v2218
    %v2226 = vtanh.pop %v2222
    %v2227 = vtanh.pop %v2223
    %v2228 = vtanh.pop %v2224
    %v2229 = vtanh.pop %v2225
    %v2230 = vmul.f32 %v2226, 0.5
    %v2231 = vadd.f32 %v2230, 0.5
    %v2232 = vmul.f32 %v2227, 0.5
    %v2233 = vadd.f32 %v2232, 0.5
    %v2234 = vmul.f32 %v2229, 0.5
    %v2235 = vadd.f32 %v2234, 0.5
    %v2236 = vmul.f32 %v2233, %v2136
    %v2237 = vmul.f32 %v2231, %v2228
    %v2238 = vadd.f32 %v2236, %v2237
    %v2239 = vtanh.pop %v2238
    %v2240 = vmul.f32 %v2235, %v2239
    %v2241 = vpack.c.bf16 %v2240, %v2240
    %2242 = vmatprep.subr.bf16.mxu0 %v1975
    %2243 = vmatpush1.bf16.msra.mxu0 %v1974
    %2244 = vmatprep.subr.bf16.mxu0 %v1979
    %2245 = vmatpush1.bf16.msra.mxu0 %v1978
    %2246 = vmatprep.subr.bf16.mxu0 %v1983
    %2247 = vmatpush1.bf16.msra.mxu0 %v1982
    %2248 = vmatprep.subr.bf16.mxu0 %v1987
    %2249 = vmatpush1.bf16.msra.mxu0 %v1986
    %2250 = vmatprep.subr.bf16.mxu0 %v1991
    %2251 = vmatpush1.bf16.msra.mxu0 %v1990
    %2252 = vmatprep.subr.bf16.mxu0 %v1995
    %2253 = vmatpush1.bf16.msra.mxu0 %v1994
    %2254 = vmatprep.subr.bf16.mxu0 %v1999
    %2255 = vmatpush1.bf16.msra.mxu0 %v1998
    %2256 = vmatprep.subr.bf16.mxu0 %v2003
    %2257 = vmatpush1.bf16.msra.mxu0 %v2002
    %2258 = vmatprep.subr.bf16.mxu0 0
    %2259 = vmatpush1.bf16.msra.mxu0 0
    %2260 = vmatprep.subr.bf16.mxu0 0
    %2261 = vmatpush1.bf16.msra.mxu0 0
    %2262 = vmatprep.subr.bf16.mxu0 0
    %2263 = vmatpush1.bf16.msra.mxu0 0
    %2264 = vmatprep.subr.bf16.mxu0 0
    %2265 = vmatpush1.bf16.msra.mxu0 0
    %2266 = vmatprep.subr.bf16.mxu0 0
    %2267 = vmatpush1.bf16.msra.mxu0 0
    %2268 = vmatprep.subr.bf16.mxu0 0
    %2269 = vmatpush1.bf16.msra.mxu0 0
    %2270 = vmatprep.subr.bf16.mxu0 0
    %2271 = vmatpush1.bf16.msra.mxu0 0
    %2272 = vmatprep.subr.bf16.mxu0 0
    %2273 = vmatpush1.bf16.msra.mxu0 0
    %2274 = vmatprep.mubr.bf16.mxu0 0
    %2275 = vmatmul.mubr.bf16.gmra.mrb[0].mxu0 %v2241
    %v2276 = vpop.f32.mrb[0].mxu0
    %v2277 = vadd.f32 0.0, %v2276
    %v2278 = vpop.f32.mrb[0].mxu0
    %v2279 = vadd.f32 0.0, %v2278
    %v2280 = vpop.f32.mrb[0].mxu0
    %v2281 = vpop.f32.mrb[0].mxu0
    %2282 = vdwg.mxu0
    %2283 = vmatprep.subr.bf16.mxu0 %v1977
    %2284 = vmatpush1.bf16.msra.mxu0 %v1976
    %2285 = vmatprep.subr.bf16.mxu0 %v1981
    %2286 = vmatpush1.bf16.msra.mxu0 %v1980
    %2287 = vmatprep.subr.bf16.mxu0 %v1985
    %2288 = vmatpush1.bf16.msra.mxu0 %v1984
    %2289 = vmatprep.subr.bf16.mxu0 %v1989
    %2290 = vmatpush1.bf16.msra.mxu0 %v1988
    %2291 = vmatprep.subr.bf16.mxu0 %v1993
    %2292 = vmatpush1.bf16.msra.mxu0 %v1992
    %2293 = vmatprep.subr.bf16.mxu0 %v1997
    %2294 = vmatpush1.bf16.msra.mxu0 %v1996
    %2295 = vmatprep.subr.bf16.mxu0 %v2001
    %2296 = vmatpush1.bf16.msra.mxu0 %v2000
    %2297 = vmatprep.subr.bf16.mxu0 %v2005
    %2298 = vmatpush1.bf16.msra.mxu0 %v2004
    %2299 = vmatprep.subr.bf16.mxu0 0
    %2300 = vmatpush1.bf16.msra.mxu0 0
    %2301 = vmatprep.subr.bf16.mxu0 0
    %2302 = vmatpush1.bf16.msra.mxu0 0
    %2303 = vmatprep.subr.bf16.mxu0 0
    %2304 = vmatpush1.bf16.msra.mxu0 0
    %2305 = vmatprep.subr.bf16.mxu0 0
    %2306 = vmatpush1.bf16.msra.mxu0 0
    %2307 = vmatprep.subr.bf16.mxu0 0
    %2308 = vmatpush1.bf16.msra.mxu0 0
    %2309 = vmatprep.subr.bf16.mxu0 0
    %2310 = vmatpush1.bf16.msra.mxu0 0
    %2311 = vmatprep.subr.bf16.mxu0 0
    %2312 = vmatpush1.bf16.msra.mxu0 0
    %2313 = vmatprep.subr.bf16.mxu0 0
    %2314 = vmatpush1.bf16.msra.mxu0 0
    %2315 = vmatprep.mubr.bf16.mxu0 0
    %2316 = vmatmul.mubr.bf16.gmra.mrb[0].mxu0 %v2241
    %v2317 = vpop.f32.mrb[0].mxu0
    %v2318 = vadd.f32 0.0, %v2317
    %v2319 = vpop.f32.mrb[0].mxu0
    %v2320 = vadd.f32 0.0, %v2319
    %v2321 = vpop.f32.mrb[0].mxu0
    %v2322 = vpop.f32.mrb[0].mxu0
    %2323 = vdwg.mxu0
    %v2324 = vadd.f32 %v1744, %v2277
    %v2325 = vadd.f32 %v1746, %v2279
    %v2326 = vadd.f32 %v1817, %v2318
    %v2327 = vadd.f32 %v1819, %v2320
    %v2328 = vtanh.pop %v2324
    %v2329 = vtanh.pop %v2325
    %v2330 = vtanh.pop %v2326
    %v2331 = vtanh.pop %v2327
    %v2332 = vmul.f32 %v2328, 0.5
    %v2333 = vadd.f32 %v2332, 0.5
    %v2334 = vmul.f32 %v2329, 0.5
    %v2335 = vadd.f32 %v2334, 0.5
    %v2336 = vmul.f32 %v2331, 0.5
    %v2337 = vadd.f32 %v2336, 0.5
    %v2338 = vmul.f32 %v2335, %v2238
    %v2339 = vmul.f32 %v2333, %v2330
    %v2340 = vadd.f32 %v2338, %v2339
    %v2341 = vtanh.pop %v2340
    %v2342 = vmul.f32 %v2337, %v2341
    %v2343 = vpack.c.bf16 %v2342, %v2342
    %2344 = vmatprep.subr.bf16.mxu0 %v1975
    %2345 = vmatpush1.bf16.msra.mxu0 %v1974
    %2346 = vmatprep.subr.bf16.mxu0 %v1979
    %2347 = vmatpush1.bf16.msra.mxu0 %v1978
    %2348 = vmatprep.subr.bf16.mxu0 %v1983
    %2349 = vmatpush1.bf16.msra.mxu0 %v1982
    %2350 = vmatprep.subr.bf16.mxu0 %v1987
    %2351 = vmatpush1.bf16.msra.mxu0 %v1986
    %2352 = vmatprep.subr.bf16.mxu0 %v1991
    %2353 = vmatpush1.bf16.msra.mxu0 %v1990
    %2354 = vmatprep.subr.bf16.mxu0 %v1995
    %2355 = vmatpush1.bf16.msra.mxu0 %v1994
    %2356 = vmatprep.subr.bf16.mxu0 %v1999
    %2357 = vmatpush1.bf16.msra.mxu0 %v1998
    %2358 = vmatprep.subr.bf16.mxu0 %v2003
    %2359 = vmatpush1.bf16.msra.mxu0 %v2002
    %2360 = vmatprep.subr.bf16.mxu0 0
    %2361 = vmatpush1.bf16.msra.mxu0 0
    %2362 = vmatprep.subr.bf16.mxu0 0
    %2363 = vmatpush1.bf16.msra.mxu0 0
    %2364 = vmatprep.subr.bf16.mxu0 0
    %2365 = vmatpush1.bf16.msra.mxu0 0
    %2366 = vmatprep.subr.bf16.mxu0 0
    %2367 = vmatpush1.bf16.msra.mxu0 0
    %2368 = vmatprep.subr.bf16.mxu0 0
    %2369 = vmatpush1.bf16.msra.mxu0 0
    %2370 = vmatprep.subr.bf16.mxu0 0
    %2371 = vmatpush1.bf16.msra.mxu0 0
    %2372 = vmatprep.subr.bf16.mxu0 0
    %2373 = vmatpush1.bf16.msra.mxu0 0
    %2374 = vmatprep.subr.bf16.mxu0 0
    %2375 = vmatpush1.bf16.msra.mxu0 0
    %2376 = vmatprep.mubr.bf16.mxu0 0
    %2377 = vmatmul.mubr.bf16.gmra.mrb[0].mxu0 %v2343
    %v2378 = vpop.f32.mrb[0].mxu0
    %v2379 = vadd.f32 0.0, %v2378
    %v2380 = vpop.f32.mrb[0].mxu0
    %v2381 = vadd.f32 0.0, %v2380
    %v2382 = vpop.f32.mrb[0].mxu0
    %v2383 = vpop.f32.mrb[0].mxu0
    %2384 = vdwg.mxu0
    %2385 = vmatprep.subr.bf16.mxu0 %v1977
    %2386 = vmatpush1.bf16.msra.mxu0 %v1976
    %2387 = vmatprep.subr.bf16.mxu0 %v1981
    %2388 = vmatpush1.bf16.msra.mxu0 %v1980
    %2389 = vmatprep.subr.bf16.mxu0 %v1985
    %2390 = vmatpush1.bf16.msra.mxu0 %v1984
    %2391 = vmatprep.subr.bf16.mxu0 %v1989
    %2392 = vmatpush1.bf16.msra.mxu0 %v1988
    %2393 = vmatprep.subr.bf16.mxu0 %v1993
    %2394 = vmatpush1.bf16.msra.mxu0 %v1992
    %2395 = vmatprep.subr.bf16.mxu0 %v1997
    %2396 = vmatpush1.bf16.msra.mxu0 %v1996
    %2397 = vmatprep.subr.bf16.mxu0 %v2001
    %2398 = vmatpush1.bf16.msra.mxu0 %v2000
    %2399 = vmatprep.subr.bf16.mxu0 %v2005
    %2400 = vmatpush1.bf16.msra.mxu0 %v2004
    %2401 = vmatprep.subr.bf16.mxu0 0
    %2402 = vmatpush1.bf16.msra.mxu0 0
    %2403 = vmatprep.subr.bf16.mxu0 0
    %2404 = vmatpush1.bf16.msra.mxu0 0
    %2405 = vmatprep.subr.bf16.mxu0 0
    %2406 = vmatpush1.bf16.msra.mxu0 0
    %2407 = vmatprep.subr.bf16.mxu0 0
    %2408 = vmatpush1.bf16.msra.mxu0 0
    %2409 = vmatprep.subr.bf16.mxu0 0
    %2410 = vmatpush1.bf16.msra.mxu0 0
    %2411 = vmatprep.subr.bf16.mxu0 0
    %2412 = vmatpush1.bf16.msra.mxu0 0
    %2413 = vmatprep.subr.bf16.mxu0 0
    %2414 = vmatpush1.bf16.msra.mxu0 0
    %2415 = vmatprep.subr.bf16.mxu0 0
    %2416 = vmatpush1.bf16.msra.mxu0 0
    %2417 = vmatprep.mubr.bf16.mxu0 0
    %2418 = vmatmul.mubr.bf16.gmra.mrb[0].mxu0 %v2343
    %v2419 = vpop.f32.mrb[0].mxu0
    %v2420 = vadd.f32 0.0, %v2419
    %v2421 = vpop.f32.mrb[0].mxu0
    %v2422 = vadd.f32 0.0, %v2421
    %v2423 = vpop.f32.mrb[0].mxu0
    %v2424 = vpop.f32.mrb[0].mxu0
    %2425 = vdwg.mxu0
    %v2426 = vadd.f32 %v1748, %v2379
    %v2427 = vadd.f32 %v1750, %v2381
    %v2428 = vadd.f32 %v1821, %v2420
    %v2429 = vadd.f32 %v1823, %v2422
    %v2430 = vtanh.pop %v2426
    %v2431 = vtanh.pop %v2427
    %v2432 = vtanh.pop %v2428
    %v2433 = vtanh.pop %v2429
    %v2434 = vmul.f32 %v2430, 0.5
    %v2435 = vadd.f32 %v2434, 0.5
    %v2436 = vmul.f32 %v2431, 0.5
    %v2437 = vadd.f32 %v2436, 0.5
    %v2438 = vmul.f32 %v2433, 0.5
    %v2439 = vadd.f32 %v2438, 0.5
    %v2440 = vmul.f32 %v2437, %v2340
    %v2441 = vmul.f32 %v2435, %v2432
    %v2442 = vadd.f32 %v2440, %v2441
    %v2443 = vtanh.pop %v2442
    %v2444 = vmul.f32 %v2439, %v2443
    %v2445 = vpack.c.bf16 %v2444, %v2444
    %2446 = vmatprep.subr.bf16.mxu0 %v1975
    %2447 = vmatpush1.bf16.msra.mxu0 %v1974
    %2448 = vmatprep.subr.bf16.mxu0 %v1979
    %2449 = vmatpush1.bf16.msra.mxu0 %v1978
    %2450 = vmatprep.subr.bf16.mxu0 %v1983
    %2451 = vmatpush1.bf16.msra.mxu0 %v1982
    %2452 = vmatprep.subr.bf16.mxu0 %v1987
    %2453 = vmatpush1.bf16.msra.mxu0 %v1986
    %2454 = vmatprep.subr.bf16.mxu0 %v1991
    %2455 = vmatpush1.bf16.msra.mxu0 %v1990
    %2456 = vmatprep.subr.bf16.mxu0 %v1995
    %2457 = vmatpush1.bf16.msra.mxu0 %v1994
    %2458 = vmatprep.subr.bf16.mxu0 %v1999
    %2459 = vmatpush1.bf16.msra.mxu0 %v1998
    %2460 = vmatprep.subr.bf16.mxu0 %v2003
    %2461 = vmatpush1.bf16.msra.mxu0 %v2002
    %2462 = vmatprep.subr.bf16.mxu0 0
    %2463 = vmatpush1.bf16.msra.mxu0 0
    %2464 = vmatprep.subr.bf16.mxu0 0
    %2465 = vmatpush1.bf16.msra.mxu0 0
    %2466 = vmatprep.subr.bf16.mxu0 0
    %2467 = vmatpush1.bf16.msra.mxu0 0
    %2468 = vmatprep.subr.bf16.mxu0 0
    %2469 = vmatpush1.bf16.msra.mxu0 0
    %2470 = vmatprep.subr.bf16.mxu0 0
    %2471 = vmatpush1.bf16.msra.mxu0 0
    %2472 = vmatprep.subr.bf16.mxu0 0
    %2473 = vmatpush1.bf16.msra.mxu0 0
    %2474 = vmatprep.subr.bf16.mxu0 0
    %2475 = vmatpush1.bf16.msra.mxu0 0
    %2476 = vmatprep.subr.bf16.mxu0 0
    %2477 = vmatpush1.bf16.msra.mxu0 0
    %2478 = vmatprep.mubr.bf16.mxu0 0
    %2479 = vmatmul.mubr.bf16.gmra.mrb[0].mxu0 %v2445
    %v2480 = vpop.f32.mrb[0].mxu0
    %v2481 = vadd.f32 0.0, %v2480
    %v2482 = vpop.f32.mrb[0].mxu0
    %v2483 = vadd.f32 0.0, %v2482
    %v2484 = vpop.f32.mrb[0].mxu0
    %v2485 = vpop.f32.mrb[0].mxu0
    %2486 = vdwg.mxu0
    %2487 = vmatprep.subr.bf16.mxu0 %v1977
    %2488 = vmatpush1.bf16.msra.mxu0 %v1976
    %2489 = vmatprep.subr.bf16.mxu0 %v1981
    %2490 = vmatpush1.bf16.msra.mxu0 %v1980
    %2491 = vmatprep.subr.bf16.mxu0 %v1985
    %2492 = vmatpush1.bf16.msra.mxu0 %v1984
    %2493 = vmatprep.subr.bf16.mxu0 %v1989
    %2494 = vmatpush1.bf16.msra.mxu0 %v1988
    %2495 = vmatprep.subr.bf16.mxu0 %v1993
    %2496 = vmatpush1.bf16.msra.mxu0 %v1992
    %2497 = vmatprep.subr.bf16.mxu0 %v1997
    %2498 = vmatpush1.bf16.msra.mxu0 %v1996
    %2499 = vmatprep.subr.bf16.mxu0 %v2001
    %2500 = vmatpush1.bf16.msra.mxu0 %v2000
    %2501 = vmatprep.subr.bf16.mxu0 %v2005
    %2502 = vmatpush1.bf16.msra.mxu0 %v2004
    %2503 = vmatprep.subr.bf16.mxu0 0
    %2504 = vmatpush1.bf16.msra.mxu0 0
    %2505 = vmatprep.subr.bf16.mxu0 0
    %2506 = vmatpush1.bf16.msra.mxu0 0
    %2507 = vmatprep.subr.bf16.mxu0 0
    %2508 = vmatpush1.bf16.msra.mxu0 0
    %2509 = vmatprep.subr.bf16.mxu0 0
    %2510 = vmatpush1.bf16.msra.mxu0 0
    %2511 = vmatprep.subr.bf16.mxu0 0
    %2512 = vmatpush1.bf16.msra.mxu0 0
    %2513 = vmatprep.subr.bf16.mxu0 0
    %2514 = vmatpush1.bf16.msra.mxu0 0
    %2515 = vmatprep.subr.bf16.mxu0 0
    %2516 = vmatpush1.bf16.msra.mxu0 0
    %2517 = vmatprep.subr.bf16.mxu0 0
    %2518 = vmatpush1.bf16.msra.mxu0 0
    %2519 = vmatprep.mubr.bf16.mxu0 0
    %2520 = vmatmul.mubr.bf16.gmra.mrb[0].mxu0 %v2445
    %v2521 = vpop.f32.mrb[0].mxu0
    %v2522 = vadd.f32 0.0, %v2521
    %v2523 = vpop.f32.mrb[0].mxu0
    %v2524 = vadd.f32 0.0, %v2523
    %v2525 = vpop.f32.mrb[0].mxu0
    %v2526 = vpop.f32.mrb[0].mxu0
    %2527 = vdwg.mxu0
    %v2528 = vadd.f32 %v1754, %v2481
    %v2529 = vadd.f32 %v1756, %v2483
    %v2530 = vadd.f32 %v1827, %v2522
    %v2531 = vadd.f32 %v1829, %v2524
    %v2532 = vtanh.pop %v2528
    %v2533 = vtanh.pop %v2529
    %v2534 = vtanh.pop %v2530
    %v2535 = vtanh.pop %v2531
    %v2536 = vmul.f32 %v2532, 0.5
    %v2537 = vadd.f32 %v2536, 0.5
    %v2538 = vmul.f32 %v2533, 0.5
    %v2539 = vadd.f32 %v2538, 0.5
    %v2540 = vmul.f32 %v2535, 0.5
    %v2541 = vadd.f32 %v2540, 0.5
    %v2542 = vmul.f32 %v2539, %v2442
    %v2543 = vmul.f32 %v2537, %v2534
    %v2544 = vadd.f32 %v2542, %v2543
    %v2545 = vtanh.pop %v2544
    %v2546 = vmul.f32 %v2541, %v2545
    %v2547 = vpack.c.bf16 %v2546, %v2546
    %2548 = vmatprep.subr.bf16.mxu0 %v1975
    %2549 = vmatpush1.bf16.msra.mxu0 %v1974
    %2550 = vmatprep.subr.bf16.mxu0 %v1979
    %2551 = vmatpush1.bf16.msra.mxu0 %v1978
    %2552 = vmatprep.subr.bf16.mxu0 %v1983
    %2553 = vmatpush1.bf16.msra.mxu0 %v1982
    %2554 = vmatprep.subr.bf16.mxu0 %v1987
    %2555 = vmatpush1.bf16.msra.mxu0 %v1986
    %2556 = vmatprep.subr.bf16.mxu0 %v1991
    %2557 = vmatpush1.bf16.msra.mxu0 %v1990
    %2558 = vmatprep.subr.bf16.mxu0 %v1995
    %2559 = vmatpush1.bf16.msra.mxu0 %v1994
    %2560 = vmatprep.subr.bf16.mxu0 %v1999
    %2561 = vmatpush1.bf16.msra.mxu0 %v1998
    %2562 = vmatprep.subr.bf16.mxu0 %v2003
    %2563 = vmatpush1.bf16.msra.mxu0 %v2002
    %2564 = vmatprep.subr.bf16.mxu0 0
    %2565 = vmatpush1.bf16.msra.mxu0 0
    %2566 = vmatprep.subr.bf16.mxu0 0
    %2567 = vmatpush1.bf16.msra.mxu0 0
    %2568 = vmatprep.subr.bf16.mxu0 0
    %2569 = vmatpush1.bf16.msra.mxu0 0
    %2570 = vmatprep.subr.bf16.mxu0 0
    %2571 = vmatpush1.bf16.msra.mxu0 0
    %2572 = vmatprep.subr.bf16.mxu0 0
    %2573 = vmatpush1.bf16.msra.mxu0 0
    %2574 = vmatprep.subr.bf16.mxu0 0
    %2575 = vmatpush1.bf16.msra.mxu0 0
    %2576 = vmatprep.subr.bf16.mxu0 0
    %2577 = vmatpush1.bf16.msra.mxu0 0
    %2578 = vmatprep.subr.bf16.mxu0 0
    %2579 = vmatpush1.bf16.msra.mxu0 0
    %2580 = vmatprep.mubr.bf16.mxu0 0
    %2581 = vmatmul.mubr.bf16.gmra.mrb[0].mxu0 %v2547
    %v2582 = vpop.f32.mrb[0].mxu0
    %v2583 = vadd.f32 0.0, %v2582
    %v2584 = vpop.f32.mrb[0].mxu0
    %v2585 = vadd.f32 0.0, %v2584
    %v2586 = vpop.f32.mrb[0].mxu0
    %v2587 = vpop.f32.mrb[0].mxu0
    %2588 = vdwg.mxu0
    %2589 = vmatprep.subr.bf16.mxu0 %v1977
    %2590 = vmatpush1.bf16.msra.mxu0 %v1976
    %2591 = vmatprep.subr.bf16.mxu0 %v1981
    %2592 = vmatpush1.bf16.msra.mxu0 %v1980
    %2593 = vmatprep.subr.bf16.mxu0 %v1985
    %2594 = vmatpush1.bf16.msra.mxu0 %v1984
    %2595 = vmatprep.subr.bf16.mxu0 %v1989
    %2596 = vmatpush1.bf16.msra.mxu0 %v1988
    %2597 = vmatprep.subr.bf16.mxu0 %v1993
    %2598 = vmatpush1.bf16.msra.mxu0 %v1992
    %2599 = vmatprep.subr.bf16.mxu0 %v1997
    %2600 = vmatpush1.bf16.msra.mxu0 %v1996
    %2601 = vmatprep.subr.bf16.mxu0 %v2001
    %2602 = vmatpush1.bf16.msra.mxu0 %v2000
    %2603 = vmatprep.subr.bf16.mxu0 %v2005
    %2604 = vmatpush1.bf16.msra.mxu0 %v2004
    %2605 = vmatprep.subr.bf16.mxu0 0
    %2606 = vmatpush1.bf16.msra.mxu0 0
    %2607 = vmatprep.subr.bf16.mxu0 0
    %2608 = vmatpush1.bf16.msra.mxu0 0
    %2609 = vmatprep.subr.bf16.mxu0 0
    %2610 = vmatpush1.bf16.msra.mxu0 0
    %2611 = vmatprep.subr.bf16.mxu0 0
    %2612 = vmatpush1.bf16.msra.mxu0 0
    %2613 = vmatprep.subr.bf16.mxu0 0
    %2614 = vmatpush1.bf16.msra.mxu0 0
    %2615 = vmatprep.subr.bf16.mxu0 0
    %2616 = vmatpush1.bf16.msra.mxu0 0
    %2617 = vmatprep.subr.bf16.mxu0 0
    %2618 = vmatpush1.bf16.msra.mxu0 0
    %2619 = vmatprep.subr.bf16.mxu0 0
    %2620 = vmatpush1.bf16.msra.mxu0 0
    %2621 = vmatprep.mubr.bf16.mxu0 0
    %2622 = vmatmul.mubr.bf16.gmra.mrb[0].mxu0 %v2547
    %v2623 = vpop.f32.mrb[0].mxu0
    %v2624 = vadd.f32 0.0, %v2623
    %v2625 = vpop.f32.mrb[0].mxu0
    %v2626 = vadd.f32 0.0, %v2625
    %v2627 = vpop.f32.mrb[0].mxu0
    %v2628 = vpop.f32.mrb[0].mxu0
    %2629 = vdwg.mxu0
    %v2630 = vadd.f32 %v1758, %v2583
    %v2631 = vadd.f32 %v1760, %v2585
    %v2632 = vadd.f32 %v1831, %v2624
    %v2633 = vadd.f32 %v1833, %v2626
    %v2634 = vtanh.pop %v2630
    %v2635 = vtanh.pop %v2631
    %v2636 = vtanh.pop %v2632
    %v2637 = vtanh.pop %v2633
    %v2638 = vmul.f32 %v2634, 0.5
    %v2639 = vadd.f32 %v2638, 0.5
    %v2640 = vmul.f32 %v2635, 0.5
    %v2641 = vadd.f32 %v2640, 0.5
    %v2642 = vmul.f32 %v2637, 0.5
    %v2643 = vadd.f32 %v2642, 0.5
    %v2644 = vmul.f32 %v2641, %v2544
    %v2645 = vmul.f32 %v2639, %v2636
    %v2646 = vadd.f32 %v2644, %v2645
    %v2647 = vtanh.pop %v2646
    %v2648 = vmul.f32 %v2643, %v2647
    %v2649 = vpack.c.bf16 %v2648, %v2648
    %2650 = vmatprep.subr.bf16.mxu0 %v1975
    %2651 = vmatpush1.bf16.msra.mxu0 %v1974
    %2652 = vmatprep.subr.bf16.mxu0 %v1979
    %2653 = vmatpush1.bf16.msra.mxu0 %v1978
    %2654 = vmatprep.subr.bf16.mxu0 %v1983
    %2655 = vmatpush1.bf16.msra.mxu0 %v1982
    %2656 = vmatprep.subr.bf16.mxu0 %v1987
    %2657 = vmatpush1.bf16.msra.mxu0 %v1986
    %2658 = vmatprep.subr.bf16.mxu0 %v1991
    %2659 = vmatpush1.bf16.msra.mxu0 %v1990
    %2660 = vmatprep.subr.bf16.mxu0 %v1995
    %2661 = vmatpush1.bf16.msra.mxu0 %v1994
    %2662 = vmatprep.subr.bf16.mxu0 %v1999
    %2663 = vmatpush1.bf16.msra.mxu0 %v1998
    %2664 = vmatprep.subr.bf16.mxu0 %v2003
    %2665 = vmatpush1.bf16.msra.mxu0 %v2002
    %2666 = vmatprep.subr.bf16.mxu0 0
    %2667 = vmatpush1.bf16.msra.mxu0 0
    %2668 = vmatprep.subr.bf16.mxu0 0
    %2669 = vmatpush1.bf16.msra.mxu0 0
    %2670 = vmatprep.subr.bf16.mxu0 0
    %2671 = vmatpush1.bf16.msra.mxu0 0
    %2672 = vmatprep.subr.bf16.mxu0 0
    %2673 = vmatpush1.bf16.msra.mxu0 0
    %2674 = vmatprep.subr.bf16.mxu0 0
    %2675 = vmatpush1.bf16.msra.mxu0 0
    %2676 = vmatprep.subr.bf16.mxu0 0
    %2677 = vmatpush1.bf16.msra.mxu0 0
    %2678 = vmatprep.subr.bf16.mxu0 0
    %2679 = vmatpush1.bf16.msra.mxu0 0
    %2680 = vmatprep.subr.bf16.mxu0 0
    %2681 = vmatpush1.bf16.msra.mxu0 0
    %2682 = vmatprep.mubr.bf16.mxu0 0
    %2683 = vmatmul.mubr.bf16.gmra.mrb[0].mxu0 %v2649
    %v2684 = vpop.f32.mrb[0].mxu0
    %v2685 = vadd.f32 0.0, %v2684
    %v2686 = vpop.f32.mrb[0].mxu0
    %v2687 = vadd.f32 0.0, %v2686
    %v2688 = vpop.f32.mrb[0].mxu0
    %v2689 = vpop.f32.mrb[0].mxu0
    %2690 = vdwg.mxu0
    %2691 = vmatprep.subr.bf16.mxu0 %v1977
    %2692 = vmatpush1.bf16.msra.mxu0 %v1976
    %2693 = vmatprep.subr.bf16.mxu0 %v1981
    %2694 = vmatpush1.bf16.msra.mxu0 %v1980
    %2695 = vmatprep.subr.bf16.mxu0 %v1985
    %2696 = vmatpush1.bf16.msra.mxu0 %v1984
    %2697 = vmatprep.subr.bf16.mxu0 %v1989
    %2698 = vmatpush1.bf16.msra.mxu0 %v1988
    %2699 = vmatprep.subr.bf16.mxu0 %v1993
    %2700 = vmatpush1.bf16.msra.mxu0 %v1992
    %2701 = vmatprep.subr.bf16.mxu0 %v1997
    %2702 = vmatpush1.bf16.msra.mxu0 %v1996
    %2703 = vmatprep.subr.bf16.mxu0 %v2001
    %2704 = vmatpush1.bf16.msra.mxu0 %v2000
    %2705 = vmatprep.subr.bf16.mxu0 %v2005
    %2706 = vmatpush1.bf16.msra.mxu0 %v2004
    %2707 = vmatprep.subr.bf16.mxu0 0
    %2708 = vmatpush1.bf16.msra.mxu0 0
    %2709 = vmatprep.subr.bf16.mxu0 0
    %2710 = vmatpush1.bf16.msra.mxu0 0
    %2711 = vmatprep.subr.bf16.mxu0 0
    %2712 = vmatpush1.bf16.msra.mxu0 0
    %2713 = vmatprep.subr.bf16.mxu0 0
    %2714 = vmatpush1.bf16.msra.mxu0 0
    %2715 = vmatprep.subr.bf16.mxu0 0
    %2716 = vmatpush1.bf16.msra.mxu0 0
    %2717 = vmatprep.subr.bf16.mxu0 0
    %2718 = vmatpush1.bf16.msra.mxu0 0
    %2719 = vmatprep.subr.bf16.mxu0 0
    %2720 = vmatpush1.bf16.msra.mxu0 0
    %2721 = vmatprep.subr.bf16.mxu0 0
    %2722 = vmatpush1.bf16.msra.mxu0 0
    %2723 = vmatprep.mubr.bf16.mxu0 0
    %2724 = vmatmul.mubr.bf16.gmra.mrb[0].mxu0 %v2649
    %v2725 = vpop.f32.mrb[0].mxu0
    %v2726 = vadd.f32 0.0, %v2725
    %v2727 = vpop.f32.mrb[0].mxu0
    %v2728 = vadd.f32 0.0, %v2727
    %v2729 = vpop.f32.mrb[0].mxu0
    %v2730 = vpop.f32.mrb[0].mxu0
    %2731 = vdwg.mxu0
    %v2732 = vadd.f32 %v1764, %v2685
    %v2733 = vadd.f32 %v1766, %v2687
    %v2734 = vadd.f32 %v1837, %v2726
    %v2735 = vadd.f32 %v1839, %v2728
    %v2736 = vtanh.pop %v2732
    %v2737 = vtanh.pop %v2733
    %v2738 = vtanh.pop %v2734
    %v2739 = vtanh.pop %v2735
    %v2740 = vmul.f32 %v2736, 0.5
    %v2741 = vadd.f32 %v2740, 0.5
    %v2742 = vmul.f32 %v2737, 0.5
    %v2743 = vadd.f32 %v2742, 0.5
    %v2744 = vmul.f32 %v2739, 0.5
    %v2745 = vadd.f32 %v2744, 0.5
    %v2746 = vmul.f32 %v2743, %v2646
    %v2747 = vmul.f32 %v2741, %v2738
    %v2748 = vadd.f32 %v2746, %v2747
    %v2749 = vtanh.pop %v2748
    %v2750 = vmul.f32 %v2745, %v2749
    %v2751 = vpack.c.bf16 %v2750, %v2750
    %2752 = vmatprep.subr.bf16.mxu0 %v1975
    %2753 = vmatpush1.bf16.msra.mxu0 %v1974
    %2754 = vmatprep.subr.bf16.mxu0 %v1979
    %2755 = vmatpush1.bf16.msra.mxu0 %v1978
    %2756 = vmatprep.subr.bf16.mxu0 %v1983
    %2757 = vmatpush1.bf16.msra.mxu0 %v1982
    %2758 = vmatprep.subr.bf16.mxu0 %v1987
    %2759 = vmatpush1.bf16.msra.mxu0 %v1986
    %2760 = vmatprep.subr.bf16.mxu0 %v1991
    %2761 = vmatpush1.bf16.msra.mxu0 %v1990
    %2762 = vmatprep.subr.bf16.mxu0 %v1995
    %2763 = vmatpush1.bf16.msra.mxu0 %v1994
    %2764 = vmatprep.subr.bf16.mxu0 %v1999
    %2765 = vmatpush1.bf16.msra.mxu0 %v1998
    %2766 = vmatprep.subr.bf16.mxu0 %v2003
    %2767 = vmatpush1.bf16.msra.mxu0 %v2002
    %2768 = vmatprep.subr.bf16.mxu0 0
    %2769 = vmatpush1.bf16.msra.mxu0 0
    %2770 = vmatprep.subr.bf16.mxu0 0
    %2771 = vmatpush1.bf16.msra.mxu0 0
    %2772 = vmatprep.subr.bf16.mxu0 0
    %2773 = vmatpush1.bf16.msra.mxu0 0
    %2774 = vmatprep.subr.bf16.mxu0 0
    %2775 = vmatpush1.bf16.msra.mxu0 0
    %2776 = vmatprep.subr.bf16.mxu0 0
    %2777 = vmatpush1.bf16.msra.mxu0 0
    %2778 = vmatprep.subr.bf16.mxu0 0
    %2779 = vmatpush1.bf16.msra.mxu0 0
    %2780 = vmatprep.subr.bf16.mxu0 0
    %2781 = vmatpush1.bf16.msra.mxu0 0
    %2782 = vmatprep.subr.bf16.mxu0 0
    %2783 = vmatpush1.bf16.msra.mxu0 0
    %2784 = vmatprep.mubr.bf16.mxu0 0
    %2785 = vmatmul.mubr.bf16.gmra.mrb[0].mxu0 %v2751
    %v2786 = vpop.f32.mrb[0].mxu0
    %v2787 = vadd.f32 0.0, %v2786
    %v2788 = vpop.f32.mrb[0].mxu0
    %v2789 = vadd.f32 0.0, %v2788
    %v2790 = vpop.f32.mrb[0].mxu0
    %v2791 = vpop.f32.mrb[0].mxu0
    %2792 = vdwg.mxu0
    %2793 = vmatprep.subr.bf16.mxu0 %v1977
    %2794 = vmatpush1.bf16.msra.mxu0 %v1976
    %2795 = vmatprep.subr.bf16.mxu0 %v1981
    %2796 = vmatpush1.bf16.msra.mxu0 %v1980
    %2797 = vmatprep.subr.bf16.mxu0 %v1985
    %2798 = vmatpush1.bf16.msra.mxu0 %v1984
    %2799 = vmatprep.subr.bf16.mxu0 %v1989
    %2800 = vmatpush1.bf16.msra.mxu0 %v1988
    %2801 = vmatprep.subr.bf16.mxu0 %v1993
    %2802 = vmatpush1.bf16.msra.mxu0 %v1992
    %2803 = vmatprep.subr.bf16.mxu0 %v1997
    %2804 = vmatpush1.bf16.msra.mxu0 %v1996
    %2805 = vmatprep.subr.bf16.mxu0 %v2001
    %2806 = vmatpush1.bf16.msra.mxu0 %v2000
    %2807 = vmatprep.subr.bf16.mxu0 %v2005
    %2808 = vmatpush1.bf16.msra.mxu0 %v2004
    %2809 = vmatprep.subr.bf16.mxu0 0
    %2810 = vmatpush1.bf16.msra.mxu0 0
    %2811 = vmatprep.subr.bf16.mxu0 0
    %2812 = vmatpush1.bf16.msra.mxu0 0
    %2813 = vmatprep.subr.bf16.mxu0 0
    %2814 = vmatpush1.bf16.msra.mxu0 0
    %2815 = vmatprep.subr.bf16.mxu0 0
    %2816 = vmatpush1.bf16.msra.mxu0 0
    %2817 = vmatprep.subr.bf16.mxu0 0
    %2818 = vmatpush1.bf16.msra.mxu0 0
    %2819 = vmatprep.subr.bf16.mxu0 0
    %2820 = vmatpush1.bf16.msra.mxu0 0
    %2821 = vmatprep.subr.bf16.mxu0 0
    %2822 = vmatpush1.bf16.msra.mxu0 0
    %2823 = vmatprep.subr.bf16.mxu0 0
    %2824 = vmatpush1.bf16.msra.mxu0 0
    %2825 = vmatprep.mubr.bf16.mxu0 0
    %2826 = vmatmul.mubr.bf16.gmra.mrb[0].mxu0 %v2751
    %v2827 = vpop.f32.mrb[0].mxu0
    %v2828 = vadd.f32 0.0, %v2827
    %v2829 = vpop.f32.mrb[0].mxu0
    %v2830 = vadd.f32 0.0, %v2829
    %v2831 = vpop.f32.mrb[0].mxu0
    %v2832 = vpop.f32.mrb[0].mxu0
    %2833 = vdwg.mxu0
    %v2834 = vadd.f32 %v1768, %v2787
    %v2835 = vadd.f32 %v1770, %v2789
    %v2836 = vadd.f32 %v1841, %v2828
    %v2837 = vadd.f32 %v1843, %v2830
    %v2838 = vtanh.pop %v2834
    %v2839 = vtanh.pop %v2835
    %v2840 = vtanh.pop %v2836
    %v2841 = vtanh.pop %v2837
    %v2842 = vmul.f32 %v2838, 0.5
    %v2843 = vadd.f32 %v2842, 0.5
    %v2844 = vmul.f32 %v2839, 0.5
    %v2845 = vadd.f32 %v2844, 0.5
    %v2846 = vmul.f32 %v2841, 0.5
    %v2847 = vadd.f32 %v2846, 0.5
    %v2848 = vmul.f32 %v2845, %v2748
    %v2849 = vmul.f32 %v2843, %v2840
    %v2850 = vadd.f32 %v2848, %v2849
    %v2851 = vtanh.pop %v2850
    %v2852 = vmul.f32 %v2847, %v2851
    %v2853 = vld [vmem:[#allocation8] sm:$0xff]
    %v2854 = vld [vmem:[#allocation8 + $0x8] sm:$0xff]
    %v2855 = vld [vmem:[#allocation8 + $0x10] sm:$0xff]
    %v2856 = vld [vmem:[#allocation8 + $0x18] sm:$0xff]
    %v2857 = vld [vmem:[#allocation8 + $0x20] sm:$0xff]
    %v2858 = vld [vmem:[#allocation8 + $0x28] sm:$0xff]
    %v2859 = vld [vmem:[#allocation8 + $0x30] sm:$0xff]
    %v2860 = vld [vmem:[#allocation8 + $0x38] sm:$0xff]
    %v2861 = vld [vmem:[#allocation8 + $0x40] sm:$0xff]
    %v2862 = vld [vmem:[#allocation8 + $0x48] sm:$0xff]
    %v2863 = vld [vmem:[#allocation8 + $0x50] sm:$0xff]
    %v2864 = vld [vmem:[#allocation8 + $0x58] sm:$0xff]
    %v2865 = vld [vmem:[#allocation8 + $0x60] sm:$0xff]
    %v2866 = vld [vmem:[#allocation8 + $0x68] sm:$0xff]
    %v2867 = vld [vmem:[#allocation8 + $0x70] sm:$0xff]
    %v2868 = vld [vmem:[#allocation8 + $0x78] sm:$0xff]
    %v2869 = vld [vmem:[%s5] sm:$0x1]
    %v2871 = vlaneseq
    %v2872 = vshrl.u32 %v2871, 7
    %v2873 = vsub.s32 0, %v2872
    %v2874 = vrot.slane %v2869, %v2873
    %2876 = vmatprep.subr.mxu0 0.0
    %2877 = vmatpush1.msra.mxu0 %v2853
    %2878 = vmatprep.subr.mxu0 0.0
    %2879 = vmatpush1.msra.mxu0 %v2854
    %2880 = vmatprep.subr.mxu0 0.0
    %2881 = vmatpush1.msra.mxu0 %v2855
    %2882 = vmatprep.subr.mxu0 0.0
    %2883 = vmatpush1.msra.mxu0 %v2856
    %2884 = vmatprep.subr.mxu0 0.0
    %2885 = vmatpush1.msra.mxu0 %v2857
    %2886 = vmatprep.subr.mxu0 0.0
    %2887 = vmatpush1.msra.mxu0 %v2858
    %2888 = vmatprep.subr.mxu0 0.0
    %2889 = vmatpush1.msra.mxu0 %v2859
    %2890 = vmatprep.subr.mxu0 0.0
    %2891 = vmatpush1.msra.mxu0 %v2860
    %2892 = vmatprep.subr.mxu0 0.0
    %2893 = vmatpush1.msra.mxu0 %v2861
    %2894 = vmatprep.subr.mxu0 0.0
    %2895 = vmatpush1.msra.mxu0 %v2862
    %2896 = vmatprep.subr.mxu0 0.0
    %2897 = vmatpush1.msra.mxu0 %v2863
    %2898 = vmatprep.subr.mxu0 0.0
    %2899 = vmatpush1.msra.mxu0 %v2864
    %2900 = vmatprep.subr.mxu0 0.0
    %2901 = vmatpush1.msra.mxu0 %v2865
    %2902 = vmatprep.subr.mxu0 0.0
    %2903 = vmatpush1.msra.mxu0 %v2866
    %2904 = vmatprep.subr.mxu0 0.0
    %2905 = vmatpush1.msra.mxu0 %v2867
    %2906 = vmatprep.subr.mxu0 0.0
    %2907 = vmatpush1.msra.mxu0 %v2868
    %2908 = vmatprep.subr.mxu0 0.0
    %2909 = vmatpush1.msra.mxu0 0.0
    %2910 = vmatprep.subr.mxu0 0.0
    %2911 = vmatpush1.msra.mxu0 0.0
    %2912 = vmatprep.subr.mxu0 0.0
    %2913 = vmatpush1.msra.mxu0 0.0
    %2914 = vmatprep.subr.mxu0 0.0
    %2915 = vmatpush1.msra.mxu0 0.0
    %2916 = vmatprep.subr.mxu0 0.0
    %2917 = vmatpush1.msra.mxu0 0.0
    %2918 = vmatprep.subr.mxu0 0.0
    %2919 = vmatpush1.msra.mxu0 0.0
    %2920 = vmatprep.subr.mxu0 0.0
    %2921 = vmatpush1.msra.mxu0 0.0
    %2922 = vmatprep.subr.mxu0 0.0
    %2923 = vmatpush1.msra.mxu0 0.0
    %2924 = vmatprep.subr.mxu0 0.0
    %2925 = vmatpush1.msra.mxu0 0.0
    %2926 = vmatprep.subr.mxu0 0.0
    %2927 = vmatpush1.msra.mxu0 0.0
    %2928 = vmatprep.subr.mxu0 0.0
    %2929 = vmatpush1.msra.mxu0 0.0
    %2930 = vmatprep.subr.mxu0 0.0
    %2931 = vmatpush1.msra.mxu0 0.0
    %2932 = vmatprep.subr.mxu0 0.0
    %2933 = vmatpush1.msra.mxu0 0.0
    %2934 = vmatprep.subr.mxu0 0.0
    %2935 = vmatpush1.msra.mxu0 0.0
    %2936 = vmatprep.subr.mxu0 0.0
    %2937 = vmatpush1.msra.mxu0 0.0
    %2938 = vmatprep.subr.mxu0 0.0
    %2939 = vmatpush1.msra.mxu0 0.0
    %2940 = vmatprep.mubr.f32.mxu0 0.0
    %2941 = vmatmul.mubr.f32.gmra.mrb[0].mxu0 %v2852
    %v2942 = vpop.f32.mrb[0].mxu0
    %v2943 = vadd.f32 %v2874, %v2942
    %v2944 = vpop.f32.mrb[0].mxu0
    %2945 = vdwg.mxu0
    %2946 = vst [vmem:[#allocation10] sm:$0xff] %v2943
    // Predicated region
    $region42: #{tpu_custom_call.1} parent=1 // pred_check
      _
    $region43: #{tpu_custom_call.1} parent=1 // pred_check_branch
      %2948 = sbr.rel (0) target = $region45
    $region44: #{tpu_custom_call.1} parent=1 // pred_region
      %s2950 = ssub.s32 128, 128
      %2951 = vsyncadd [#allocation4], %s2950
      %s2953 = sshll.u32 [#allocation10], 4
      %s2954 = int_to_ptr.vmem [resolvable:$true] %s2953
      %2956 = dma.vmem_to_hbm [thread:$0]  %s2954, 128, %s6, [#allocation4]
    $region45: #{tpu_custom_call.1} parent=1 // pred_fallthru
      _
    // Predicated region
    $region46: #{tpu_custom_call.1} parent=1 // pred_check
      _
    $region47: #{tpu_custom_call.1} parent=1 // pred_check_branch
      %2958 = sbr.rel (0) target = $region49
    $region48: #{tpu_custom_call.1} parent=1 // pred_region
      %2959 = dma.done [#allocation4], 128
    $region49: #{tpu_custom_call.1} parent=1 // pred_fallthru
      _
    %2960 = vsyncpa [#allocation3], 1
    %2961 = vsyncpa [#allocation6], 1
    %2962 = vsyncpa [#allocation9], 1
    %2963 = vsyncpa [#allocation4], 1

</llo_original>
